<compile_context>
chip_gen: v5e
topology: v5e:2x2
jax: 0.10.0
libtpu: 0.0.40
codegen_flags: <defaults>
</compile_context>

<pallas_src>
import jax
import jax.numpy as jnp
from jax.experimental import pallas as pl
from jax.experimental.pallas import tpu as pltpu

LANE = 128                          # vreg lane width
TARGET_TILE_BYTES = 2 * 1024 * 1024  # per input per pipeline buffer
VMEM_LIMIT_BYTES = 48 * 1024 * 1024  # 3 inputs x 2 bufs x 2 MiB = 12 MiB + headroom
SMALL_N_THRESHOLD = 65536            # below this, plain jnp beats a kernel launch


def _num_tensorcores() -> int:
    """Use a 2-way leading 'parallel' split only on multi-TensorCore chips (v7x)."""
    try:
        kind = jax.devices()[0].device_kind.lower()
    except Exception:
        return 1
    return 2 if "7" in kind else 1


def _make_kernel(rows_valid: int, needs_mask: bool):
    """Kernel factory closing over static (trace-time) shape information."""

    def kernel(x_ref, t_ref, w_ref, o_ref):
        c = pl.program_id(0)        # per-core ("parallel") axis
        i = pl.program_id(1)        # reduction ("arbitrary") axis

        # o_ref is the per-core (8, LANE) accumulator, resident across the
        # reduction axis (its block index does not depend on i).
        @pl.when(i == 0)
        def _():
            o_ref[...] = jnp.zeros_like(o_ref)

        tile_rows = x_ref.shape[0]
        x = x_ref[...].astype(jnp.float32)
        t = t_ref[...].astype(jnp.float32)
        w = w_ref[...].astype(jnp.float32)
        d = x - t
        prod = w * d * d            # (tile_rows, LANE) f32, pure VPU

        def accumulate(vals):
            # Reduce the row tile onto the (8, LANE) accumulator: reshape-sum
            # stays on the VPU (no cross-lane/XLU reduction, no scalar store).
            o_ref[...] += jnp.sum(vals.reshape(tile_rows // 8, 8, LANE), axis=0)

        if needs_mask:
            # Global (unclamped) row-block index and number of valid rows in
            # this block.  Interior blocks take the unmasked fast path; only
            # the partial last block and clamped redundant blocks pay for the
            # iota/compare/select.
            block = c * pl.num_programs(1) + i
            limit = rows_valid - block * tile_rows

            @pl.when(limit >= tile_rows)
            def _():
                accumulate(prod)

            @pl.when(limit < tile_rows)
            def _():
                row_ids = jax.lax.broadcasted_iota(
                    jnp.int32, (tile_rows, LANE), 0)
                accumulate(jnp.where(row_ids < limit, prod, 0.0))
        else:
            accumulate(prod)

    return kernel


def mse_loss_weighted(inputs, target, weights):
    """Pallas TPU implementation of sum(weights * (inputs - target) ** 2)."""
    x = jnp.ravel(inputs)
    t = jnp.ravel(target)
    w = jnp.ravel(weights)
    n = x.shape[0]

    # Small-problem fast path: kernel launch + pipeline overhead dwarfs the work.
    if n < SMALL_N_THRESHOLD:
        xf = x.astype(jnp.float32)
        tf = t.astype(jnp.float32)
        wf = w.astype(jnp.float32)
        d = xf - tf
        return jnp.sum(wf * d * d)

    # The 128-aligned prefix goes through the kernel; the <128-element ragged
    # tail is summed directly in the wrapper (no full-array jnp.pad copy).
    n_main = (n // LANE) * LANE
    tail = None
    if n_main < n:
        xt = x[n_main:].astype(jnp.float32)
        tt = t[n_main:].astype(jnp.float32)
        wt = w[n_main:].astype(jnp.float32)
        dt_ = xt - tt
        tail = jnp.sum(wt * dt_ * dt_)
        x, t, w = x[:n_main], t[:n_main], w[:n_main]

    rows = n_main // LANE
    x = x.reshape(rows, LANE)
    t = t.reshape(rows, LANE)
    w = w.reshape(rows, LANE)

    # Dtype-aware row tile: ~TARGET_TILE_BYTES per input per pipeline buffer
    # (f32 -> 4096 rows, bf16 -> 8192 rows), sublane-aligned.
    itemsize = max(x.dtype.itemsize, t.dtype.itemsize, w.dtype.itemsize)
    budget_rows = max(8, (TARGET_TILE_BYTES // (LANE * itemsize)) // 8 * 8)
    tile_rows = min(budget_rows, ((rows + 7) // 8) * 8)
    nblocks = pl.cdiv(rows, tile_rows)

    num_cores = _num_tensorcores()
    if nblocks < num_cores:
        num_cores = 1
    bpc = pl.cdiv(nblocks, num_cores)        # row blocks per core

    exact_blocks = (num_cores * bpc == nblocks)
    needs_mask = (rows % tile_rows != 0) or (not exact_blocks)

    if exact_blocks:
        in_map = lambda c, i: (c * bpc + i, 0)
    else:
        # Clamp redundant trailing block indices onto the last valid block so
        # no DMA is fully out of bounds; their contribution is masked to zero.
        in_map = lambda c, i: (jnp.minimum(c * bpc + i, nblocks - 1), 0)

    tile_spec = pl.BlockSpec((tile_rows, LANE), in_map)

    bytes_in = n_main * (x.dtype.itemsize + t.dtype.itemsize + w.dtype.itemsize)
    cost = pl.CostEstimate(
        flops=4 * n_main,
        transcendentals=0,
        bytes_accessed=bytes_in + num_cores * 8 * LANE * 4,
    )

    partials = pl.pallas_call(
        _make_kernel(rows, needs_mask),
        out_shape=jax.ShapeDtypeStruct((num_cores * 8, LANE), jnp.float32),
        grid_spec=pltpu.PrefetchScalarGridSpec(
            num_scalar_prefetch=0,
            grid=(num_cores, bpc),
            in_specs=[tile_spec, tile_spec, tile_spec],
            out_specs=pl.BlockSpec((8, LANE), lambda c, i: (c, 0)),
        ),
        compiler_params=pltpu.CompilerParams(
            dimension_semantics=("parallel", "arbitrary"),
            vmem_limit_bytes=VMEM_LIMIT_BYTES,
        ),
        cost_estimate=cost,
    )(x, t, w)

    # Tiny final reduction of the per-core (8, LANE) partial sums.
    loss = jnp.sum(partials)
    if tail is not None:
        loss = loss + tail
    return loss


if __name__ == "__main__":
    key = jax.random.PRNGKey(0)
    k1, k2, k3, k4 = jax.random.split(key, 4)

    def ref_loss(x, t, w):
        xf = x.astype(jnp.float32)
        tf = t.astype(jnp.float32)
        wf = w.astype(jnp.float32)
        return jnp.sum(wf * (xf - tf) ** 2)

    # 1) Typical DQN use: (batch, 1) Q-value estimates + per-sample IS weights
    #    (hits the small-n fast path).
    batch = 64
    x1 = jax.random.normal(k1, (batch, 1), dtype=jnp.float32)
    t1 = jax.random.normal(k2, (batch, 1), dtype=jnp.float32)
    w1 = jax.random.uniform(k3, (batch, 1), dtype=jnp.float32)
    out1 = jax.block_until_ready(mse_loss_weighted(x1, t1, w1))
    ref1 = ref_loss(x1, t1, w1)
    assert jnp.allclose(out1, ref1, rtol=1e-5, atol=1e-5), (out1, ref1)

    # 2) 128-aligned case: zero-copy reshape, unmasked kernel path.
    ka, kb, kc, k4 = jax.random.split(k4, 4)
    shape2 = (512, 1024)
    x2 = jax.random.normal(ka, shape2, dtype=jnp.float32)
    t2 = jax.random.normal(kb, shape2, dtype=jnp.float32)
    w2 = jax.random.uniform(kc, shape2, dtype=jnp.float32)
    out2 = jax.block_until_ready(mse_loss_weighted(x2, t2, w2))
    ref2 = ref_loss(x2, t2, w2)
    assert jnp.allclose(out2, ref2, rtol=1e-4, atol=1e-2), (out2, ref2)

    # 3) Ragged multi-block case: partial-block mask + <128-element tail
    #    (and the dual-core split on v7x).
    kd, ke, kf, _ = jax.random.split(k4, 4)
    shape3 = (4100, 130)
    x3 = jax.random.normal(kd, shape3, dtype=jnp.float32)
    t3 = jax.random.normal(ke, shape3, dtype=jnp.float32)
    w3 = jax.random.uniform(kf, shape3, dtype=jnp.float32)
    out3 = jax.block_until_ready(mse_loss_weighted(x3, t3, w3))
    ref3 = ref_loss(x3, t3, w3)
    assert jnp.allclose(out3, ref3, rtol=1e-4, atol=1e-2), (out3, ref3)

    print("KERNEL_OK")
</pallas_src>

<mosaic_0001>
module attributes {stable_mosaic.version = 11 : i64} {
  func.func @kernel(%arg0: i32, %arg1: i32, %arg2: memref<4096x128xf32, #tpu.memory_space<vmem>>, %arg3: memref<4096x128xf32, #tpu.memory_space<vmem>>, %arg4: memref<4096x128xf32, #tpu.memory_space<vmem>>, %arg5: memref<8x128xf32, #tpu.memory_space<vmem>>) attributes {dimension_semantics = [#tpu.dimension_semantics<parallel>, #tpu.dimension_semantics<arbitrary>], iteration_bounds = array<i64: 1, 1>, scalar_prefetch = 0 : i64, scratch_operands = 0 : i64, tpu.core_type = #tpu.core_type<tc>, window_params = [{transform_indices = @transform_0, window_bounds = array<i64: 4096, 128>}, {transform_indices = @transform_1, window_bounds = array<i64: 4096, 128>}, {transform_indices = @transform_2, window_bounds = array<i64: 4096, 128>}, {transform_indices = @transform_3, window_bounds = array<i64: 8, 128>}]} {
    %c0_i32 = arith.constant 0 : i32
    %0 = arith.cmpi eq, %arg1, %c0_i32 : i32
    %1 = arith.extui %0 : i1 to i32
    %c0_i32_0 = arith.constant 0 : i32
    %2 = arith.cmpi ne, %1, %c0_i32_0 : i32
    scf.if %2 {
      %cst_10 = arith.constant 0.000000e+00 : f32
      %14 = vector.broadcast %cst_10 : f32 to vector<8x128xf32>
      %c0_11 = arith.constant 0 : index
      %c0_12 = arith.constant 0 : index
      %15 = vector.load %arg5[%c0_11, %c0_12] : memref<8x128xf32, #tpu.memory_space<vmem>>, vector<8x128xf32>
      tpu.vector_store %arg5[%c0_11, %c0_12], %14 {strides = array<i32>} : memref<8x128xf32, #tpu.memory_space<vmem>>, vector<8x128xf32>,
    } else {
    }
    %c0 = arith.constant 0 : index
    %c0_1 = arith.constant 0 : index
    %3 = vector.load %arg2[%c0, %c0_1] : memref<4096x128xf32, #tpu.memory_space<vmem>>, vector<4096x128xf32>
    %c0_2 = arith.constant 0 : index
    %c0_3 = arith.constant 0 : index
    %4 = vector.load %arg3[%c0_2, %c0_3] : memref<4096x128xf32, #tpu.memory_space<vmem>>, vector<4096x128xf32>
    %c0_4 = arith.constant 0 : index
    %c0_5 = arith.constant 0 : index
    %5 = vector.load %arg4[%c0_4, %c0_5] : memref<4096x128xf32, #tpu.memory_space<vmem>>, vector<4096x128xf32>
    %6 = arith.subf %3, %4 : vector<4096x128xf32>
    %7 = arith.mulf %5, %6 : vector<4096x128xf32>
    %8 = arith.mulf %7, %6 : vector<4096x128xf32>
    %c0_6 = arith.constant 0 : index
    %c0_7 = arith.constant 0 : index
    %9 = vector.load %arg5[%c0_6, %c0_7] : memref<8x128xf32, #tpu.memory_space<vmem>>, vector<8x128xf32>
    %10 = vector.shape_cast %8 : vector<4096x128xf32> to vector<512x8x128xf32>
    %cst = arith.constant dense<0.000000e+00> : vector<8x128xf32>
    %11 = vector.multi_reduction <add>, %10, %cst [0] : vector<512x8x128xf32> to vector<8x128xf32>
    %12 = arith.addf %9, %11 : vector<8x128xf32>
    %c0_8 = arith.constant 0 : index
    %c0_9 = arith.constant 0 : index
    %13 = vector.load %arg5[%c0_8, %c0_9] : memref<8x128xf32, #tpu.memory_space<vmem>>, vector<8x128xf32>
    tpu.vector_store %arg5[%c0_8, %c0_9], %12 {strides = array<i32>} : memref<8x128xf32, #tpu.memory_space<vmem>>, vector<8x128xf32>,
    return
  }
  func.func @transform_0(%arg0: i32, %arg1: i32) -> (i32, i32) {
    %c1_i32 = arith.constant 1 : i32
    %0 = arith.muli %arg0, %c1_i32 : i32
    %1 = arith.addi %0, %arg1 : i32
    %c0_i32 = arith.constant 0 : i32
    %c0_i32_0 = arith.constant 0 : i32
    return %1, %c0_i32 : i32, i32
  }
  func.func @transform_1(%arg0: i32, %arg1: i32) -> (i32, i32) {
    %c1_i32 = arith.constant 1 : i32
    %0 = arith.muli %arg0, %c1_i32 : i32
    %1 = arith.addi %0, %arg1 : i32
    %c0_i32 = arith.constant 0 : i32
    %c0_i32_0 = arith.constant 0 : i32
    return %1, %c0_i32 : i32, i32
  }
  func.func @transform_2(%arg0: i32, %arg1: i32) -> (i32, i32) {
    %c1_i32 = arith.constant 1 : i32
    %0 = arith.muli %arg0, %c1_i32 : i32
    %1 = arith.addi %0, %arg1 : i32
    %c0_i32 = arith.constant 0 : i32
    %c0_i32_0 = arith.constant 0 : i32
    return %1, %c0_i32 : i32, i32
  }
  func.func @transform_3(%arg0: i32, %arg1: i32) -> (i32, i32) {
    %c0_i32 = arith.constant 0 : i32
    %c0_i32_0 = arith.constant 0 : i32
    return %arg0, %c0_i32 : i32, i32
  }
}

</mosaic_0001>

<llo_original>
// kernel: tpu_custom_call.1
$region0: #{tpu_custom_call.1}
  #allocation0 [shape = 'u32[]', space=smem, size = 0x4, offset = 0x4, fixed_abs, tag = 'smem constant byte address 0x4 - core index']
  #allocation1 [shape = 'u32[72,128]{1,0:T(1,128)}', space=vmem, size = 0x9000, scoped, tag = 'internal scratch']
  %s0 = inlined_call_operand.hbm [shape: f32[4096,128], index: 0, kind: input, shape index: {}]
  %s1 = inlined_call_operand.hbm [shape: f32[4096,128], index: 1, kind: input, shape index: {}]
  %s2 = inlined_call_operand.hbm [shape: f32[4096,128], index: 2, kind: input, shape index: {}]
  %s3 = inlined_call_operand.hbm [shape: f32[8,128], index: 3, kind: output, shape index: {}]
  %s4 = sld [smem:[#allocation0]]
  $region38: #{tpu_custom_call.1} parent=0
    _
  %s6 = ssub.s32 1, %s4
  %s7 = scalar_select 0, %s6, %s4
  $region1: #{tpu_custom_call.1} parent=0
    #allocation2 [shape = 'u8[2097152]{0}', space=vmem, size = 0x200000, scoped, tag = 'input window, operand 0, single buffered']
    #allocation3 [shape = 's32[1]{0}', space=sflag, size = 0x4, scoped, tag = 'scoped memory for tpu_custom_call.1']
    #allocation4 [shape = 's32[1]{0}', space=sflag, size = 0x4, scoped, tag = 'scoped memory for tpu_custom_call.1']
    #allocation5 [shape = 'u8[2097152]{0}', space=vmem, size = 0x200000, scoped, tag = 'input window, operand 1, single buffered']
    #allocation6 [shape = 's32[1]{0}', space=sflag, size = 0x4, scoped, tag = 'scoped memory for tpu_custom_call.1']
    #allocation7 [shape = 'u8[2097152]{0}', space=vmem, size = 0x200000, scoped, tag = 'input window, operand 2, single buffered']
    #allocation8 [shape = 'u8[4096]{0}', space=vmem, size = 0x1000, scoped, tag = 'output window, operand 0, single buffered']
    %8 = vsyncpa [#allocation3], 0
    %9 = vsyncpa [#allocation6], 0
    %10 = vsyncpa [#allocation4], 0
    // Predicated region
    $region2: #{tpu_custom_call.1} parent=1 // pred_check
      _
    $region3: #{tpu_custom_call.1} parent=1 // pred_check_branch
      %12 = sbr.rel (0) target = $region5
    $region4: #{tpu_custom_call.1} parent=1 // pred_region
      %s13 = sadd.s32 0, 0
      %s14 = smul.u32 512, %s13
      %16 = vsyncadd [#allocation3], 0
      %s17 = smul.addr %s14, 8
      %s18 = scalar_lea.hbm %s0, %s17
      %s19 = sshll.u32 %s18, 4
      %s20 = int_to_ptr.hbm [resolvable:$true] %s19
      %s21 = sshll.u32 [#allocation2], 4
      %s22 = int_to_ptr.vmem [resolvable:$true] %s21
      %27 = dma.hbm_to_vmem [thread:$0]  %s20, 65536, %s22, [#allocation3], 128, 128, 8
    $region5: #{tpu_custom_call.1} parent=1 // pred_fallthru
      _
    // Predicated region
    $region6: #{tpu_custom_call.1} parent=1 // pred_check
      _
    $region7: #{tpu_custom_call.1} parent=1 // pred_check_branch
      %29 = sbr.rel (0) target = $region9
    $region8: #{tpu_custom_call.1} parent=1 // pred_region
      %s30 = sadd.s32 0, 0
      %s31 = smul.u32 512, %s30
      %33 = vsyncadd [#allocation6], 0
      %s34 = smul.addr %s31, 8
      %s35 = scalar_lea.hbm %s1, %s34
      %s36 = sshll.u32 %s35, 4
      %s37 = int_to_ptr.hbm [resolvable:$true] %s36
      %s38 = sshll.u32 [#allocation5], 4
      %s39 = int_to_ptr.vmem [resolvable:$true] %s38
      %44 = dma.hbm_to_vmem [thread:$0]  %s37, 65536, %s39, [#allocation6], 128, 128, 8
    $region9: #{tpu_custom_call.1} parent=1 // pred_fallthru
      _
    // Predicated region
    $region10: #{tpu_custom_call.1} parent=1 // pred_check
      _
    $region11: #{tpu_custom_call.1} parent=1 // pred_check_branch
      %46 = sbr.rel (0) target = $region13
    $region12: #{tpu_custom_call.1} parent=1 // pred_region
      %s47 = sadd.s32 0, 0
      %s48 = smul.u32 512, %s47
      %50 = vsyncadd [#allocation6], 0
      %s51 = smul.addr %s48, 8
      %s52 = scalar_lea.hbm %s2, %s51
      %s53 = sshll.u32 %s52, 4
      %s54 = int_to_ptr.hbm [resolvable:$true] %s53
      %s55 = sshll.u32 [#allocation7], 4
      %s56 = int_to_ptr.vmem [resolvable:$true] %s55
      %61 = dma.hbm_to_vmem [thread:$0]  %s54, 65536, %s56, [#allocation6], 128, 128, 8
    $region13: #{tpu_custom_call.1} parent=1 // pred_fallthru
      _
    // Predicated region
    $region14: #{tpu_custom_call.1} parent=1 // pred_check
      _
    $region15: #{tpu_custom_call.1} parent=1 // pred_check_branch
      %63 = sbr.rel (0) target = $region17
    $region16: #{tpu_custom_call.1} parent=1 // pred_region
      %65 = dma.done [#allocation3], 65536
    $region17: #{tpu_custom_call.1} parent=1 // pred_fallthru
      _
    // Predicated region
    $region18: #{tpu_custom_call.1} parent=1 // pred_check
      _
    $region19: #{tpu_custom_call.1} parent=1 // pred_check_branch
      %67 = sbr.rel (0) target = $region21
    $region20: #{tpu_custom_call.1} parent=1 // pred_region
      %69 = dma.done [#allocation6], 65536
    $region21: #{tpu_custom_call.1} parent=1 // pred_fallthru
      _
    // Predicated region
    $region22: #{tpu_custom_call.1} parent=1 // pred_check
      _
    $region23: #{tpu_custom_call.1} parent=1 // pred_check_branch
      %71 = sbr.rel (0) target = $region25
    $region24: #{tpu_custom_call.1} parent=1 // pred_region
      %73 = dma.done [#allocation6], 65536
    $region25: #{tpu_custom_call.1} parent=1 // pred_fallthru
      _
    %s74 = sadd.s32 0, 0
    %s75 = smul.u32 512, %s74
    %s76 = sadd.s32 0, 0
    %s77 = smul.u32 512, %s76
    %s78 = sadd.s32 0, 0
    %s79 = smul.u32 512, %s78
    %p80 = scmp.eq.s32.totalorder 0, 0
    // Predicated region
    $region26: #{tpu_custom_call.1} parent=1 // pred_check
      %p81 = pneg %p80
    $region27: #{tpu_custom_call.1} parent=1 // pred_check_branch
      %83 = sbr.rel (%p81) target = $region29
    $region28: #{tpu_custom_call.1} parent=1 // pred_region
      %84 = vst [vmem:[#allocation8] sm:$0xff] 0.0
    $region29: #{tpu_custom_call.1} parent=1 // pred_fallthru
      _
    %v85 = vld [vmem:[#allocation2] sm:$0xff]
    %v86 = vld [vmem:[#allocation2 + $0x8] sm:$0xff]
    %v87 = vld [vmem:[#allocation2 + $0x10] sm:$0xff]
    %v88 = vld [vmem:[#allocation2 + $0x18] sm:$0xff]
    %v89 = vld [vmem:[#allocation2 + $0x20] sm:$0xff]
    %v90 = vld [vmem:[#allocation2 + $0x28] sm:$0xff]
    %v91 = vld [vmem:[#allocation2 + $0x30] sm:$0xff]
    %v92 = vld [vmem:[#allocation2 + $0x38] sm:$0xff]
    %v93 = vld [vmem:[#allocation2 + $0x40] sm:$0xff]
    %v94 = vld [vmem:[#allocation2 + $0x48] sm:$0xff]
    %v95 = vld [vmem:[#allocation2 + $0x50] sm:$0xff]
    %v96 = vld [vmem:[#allocation2 + $0x58] sm:$0xff]
    %v97 = vld [vmem:[#allocation2 + $0x60] sm:$0xff]
    %v98 = vld [vmem:[#allocation2 + $0x68] sm:$0xff]
    %v99 = vld [vmem:[#allocation2 + $0x70] sm:$0xff]
    %v100 = vld [vmem:[#allocation2 + $0x78] sm:$0xff]
    %v101 = vld [vmem:[#allocation2 + $0x80] sm:$0xff]
    %v102 = vld [vmem:[#allocation2 + $0x88] sm:$0xff]
    %v103 = vld [vmem:[#allocation2 + $0x90] sm:$0xff]
    %v104 = vld [vmem:[#allocation2 + $0x98] sm:$0xff]
    %v105 = vld [vmem:[#allocation2 + $0xa0] sm:$0xff]
    %v106 = vld [vmem:[#allocation2 + $0xa8] sm:$0xff]
    %v107 = vld [vmem:[#allocation2 + $0xb0] sm:$0xff]
    %v108 = vld [vmem:[#allocation2 + $0xb8] sm:$0xff]
    %v109 = vld [vmem:[#allocation2 + $0xc0] sm:$0xff]
    %v110 = vld [vmem:[#allocation2 + $0xc8] sm:$0xff]
    %v111 = vld [vmem:[#allocation2 + $0xd0] sm:$0xff]
    %v112 = vld [vmem:[#allocation2 + $0xd8] sm:$0xff]
    %v113 = vld [vmem:[#allocation2 + $0xe0] sm:$0xff]
    %v114 = vld [vmem:[#allocation2 + $0xe8] sm:$0xff]
    %v115 = vld [vmem:[#allocation2 + $0xf0] sm:$0xff]
    %v116 = vld [vmem:[#allocation2 + $0xf8] sm:$0xff]
    %v117 = vld [vmem:[#allocation2 + $0x100] sm:$0xff]
    %v118 = vld [vmem:[#allocation2 + $0x108] sm:$0xff]
    %v119 = vld [vmem:[#allocation2 + $0x110] sm:$0xff]
    %v120 = vld [vmem:[#allocation2 + $0x118] sm:$0xff]
    %v121 = vld [vmem:[#allocation2 + $0x120] sm:$0xff]
    %v122 = vld [vmem:[#allocation2 + $0x128] sm:$0xff]
    %v123 = vld [vmem:[#allocation2 + $0x130] sm:$0xff]
    %v124 = vld [vmem:[#allocation2 + $0x138] sm:$0xff]
    %v125 = vld [vmem:[#allocation2 + $0x140] sm:$0xff]
    %v126 = vld [vmem:[#allocation2 + $0x148] sm:$0xff]
    %v127 = vld [vmem:[#allocation2 + $0x150] sm:$0xff]
    %v128 = vld [vmem:[#allocation2 + $0x158] sm:$0xff]
    %v129 = vld [vmem:[#allocation2 + $0x160] sm:$0xff]
    %v130 = vld [vmem:[#allocation2 + $0x168] sm:$0xff]
    %v131 = vld [vmem:[#allocation2 + $0x170] sm:$0xff]
    %v132 = vld [vmem:[#allocation2 + $0x178] sm:$0xff]
    %v133 = vld [vmem:[#allocation2 + $0x180] sm:$0xff]
    %v134 = vld [vmem:[#allocation2 + $0x188] sm:$0xff]
    %v135 = vld [vmem:[#allocation2 + $0x190] sm:$0xff]
    %v136 = vld [vmem:[#allocation2 + $0x198] sm:$0xff]
    %v137 = vld [vmem:[#allocation2 + $0x1a0] sm:$0xff]
    %v138 = vld [vmem:[#allocation2 + $0x1a8] sm:$0xff]
    %v139 = vld [vmem:[#allocation2 + $0x1b0] sm:$0xff]
    %v140 = vld [vmem:[#allocation2 + $0x1b8] sm:$0xff]
    %v141 = vld [vmem:[#allocation2 + $0x1c0] sm:$0xff]
    %v142 = vld [vmem:[#allocation2 + $0x1c8] sm:$0xff]
    %v143 = vld [vmem:[#allocation2 + $0x1d0] sm:$0xff]
    %v144 = vld [vmem:[#allocation2 + $0x1d8] sm:$0xff]
    %v145 = vld [vmem:[#allocation2 + $0x1e0] sm:$0xff]
    %v146 = vld [vmem:[#allocation2 + $0x1e8] sm:$0xff]
    %v147 = vld [vmem:[#allocation2 + $0x1f0] sm:$0xff]
    %v148 = vld [vmem:[#allocation2 + $0x1f8] sm:$0xff]
    %v149 = vld [vmem:[#allocation2 + $0x200] sm:$0xff]
    %v150 = vld [vmem:[#allocation2 + $0x208] sm:$0xff]
    %v151 = vld [vmem:[#allocation2 + $0x210] sm:$0xff]
    %v152 = vld [vmem:[#allocation2 + $0x218] sm:$0xff]
    %v153 = vld [vmem:[#allocation2 + $0x220] sm:$0xff]
    %v154 = vld [vmem:[#allocation2 + $0x228] sm:$0xff]
    %v155 = vld [vmem:[#allocation2 + $0x230] sm:$0xff]
    %v156 = vld [vmem:[#allocation2 + $0x238] sm:$0xff]
    %v157 = vld [vmem:[#allocation2 + $0x240] sm:$0xff]
    %v158 = vld [vmem:[#allocation2 + $0x248] sm:$0xff]
    %v159 = vld [vmem:[#allocation2 + $0x250] sm:$0xff]
    %v160 = vld [vmem:[#allocation2 + $0x258] sm:$0xff]
    %v161 = vld [vmem:[#allocation2 + $0x260] sm:$0xff]
    %v162 = vld [vmem:[#allocation2 + $0x268] sm:$0xff]
    %v163 = vld [vmem:[#allocation2 + $0x270] sm:$0xff]
    %v164 = vld [vmem:[#allocation2 + $0x278] sm:$0xff]
    %v165 = vld [vmem:[#allocation2 + $0x280] sm:$0xff]
    %v166 = vld [vmem:[#allocation2 + $0x288] sm:$0xff]
    %v167 = vld [vmem:[#allocation2 + $0x290] sm:$0xff]
    %v168 = vld [vmem:[#allocation2 + $0x298] sm:$0xff]
    %v169 = vld [vmem:[#allocation2 + $0x2a0] sm:$0xff]
    %v170 = vld [vmem:[#allocation2 + $0x2a8] sm:$0xff]
    %v171 = vld [vmem:[#allocation2 + $0x2b0] sm:$0xff]
    %v172 = vld [vmem:[#allocation2 + $0x2b8] sm:$0xff]
    %v173 = vld [vmem:[#allocation2 + $0x2c0] sm:$0xff]
    %v174 = vld [vmem:[#allocation2 + $0x2c8] sm:$0xff]
    %v175 = vld [vmem:[#allocation2 + $0x2d0] sm:$0xff]
    %v176 = vld [vmem:[#allocation2 + $0x2d8] sm:$0xff]
    %v177 = vld [vmem:[#allocation2 + $0x2e0] sm:$0xff]
    %v178 = vld [vmem:[#allocation2 + $0x2e8] sm:$0xff]
    %v179 = vld [vmem:[#allocation2 + $0x2f0] sm:$0xff]
    %v180 = vld [vmem:[#allocation2 + $0x2f8] sm:$0xff]
    %v181 = vld [vmem:[#allocation2 + $0x300] sm:$0xff]
    %v182 = vld [vmem:[#allocation2 + $0x308] sm:$0xff]
    %v183 = vld [vmem:[#allocation2 + $0x310] sm:$0xff]
    %v184 = vld [vmem:[#allocation2 + $0x318] sm:$0xff]
    %v185 = vld [vmem:[#allocation2 + $0x320] sm:$0xff]
    %v186 = vld [vmem:[#allocation2 + $0x328] sm:$0xff]
    %v187 = vld [vmem:[#allocation2 + $0x330] sm:$0xff]
    %v188 = vld [vmem:[#allocation2 + $0x338] sm:$0xff]
    %v189 = vld [vmem:[#allocation2 + $0x340] sm:$0xff]
    %v190 = vld [vmem:[#allocation2 + $0x348] sm:$0xff]
    %v191 = vld [vmem:[#allocation2 + $0x350] sm:$0xff]
    %v192 = vld [vmem:[#allocation2 + $0x358] sm:$0xff]
    %v193 = vld [vmem:[#allocation2 + $0x360] sm:$0xff]
    %v194 = vld [vmem:[#allocation2 + $0x368] sm:$0xff]
    %v195 = vld [vmem:[#allocation2 + $0x370] sm:$0xff]
    %v196 = vld [vmem:[#allocation2 + $0x378] sm:$0xff]
    %v197 = vld [vmem:[#allocation2 + $0x380] sm:$0xff]
    %v198 = vld [vmem:[#allocation2 + $0x388] sm:$0xff]
    %v199 = vld [vmem:[#allocation2 + $0x390] sm:$0xff]
    %v200 = vld [vmem:[#allocation2 + $0x398] sm:$0xff]
    %v201 = vld [vmem:[#allocation2 + $0x3a0] sm:$0xff]
    %v202 = vld [vmem:[#allocation2 + $0x3a8] sm:$0xff]
    %v203 = vld [vmem:[#allocation2 + $0x3b0] sm:$0xff]
    %v204 = vld [vmem:[#allocation2 + $0x3b8] sm:$0xff]
    %v205 = vld [vmem:[#allocation2 + $0x3c0] sm:$0xff]
    %v206 = vld [vmem:[#allocation2 + $0x3c8] sm:$0xff]
    %v207 = vld [vmem:[#allocation2 + $0x3d0] sm:$0xff]
    %v208 = vld [vmem:[#allocation2 + $0x3d8] sm:$0xff]
    %v209 = vld [vmem:[#allocation2 + $0x3e0] sm:$0xff]
    %v210 = vld [vmem:[#allocation2 + $0x3e8] sm:$0xff]
    %v211 = vld [vmem:[#allocation2 + $0x3f0] sm:$0xff]
    %v212 = vld [vmem:[#allocation2 + $0x3f8] sm:$0xff]
    %v213 = vld [vmem:[#allocation2 + $0x400] sm:$0xff]
    %v214 = vld [vmem:[#allocation2 + $0x408] sm:$0xff]
    %v215 = vld [vmem:[#allocation2 + $0x410] sm:$0xff]
    %v216 = vld [vmem:[#allocation2 + $0x418] sm:$0xff]
    %v217 = vld [vmem:[#allocation2 + $0x420] sm:$0xff]
    %v218 = vld [vmem:[#allocation2 + $0x428] sm:$0xff]
    %v219 = vld [vmem:[#allocation2 + $0x430] sm:$0xff]
    %v220 = vld [vmem:[#allocation2 + $0x438] sm:$0xff]
    %v221 = vld [vmem:[#allocation2 + $0x440] sm:$0xff]
    %v222 = vld [vmem:[#allocation2 + $0x448] sm:$0xff]
    %v223 = vld [vmem:[#allocation2 + $0x450] sm:$0xff]
    %v224 = vld [vmem:[#allocation2 + $0x458] sm:$0xff]
    %v225 = vld [vmem:[#allocation2 + $0x460] sm:$0xff]
    %v226 = vld [vmem:[#allocation2 + $0x468] sm:$0xff]
    %v227 = vld [vmem:[#allocation2 + $0x470] sm:$0xff]
    %v228 = vld [vmem:[#allocation2 + $0x478] sm:$0xff]
    %v229 = vld [vmem:[#allocation2 + $0x480] sm:$0xff]
    %v230 = vld [vmem:[#allocation2 + $0x488] sm:$0xff]
    %v231 = vld [vmem:[#allocation2 + $0x490] sm:$0xff]
    %v232 = vld [vmem:[#allocation2 + $0x498] sm:$0xff]
    %v233 = vld [vmem:[#allocation2 + $0x4a0] sm:$0xff]
    %v234 = vld [vmem:[#allocation2 + $0x4a8] sm:$0xff]
    %v235 = vld [vmem:[#allocation2 + $0x4b0] sm:$0xff]
    %v236 = vld [vmem:[#allocation2 + $0x4b8] sm:$0xff]
    %v237 = vld [vmem:[#allocation2 + $0x4c0] sm:$0xff]
    %v238 = vld [vmem:[#allocation2 + $0x4c8] sm:$0xff]
    %v239 = vld [vmem:[#allocation2 + $0x4d0] sm:$0xff]
    %v240 = vld [vmem:[#allocation2 + $0x4d8] sm:$0xff]
    %v241 = vld [vmem:[#allocation2 + $0x4e0] sm:$0xff]
    %v242 = vld [vmem:[#allocation2 + $0x4e8] sm:$0xff]
    %v243 = vld [vmem:[#allocation2 + $0x4f0] sm:$0xff]
    %v244 = vld [vmem:[#allocation2 + $0x4f8] sm:$0xff]
    %v245 = vld [vmem:[#allocation2 + $0x500] sm:$0xff]
    %v246 = vld [vmem:[#allocation2 + $0x508] sm:$0xff]
    %v247 = vld [vmem:[#allocation2 + $0x510] sm:$0xff]
    %v248 = vld [vmem:[#allocation2 + $0x518] sm:$0xff]
    %v249 = vld [vmem:[#allocation2 + $0x520] sm:$0xff]
    %v250 = vld [vmem:[#allocation2 + $0x528] sm:$0xff]
    %v251 = vld [vmem:[#allocation2 + $0x530] sm:$0xff]
    %v252 = vld [vmem:[#allocation2 + $0x538] sm:$0xff]
    %v253 = vld [vmem:[#allocation2 + $0x540] sm:$0xff]
    %v254 = vld [vmem:[#allocation2 + $0x548] sm:$0xff]
    %v255 = vld [vmem:[#allocation2 + $0x550] sm:$0xff]
    %v256 = vld [vmem:[#allocation2 + $0x558] sm:$0xff]
    %v257 = vld [vmem:[#allocation2 + $0x560] sm:$0xff]
    %v258 = vld [vmem:[#allocation2 + $0x568] sm:$0xff]
    %v259 = vld [vmem:[#allocation2 + $0x570] sm:$0xff]
    %v260 = vld [vmem:[#allocation2 + $0x578] sm:$0xff]
    %v261 = vld [vmem:[#allocation2 + $0x580] sm:$0xff]
    %v262 = vld [vmem:[#allocation2 + $0x588] sm:$0xff]
    %v263 = vld [vmem:[#allocation2 + $0x590] sm:$0xff]
    %v264 = vld [vmem:[#allocation2 + $0x598] sm:$0xff]
    %v265 = vld [vmem:[#allocation2 + $0x5a0] sm:$0xff]
    %v266 = vld [vmem:[#allocation2 + $0x5a8] sm:$0xff]
    %v267 = vld [vmem:[#allocation2 + $0x5b0] sm:$0xff]
    %v268 = vld [vmem:[#allocation2 + $0x5b8] sm:$0xff]
    %v269 = vld [vmem:[#allocation2 + $0x5c0] sm:$0xff]
    %v270 = vld [vmem:[#allocation2 + $0x5c8] sm:$0xff]
    %v271 = vld [vmem:[#allocation2 + $0x5d0] sm:$0xff]
    %v272 = vld [vmem:[#allocation2 + $0x5d8] sm:$0xff]
    %v273 = vld [vmem:[#allocation2 + $0x5e0] sm:$0xff]
    %v274 = vld [vmem:[#allocation2 + $0x5e8] sm:$0xff]
    %v275 = vld [vmem:[#allocation2 + $0x5f0] sm:$0xff]
    %v276 = vld [vmem:[#allocation2 + $0x5f8] sm:$0xff]
    %v277 = vld [vmem:[#allocation2 + $0x600] sm:$0xff]
    %v278 = vld [vmem:[#allocation2 + $0x608] sm:$0xff]
    %v279 = vld [vmem:[#allocation2 + $0x610] sm:$0xff]
    %v280 = vld [vmem:[#allocation2 + $0x618] sm:$0xff]
    %v281 = vld [vmem:[#allocation2 + $0x620] sm:$0xff]
    %v282 = vld [vmem:[#allocation2 + $0x628] sm:$0xff]
    %v283 = vld [vmem:[#allocation2 + $0x630] sm:$0xff]
    %v284 = vld [vmem:[#allocation2 + $0x638] sm:$0xff]
    %v285 = vld [vmem:[#allocation2 + $0x640] sm:$0xff]
    %v286 = vld [vmem:[#allocation2 + $0x648] sm:$0xff]
    %v287 = vld [vmem:[#allocation2 + $0x650] sm:$0xff]
    %v288 = vld [vmem:[#allocation2 + $0x658] sm:$0xff]
    %v289 = vld [vmem:[#allocation2 + $0x660] sm:$0xff]
    %v290 = vld [vmem:[#allocation2 + $0x668] sm:$0xff]
    %v291 = vld [vmem:[#allocation2 + $0x670] sm:$0xff]
    %v292 = vld [vmem:[#allocation2 + $0x678] sm:$0xff]
    %v293 = vld [vmem:[#allocation2 + $0x680] sm:$0xff]
    %v294 = vld [vmem:[#allocation2 + $0x688] sm:$0xff]
    %v295 = vld [vmem:[#allocation2 + $0x690] sm:$0xff]
    %v296 = vld [vmem:[#allocation2 + $0x698] sm:$0xff]
    %v297 = vld [vmem:[#allocation2 + $0x6a0] sm:$0xff]
    %v298 = vld [vmem:[#allocation2 + $0x6a8] sm:$0xff]
    %v299 = vld [vmem:[#allocation2 + $0x6b0] sm:$0xff]
    %v300 = vld [vmem:[#allocation2 + $0x6b8] sm:$0xff]
    %v301 = vld [vmem:[#allocation2 + $0x6c0] sm:$0xff]
    %v302 = vld [vmem:[#allocation2 + $0x6c8] sm:$0xff]
    %v303 = vld [vmem:[#allocation2 + $0x6d0] sm:$0xff]
    %v304 = vld [vmem:[#allocation2 + $0x6d8] sm:$0xff]
    %v305 = vld [vmem:[#allocation2 + $0x6e0] sm:$0xff]
    %v306 = vld [vmem:[#allocation2 + $0x6e8] sm:$0xff]
    %v307 = vld [vmem:[#allocation2 + $0x6f0] sm:$0xff]
    %v308 = vld [vmem:[#allocation2 + $0x6f8] sm:$0xff]
    %v309 = vld [vmem:[#allocation2 + $0x700] sm:$0xff]
    %v310 = vld [vmem:[#allocation2 + $0x708] sm:$0xff]
    %v311 = vld [vmem:[#allocation2 + $0x710] sm:$0xff]
    %v312 = vld [vmem:[#allocation2 + $0x718] sm:$0xff]
    %v313 = vld [vmem:[#allocation2 + $0x720] sm:$0xff]
    %v314 = vld [vmem:[#allocation2 + $0x728] sm:$0xff]
    %v315 = vld [vmem:[#allocation2 + $0x730] sm:$0xff]
    %v316 = vld [vmem:[#allocation2 + $0x738] sm:$0xff]
    %v317 = vld [vmem:[#allocation2 + $0x740] sm:$0xff]
    %v318 = vld [vmem:[#allocation2 + $0x748] sm:$0xff]
    %v319 = vld [vmem:[#allocation2 + $0x750] sm:$0xff]
    %v320 = vld [vmem:[#allocation2 + $0x758] sm:$0xff]
    %v321 = vld [vmem:[#allocation2 + $0x760] sm:$0xff]
    %v322 = vld [vmem:[#allocation2 + $0x768] sm:$0xff]
    %v323 = vld [vmem:[#allocation2 + $0x770] sm:$0xff]
    %v324 = vld [vmem:[#allocation2 + $0x778] sm:$0xff]
    %v325 = vld [vmem:[#allocation2 + $0x780] sm:$0xff]
    %v326 = vld [vmem:[#allocation2 + $0x788] sm:$0xff]
    %v327 = vld [vmem:[#allocation2 + $0x790] sm:$0xff]
    %v328 = vld [vmem:[#allocation2 + $0x798] sm:$0xff]
    %v329 = vld [vmem:[#allocation2 + $0x7a0] sm:$0xff]
    %v330 = vld [vmem:[#allocation2 + $0x7a8] sm:$0xff]
    %v331 = vld [vmem:[#allocation2 + $0x7b0] sm:$0xff]
    %v332 = vld [vmem:[#allocation2 + $0x7b8] sm:$0xff]
    %v333 = vld [vmem:[#allocation2 + $0x7c0] sm:$0xff]
    %v334 = vld [vmem:[#allocation2 + $0x7c8] sm:$0xff]
    %v335 = vld [vmem:[#allocation2 + $0x7d0] sm:$0xff]
    %v336 = vld [vmem:[#allocation2 + $0x7d8] sm:$0xff]
    %v337 = vld [vmem:[#allocation2 + $0x7e0] sm:$0xff]
    %v338 = vld [vmem:[#allocation2 + $0x7e8] sm:$0xff]
    %v339 = vld [vmem:[#allocation2 + $0x7f0] sm:$0xff]
    %v340 = vld [vmem:[#allocation2 + $0x7f8] sm:$0xff]
    %v341 = vld [vmem:[#allocation2 + $0x800] sm:$0xff]
    %v342 = vld [vmem:[#allocation2 + $0x808] sm:$0xff]
    %v343 = vld [vmem:[#allocation2 + $0x810] sm:$0xff]
    %v344 = vld [vmem:[#allocation2 + $0x818] sm:$0xff]
    %v345 = vld [vmem:[#allocation2 + $0x820] sm:$0xff]
    %v346 = vld [vmem:[#allocation2 + $0x828] sm:$0xff]
    %v347 = vld [vmem:[#allocation2 + $0x830] sm:$0xff]
    %v348 = vld [vmem:[#allocation2 + $0x838] sm:$0xff]
    %v349 = vld [vmem:[#allocation2 + $0x840] sm:$0xff]
    %v350 = vld [vmem:[#allocation2 + $0x848] sm:$0xff]
    %v351 = vld [vmem:[#allocation2 + $0x850] sm:$0xff]
    %v352 = vld [vmem:[#allocation2 + $0x858] sm:$0xff]
    %v353 = vld [vmem:[#allocation2 + $0x860] sm:$0xff]
    %v354 = vld [vmem:[#allocation2 + $0x868] sm:$0xff]
    %v355 = vld [vmem:[#allocation2 + $0x870] sm:$0xff]
    %v356 = vld [vmem:[#allocation2 + $0x878] sm:$0xff]
    %v357 = vld [vmem:[#allocation2 + $0x880] sm:$0xff]
    %v358 = vld [vmem:[#allocation2 + $0x888] sm:$0xff]
    %v359 = vld [vmem:[#allocation2 + $0x890] sm:$0xff]
    %v360 = vld [vmem:[#allocation2 + $0x898] sm:$0xff]
    %v361 = vld [vmem:[#allocation2 + $0x8a0] sm:$0xff]
    %v362 = vld [vmem:[#allocation2 + $0x8a8] sm:$0xff]
    %v363 = vld [vmem:[#allocation2 + $0x8b0] sm:$0xff]
    %v364 = vld [vmem:[#allocation2 + $0x8b8] sm:$0xff]
    %v365 = vld [vmem:[#allocation2 + $0x8c0] sm:$0xff]
    %v366 = vld [vmem:[#allocation2 + $0x8c8] sm:$0xff]
    %v367 = vld [vmem:[#allocation2 + $0x8d0] sm:$0xff]
    %v368 = vld [vmem:[#allocation2 + $0x8d8] sm:$0xff]
    %v369 = vld [vmem:[#allocation2 + $0x8e0] sm:$0xff]
    %v370 = vld [vmem:[#allocation2 + $0x8e8] sm:$0xff]
    %v371 = vld [vmem:[#allocation2 + $0x8f0] sm:$0xff]
    %v372 = vld [vmem:[#allocation2 + $0x8f8] sm:$0xff]
    %v373 = vld [vmem:[#allocation2 + $0x900] sm:$0xff]
    %v374 = vld [vmem:[#allocation2 + $0x908] sm:$0xff]
    %v375 = vld [vmem:[#allocation2 + $0x910] sm:$0xff]
    %v376 = vld [vmem:[#allocation2 + $0x918] sm:$0xff]
    %v377 = vld [vmem:[#allocation2 + $0x920] sm:$0xff]
    %v378 = vld [vmem:[#allocation2 + $0x928] sm:$0xff]
    %v379 = vld [vmem:[#allocation2 + $0x930] sm:$0xff]
    %v380 = vld [vmem:[#allocation2 + $0x938] sm:$0xff]
    %v381 = vld [vmem:[#allocation2 + $0x940] sm:$0xff]
    %v382 = vld [vmem:[#allocation2 + $0x948] sm:$0xff]
    %v383 = vld [vmem:[#allocation2 + $0x950] sm:$0xff]
    %v384 = vld [vmem:[#allocation2 + $0x958] sm:$0xff]
    %v385 = vld [vmem:[#allocation2 + $0x960] sm:$0xff]
    %v386 = vld [vmem:[#allocation2 + $0x968] sm:$0xff]
    %v387 = vld [vmem:[#allocation2 + $0x970] sm:$0xff]
    %v388 = vld [vmem:[#allocation2 + $0x978] sm:$0xff]
    %v389 = vld [vmem:[#allocation2 + $0x980] sm:$0xff]
    %v390 = vld [vmem:[#allocation2 + $0x988] sm:$0xff]
    %v391 = vld [vmem:[#allocation2 + $0x990] sm:$0xff]
    %v392 = vld [vmem:[#allocation2 + $0x998] sm:$0xff]
    %v393 = vld [vmem:[#allocation2 + $0x9a0] sm:$0xff]
    %v394 = vld [vmem:[#allocation2 + $0x9a8] sm:$0xff]
    %v395 = vld [vmem:[#allocation2 + $0x9b0] sm:$0xff]
    %v396 = vld [vmem:[#allocation2 + $0x9b8] sm:$0xff]
    %v397 = vld [vmem:[#allocation2 + $0x9c0] sm:$0xff]
    %v398 = vld [vmem:[#allocation2 + $0x9c8] sm:$0xff]
    %v399 = vld [vmem:[#allocation2 + $0x9d0] sm:$0xff]
    %v400 = vld [vmem:[#allocation2 + $0x9d8] sm:$0xff]
    %v401 = vld [vmem:[#allocation2 + $0x9e0] sm:$0xff]
    %v402 = vld [vmem:[#allocation2 + $0x9e8] sm:$0xff]
    %v403 = vld [vmem:[#allocation2 + $0x9f0] sm:$0xff]
    %v404 = vld [vmem:[#allocation2 + $0x9f8] sm:$0xff]
    %v405 = vld [vmem:[#allocation2 + $0xa00] sm:$0xff]
    %v406 = vld [vmem:[#allocation2 + $0xa08] sm:$0xff]
    %v407 = vld [vmem:[#allocation2 + $0xa10] sm:$0xff]
    %v408 = vld [vmem:[#allocation2 + $0xa18] sm:$0xff]
    %v409 = vld [vmem:[#allocation2 + $0xa20] sm:$0xff]
    %v410 = vld [vmem:[#allocation2 + $0xa28] sm:$0xff]
    %v411 = vld [vmem:[#allocation2 + $0xa30] sm:$0xff]
    %v412 = vld [vmem:[#allocation2 + $0xa38] sm:$0xff]
    %v413 = vld [vmem:[#allocation2 + $0xa40] sm:$0xff]
    %v414 = vld [vmem:[#allocation2 + $0xa48] sm:$0xff]
    %v415 = vld [vmem:[#allocation2 + $0xa50] sm:$0xff]
    %v416 = vld [vmem:[#allocation2 + $0xa58] sm:$0xff]
    %v417 = vld [vmem:[#allocation2 + $0xa60] sm:$0xff]
    %v418 = vld [vmem:[#allocation2 + $0xa68] sm:$0xff]
    %v419 = vld [vmem:[#allocation2 + $0xa70] sm:$0xff]
    %v420 = vld [vmem:[#allocation2 + $0xa78] sm:$0xff]
    %v421 = vld [vmem:[#allocation2 + $0xa80] sm:$0xff]
    %v422 = vld [vmem:[#allocation2 + $0xa88] sm:$0xff]
    %v423 = vld [vmem:[#allocation2 + $0xa90] sm:$0xff]
    %v424 = vld [vmem:[#allocation2 + $0xa98] sm:$0xff]
    %v425 = vld [vmem:[#allocation2 + $0xaa0] sm:$0xff]
    %v426 = vld [vmem:[#allocation2 + $0xaa8] sm:$0xff]
    %v427 = vld [vmem:[#allocation2 + $0xab0] sm:$0xff]
    %v428 = vld [vmem:[#allocation2 + $0xab8] sm:$0xff]
    %v429 = vld [vmem:[#allocation2 + $0xac0] sm:$0xff]
    %v430 = vld [vmem:[#allocation2 + $0xac8] sm:$0xff]
    %v431 = vld [vmem:[#allocation2 + $0xad0] sm:$0xff]
    %v432 = vld [vmem:[#allocation2 + $0xad8] sm:$0xff]
    %v433 = vld [vmem:[#allocation2 + $0xae0] sm:$0xff]
    %v434 = vld [vmem:[#allocation2 + $0xae8] sm:$0xff]
    %v435 = vld [vmem:[#allocation2 + $0xaf0] sm:$0xff]
    %v436 = vld [vmem:[#allocation2 + $0xaf8] sm:$0xff]
    %v437 = vld [vmem:[#allocation2 + $0xb00] sm:$0xff]
    %v438 = vld [vmem:[#allocation2 + $0xb08] sm:$0xff]
    %v439 = vld [vmem:[#allocation2 + $0xb10] sm:$0xff]
    %v440 = vld [vmem:[#allocation2 + $0xb18] sm:$0xff]
    %v441 = vld [vmem:[#allocation2 + $0xb20] sm:$0xff]
    %v442 = vld [vmem:[#allocation2 + $0xb28] sm:$0xff]
    %v443 = vld [vmem:[#allocation2 + $0xb30] sm:$0xff]
    %v444 = vld [vmem:[#allocation2 + $0xb38] sm:$0xff]
    %v445 = vld [vmem:[#allocation2 + $0xb40] sm:$0xff]
    %v446 = vld [vmem:[#allocation2 + $0xb48] sm:$0xff]
    %v447 = vld [vmem:[#allocation2 + $0xb50] sm:$0xff]
    %v448 = vld [vmem:[#allocation2 + $0xb58] sm:$0xff]
    %v449 = vld [vmem:[#allocation2 + $0xb60] sm:$0xff]
    %v450 = vld [vmem:[#allocation2 + $0xb68] sm:$0xff]
    %v451 = vld [vmem:[#allocation2 + $0xb70] sm:$0xff]
    %v452 = vld [vmem:[#allocation2 + $0xb78] sm:$0xff]
    %v453 = vld [vmem:[#allocation2 + $0xb80] sm:$0xff]
    %v454 = vld [vmem:[#allocation2 + $0xb88] sm:$0xff]
    %v455 = vld [vmem:[#allocation2 + $0xb90] sm:$0xff]
    %v456 = vld [vmem:[#allocation2 + $0xb98] sm:$0xff]
    %v457 = vld [vmem:[#allocation2 + $0xba0] sm:$0xff]
    %v458 = vld [vmem:[#allocation2 + $0xba8] sm:$0xff]
    %v459 = vld [vmem:[#allocation2 + $0xbb0] sm:$0xff]
    %v460 = vld [vmem:[#allocation2 + $0xbb8] sm:$0xff]
    %v461 = vld [vmem:[#allocation2 + $0xbc0] sm:$0xff]
    %v462 = vld [vmem:[#allocation2 + $0xbc8] sm:$0xff]
    %v463 = vld [vmem:[#allocation2 + $0xbd0] sm:$0xff]
    %v464 = vld [vmem:[#allocation2 + $0xbd8] sm:$0xff]
    %v465 = vld [vmem:[#allocation2 + $0xbe0] sm:$0xff]
    %v466 = vld [vmem:[#allocation2 + $0xbe8] sm:$0xff]
    %v467 = vld [vmem:[#allocation2 + $0xbf0] sm:$0xff]
    %v468 = vld [vmem:[#allocation2 + $0xbf8] sm:$0xff]
    %v469 = vld [vmem:[#allocation2 + $0xc00] sm:$0xff]
    %v470 = vld [vmem:[#allocation2 + $0xc08] sm:$0xff]
    %v471 = vld [vmem:[#allocation2 + $0xc10] sm:$0xff]
    %v472 = vld [vmem:[#allocation2 + $0xc18] sm:$0xff]
    %v473 = vld [vmem:[#allocation2 + $0xc20] sm:$0xff]
    %v474 = vld [vmem:[#allocation2 + $0xc28] sm:$0xff]
    %v475 = vld [vmem:[#allocation2 + $0xc30] sm:$0xff]
    %v476 = vld [vmem:[#allocation2 + $0xc38] sm:$0xff]
    %v477 = vld [vmem:[#allocation2 + $0xc40] sm:$0xff]
    %v478 = vld [vmem:[#allocation2 + $0xc48] sm:$0xff]
    %v479 = vld [vmem:[#allocation2 + $0xc50] sm:$0xff]
    %v480 = vld [vmem:[#allocation2 + $0xc58] sm:$0xff]
    %v481 = vld [vmem:[#allocation2 + $0xc60] sm:$0xff]
    %v482 = vld [vmem:[#allocation2 + $0xc68] sm:$0xff]
    %v483 = vld [vmem:[#allocation2 + $0xc70] sm:$0xff]
    %v484 = vld [vmem:[#allocation2 + $0xc78] sm:$0xff]
    %v485 = vld [vmem:[#allocation2 + $0xc80] sm:$0xff]
    %v486 = vld [vmem:[#allocation2 + $0xc88] sm:$0xff]
    %v487 = vld [vmem:[#allocation2 + $0xc90] sm:$0xff]
    %v488 = vld [vmem:[#allocation2 + $0xc98] sm:$0xff]
    %v489 = vld [vmem:[#allocation2 + $0xca0] sm:$0xff]
    %v490 = vld [vmem:[#allocation2 + $0xca8] sm:$0xff]
    %v491 = vld [vmem:[#allocation2 + $0xcb0] sm:$0xff]
    %v492 = vld [vmem:[#allocation2 + $0xcb8] sm:$0xff]
    %v493 = vld [vmem:[#allocation2 + $0xcc0] sm:$0xff]
    %v494 = vld [vmem:[#allocation2 + $0xcc8] sm:$0xff]
    %v495 = vld [vmem:[#allocation2 + $0xcd0] sm:$0xff]
    %v496 = vld [vmem:[#allocation2 + $0xcd8] sm:$0xff]
    %v497 = vld [vmem:[#allocation2 + $0xce0] sm:$0xff]
    %v498 = vld [vmem:[#allocation2 + $0xce8] sm:$0xff]
    %v499 = vld [vmem:[#allocation2 + $0xcf0] sm:$0xff]
    %v500 = vld [vmem:[#allocation2 + $0xcf8] sm:$0xff]
    %v501 = vld [vmem:[#allocation2 + $0xd00] sm:$0xff]
    %v502 = vld [vmem:[#allocation2 + $0xd08] sm:$0xff]
    %v503 = vld [vmem:[#allocation2 + $0xd10] sm:$0xff]
    %v504 = vld [vmem:[#allocation2 + $0xd18] sm:$0xff]
    %v505 = vld [vmem:[#allocation2 + $0xd20] sm:$0xff]
    %v506 = vld [vmem:[#allocation2 + $0xd28] sm:$0xff]
    %v507 = vld [vmem:[#allocation2 + $0xd30] sm:$0xff]
    %v508 = vld [vmem:[#allocation2 + $0xd38] sm:$0xff]
    %v509 = vld [vmem:[#allocation2 + $0xd40] sm:$0xff]
    %v510 = vld [vmem:[#allocation2 + $0xd48] sm:$0xff]
    %v511 = vld [vmem:[#allocation2 + $0xd50] sm:$0xff]
    %v512 = vld [vmem:[#allocation2 + $0xd58] sm:$0xff]
    %v513 = vld [vmem:[#allocation2 + $0xd60] sm:$0xff]
    %v514 = vld [vmem:[#allocation2 + $0xd68] sm:$0xff]
    %v515 = vld [vmem:[#allocation2 + $0xd70] sm:$0xff]
    %v516 = vld [vmem:[#allocation2 + $0xd78] sm:$0xff]
    %v517 = vld [vmem:[#allocation2 + $0xd80] sm:$0xff]
    %v518 = vld [vmem:[#allocation2 + $0xd88] sm:$0xff]
    %v519 = vld [vmem:[#allocation2 + $0xd90] sm:$0xff]
    %v520 = vld [vmem:[#allocation2 + $0xd98] sm:$0xff]
    %v521 = vld [vmem:[#allocation2 + $0xda0] sm:$0xff]
    %v522 = vld [vmem:[#allocation2 + $0xda8] sm:$0xff]
    %v523 = vld [vmem:[#allocation2 + $0xdb0] sm:$0xff]
    %v524 = vld [vmem:[#allocation2 + $0xdb8] sm:$0xff]
    %v525 = vld [vmem:[#allocation2 + $0xdc0] sm:$0xff]
    %v526 = vld [vmem:[#allocation2 + $0xdc8] sm:$0xff]
    %v527 = vld [vmem:[#allocation2 + $0xdd0] sm:$0xff]
    %v528 = vld [vmem:[#allocation2 + $0xdd8] sm:$0xff]
    %v529 = vld [vmem:[#allocation2 + $0xde0] sm:$0xff]
    %v530 = vld [vmem:[#allocation2 + $0xde8] sm:$0xff]
    %v531 = vld [vmem:[#allocation2 + $0xdf0] sm:$0xff]
    %v532 = vld [vmem:[#allocation2 + $0xdf8] sm:$0xff]
    %v533 = vld [vmem:[#allocation2 + $0xe00] sm:$0xff]
    %v534 = vld [vmem:[#allocation2 + $0xe08] sm:$0xff]
    %v535 = vld [vmem:[#allocation2 + $0xe10] sm:$0xff]
    %v536 = vld [vmem:[#allocation2 + $0xe18] sm:$0xff]
    %v537 = vld [vmem:[#allocation2 + $0xe20] sm:$0xff]
    %v538 = vld [vmem:[#allocation2 + $0xe28] sm:$0xff]
    %v539 = vld [vmem:[#allocation2 + $0xe30] sm:$0xff]
    %v540 = vld [vmem:[#allocation2 + $0xe38] sm:$0xff]
    %v541 = vld [vmem:[#allocation2 + $0xe40] sm:$0xff]
    %v542 = vld [vmem:[#allocation2 + $0xe48] sm:$0xff]
    %v543 = vld [vmem:[#allocation2 + $0xe50] sm:$0xff]
    %v544 = vld [vmem:[#allocation2 + $0xe58] sm:$0xff]
    %v545 = vld [vmem:[#allocation2 + $0xe60] sm:$0xff]
    %v546 = vld [vmem:[#allocation2 + $0xe68] sm:$0xff]
    %v547 = vld [vmem:[#allocation2 + $0xe70] sm:$0xff]
    %v548 = vld [vmem:[#allocation2 + $0xe78] sm:$0xff]
    %v549 = vld [vmem:[#allocation2 + $0xe80] sm:$0xff]
    %v550 = vld [vmem:[#allocation2 + $0xe88] sm:$0xff]
    %v551 = vld [vmem:[#allocation2 + $0xe90] sm:$0xff]
    %v552 = vld [vmem:[#allocation2 + $0xe98] sm:$0xff]
    %v553 = vld [vmem:[#allocation2 + $0xea0] sm:$0xff]
    %v554 = vld [vmem:[#allocation2 + $0xea8] sm:$0xff]
    %v555 = vld [vmem:[#allocation2 + $0xeb0] sm:$0xff]
    %v556 = vld [vmem:[#allocation2 + $0xeb8] sm:$0xff]
    %v557 = vld [vmem:[#allocation2 + $0xec0] sm:$0xff]
    %v558 = vld [vmem:[#allocation2 + $0xec8] sm:$0xff]
    %v559 = vld [vmem:[#allocation2 + $0xed0] sm:$0xff]
    %v560 = vld [vmem:[#allocation2 + $0xed8] sm:$0xff]
    %v561 = vld [vmem:[#allocation2 + $0xee0] sm:$0xff]
    %v562 = vld [vmem:[#allocation2 + $0xee8] sm:$0xff]
    %v563 = vld [vmem:[#allocation2 + $0xef0] sm:$0xff]
    %v564 = vld [vmem:[#allocation2 + $0xef8] sm:$0xff]
    %v565 = vld [vmem:[#allocation2 + $0xf00] sm:$0xff]
    %v566 = vld [vmem:[#allocation2 + $0xf08] sm:$0xff]
    %v567 = vld [vmem:[#allocation2 + $0xf10] sm:$0xff]
    %v568 = vld [vmem:[#allocation2 + $0xf18] sm:$0xff]
    %v569 = vld [vmem:[#allocation2 + $0xf20] sm:$0xff]
    %v570 = vld [vmem:[#allocation2 + $0xf28] sm:$0xff]
    %v571 = vld [vmem:[#allocation2 + $0xf30] sm:$0xff]
    %v572 = vld [vmem:[#allocation2 + $0xf38] sm:$0xff]
    %v573 = vld [vmem:[#allocation2 + $0xf40] sm:$0xff]
    %v574 = vld [vmem:[#allocation2 + $0xf48] sm:$0xff]
    %v575 = vld [vmem:[#allocation2 + $0xf50] sm:$0xff]
    %v576 = vld [vmem:[#allocation2 + $0xf58] sm:$0xff]
    %v577 = vld [vmem:[#allocation2 + $0xf60] sm:$0xff]
    %v578 = vld [vmem:[#allocation2 + $0xf68] sm:$0xff]
    %v579 = vld [vmem:[#allocation2 + $0xf70] sm:$0xff]
    %v580 = vld [vmem:[#allocation2 + $0xf78] sm:$0xff]
    %v581 = vld [vmem:[#allocation2 + $0xf80] sm:$0xff]
    %v582 = vld [vmem:[#allocation2 + $0xf88] sm:$0xff]
    %v583 = vld [vmem:[#allocation2 + $0xf90] sm:$0xff]
    %v584 = vld [vmem:[#allocation2 + $0xf98] sm:$0xff]
    %v585 = vld [vmem:[#allocation2 + $0xfa0] sm:$0xff]
    %v586 = vld [vmem:[#allocation2 + $0xfa8] sm:$0xff]
    %v587 = vld [vmem:[#allocation2 + $0xfb0] sm:$0xff]
    %v588 = vld [vmem:[#allocation2 + $0xfb8] sm:$0xff]
    %v589 = vld [vmem:[#allocation2 + $0xfc0] sm:$0xff]
    %v590 = vld [vmem:[#allocation2 + $0xfc8] sm:$0xff]
    %v591 = vld [vmem:[#allocation2 + $0xfd0] sm:$0xff]
    %v592 = vld [vmem:[#allocation2 + $0xfd8] sm:$0xff]
    %v593 = vld [vmem:[#allocation2 + $0xfe0] sm:$0xff]
    %v594 = vld [vmem:[#allocation2 + $0xfe8] sm:$0xff]
    %v595 = vld [vmem:[#allocation2 + $0xff0] sm:$0xff]
    %v596 = vld [vmem:[#allocation2 + $0xff8] sm:$0xff]
    %v597 = vld [vmem:[#allocation5] sm:$0xff]
    %v598 = vld [vmem:[#allocation5 + $0x8] sm:$0xff]
    %v599 = vld [vmem:[#allocation5 + $0x10] sm:$0xff]
    %v600 = vld [vmem:[#allocation5 + $0x18] sm:$0xff]
    %v601 = vld [vmem:[#allocation5 + $0x20] sm:$0xff]
    %v602 = vld [vmem:[#allocation5 + $0x28] sm:$0xff]
    %v603 = vld [vmem:[#allocation5 + $0x30] sm:$0xff]
    %v604 = vld [vmem:[#allocation5 + $0x38] sm:$0xff]
    %v605 = vld [vmem:[#allocation5 + $0x40] sm:$0xff]
    %v606 = vld [vmem:[#allocation5 + $0x48] sm:$0xff]
    %v607 = vld [vmem:[#allocation5 + $0x50] sm:$0xff]
    %v608 = vld [vmem:[#allocation5 + $0x58] sm:$0xff]
    %v609 = vld [vmem:[#allocation5 + $0x60] sm:$0xff]
    %v610 = vld [vmem:[#allocation5 + $0x68] sm:$0xff]
    %v611 = vld [vmem:[#allocation5 + $0x70] sm:$0xff]
    %v612 = vld [vmem:[#allocation5 + $0x78] sm:$0xff]
    %v613 = vld [vmem:[#allocation5 + $0x80] sm:$0xff]
    %v614 = vld [vmem:[#allocation5 + $0x88] sm:$0xff]
    %v615 = vld [vmem:[#allocation5 + $0x90] sm:$0xff]
    %v616 = vld [vmem:[#allocation5 + $0x98] sm:$0xff]
    %v617 = vld [vmem:[#allocation5 + $0xa0] sm:$0xff]
    %v618 = vld [vmem:[#allocation5 + $0xa8] sm:$0xff]
    %v619 = vld [vmem:[#allocation5 + $0xb0] sm:$0xff]
    %v620 = vld [vmem:[#allocation5 + $0xb8] sm:$0xff]
    %v621 = vld [vmem:[#allocation5 + $0xc0] sm:$0xff]
    %v622 = vld [vmem:[#allocation5 + $0xc8] sm:$0xff]
    %v623 = vld [vmem:[#allocation5 + $0xd0] sm:$0xff]
    %v624 = vld [vmem:[#allocation5 + $0xd8] sm:$0xff]
    %v625 = vld [vmem:[#allocation5 + $0xe0] sm:$0xff]
    %v626 = vld [vmem:[#allocation5 + $0xe8] sm:$0xff]
    %v627 = vld [vmem:[#allocation5 + $0xf0] sm:$0xff]
    %v628 = vld [vmem:[#allocation5 + $0xf8] sm:$0xff]
    %v629 = vld [vmem:[#allocation5 + $0x100] sm:$0xff]
    %v630 = vld [vmem:[#allocation5 + $0x108] sm:$0xff]
    %v631 = vld [vmem:[#allocation5 + $0x110] sm:$0xff]
    %v632 = vld [vmem:[#allocation5 + $0x118] sm:$0xff]
    %v633 = vld [vmem:[#allocation5 + $0x120] sm:$0xff]
    %v634 = vld [vmem:[#allocation5 + $0x128] sm:$0xff]
    %v635 = vld [vmem:[#allocation5 + $0x130] sm:$0xff]
    %v636 = vld [vmem:[#allocation5 + $0x138] sm:$0xff]
    %v637 = vld [vmem:[#allocation5 + $0x140] sm:$0xff]
    %v638 = vld [vmem:[#allocation5 + $0x148] sm:$0xff]
    %v639 = vld [vmem:[#allocation5 + $0x150] sm:$0xff]
    %v640 = vld [vmem:[#allocation5 + $0x158] sm:$0xff]
    %v641 = vld [vmem:[#allocation5 + $0x160] sm:$0xff]
    %v642 = vld [vmem:[#allocation5 + $0x168] sm:$0xff]
    %v643 = vld [vmem:[#allocation5 + $0x170] sm:$0xff]
    %v644 = vld [vmem:[#allocation5 + $0x178] sm:$0xff]
    %v645 = vld [vmem:[#allocation5 + $0x180] sm:$0xff]
    %v646 = vld [vmem:[#allocation5 + $0x188] sm:$0xff]
    %v647 = vld [vmem:[#allocation5 + $0x190] sm:$0xff]
    %v648 = vld [vmem:[#allocation5 + $0x198] sm:$0xff]
    %v649 = vld [vmem:[#allocation5 + $0x1a0] sm:$0xff]
    %v650 = vld [vmem:[#allocation5 + $0x1a8] sm:$0xff]
    %v651 = vld [vmem:[#allocation5 + $0x1b0] sm:$0xff]
    %v652 = vld [vmem:[#allocation5 + $0x1b8] sm:$0xff]
    %v653 = vld [vmem:[#allocation5 + $0x1c0] sm:$0xff]
    %v654 = vld [vmem:[#allocation5 + $0x1c8] sm:$0xff]
    %v655 = vld [vmem:[#allocation5 + $0x1d0] sm:$0xff]
    %v656 = vld [vmem:[#allocation5 + $0x1d8] sm:$0xff]
    %v657 = vld [vmem:[#allocation5 + $0x1e0] sm:$0xff]
    %v658 = vld [vmem:[#allocation5 + $0x1e8] sm:$0xff]
    %v659 = vld [vmem:[#allocation5 + $0x1f0] sm:$0xff]
    %v660 = vld [vmem:[#allocation5 + $0x1f8] sm:$0xff]
    %v661 = vld [vmem:[#allocation5 + $0x200] sm:$0xff]
    %v662 = vld [vmem:[#allocation5 + $0x208] sm:$0xff]
    %v663 = vld [vmem:[#allocation5 + $0x210] sm:$0xff]
    %v664 = vld [vmem:[#allocation5 + $0x218] sm:$0xff]
    %v665 = vld [vmem:[#allocation5 + $0x220] sm:$0xff]
    %v666 = vld [vmem:[#allocation5 + $0x228] sm:$0xff]
    %v667 = vld [vmem:[#allocation5 + $0x230] sm:$0xff]
    %v668 = vld [vmem:[#allocation5 + $0x238] sm:$0xff]
    %v669 = vld [vmem:[#allocation5 + $0x240] sm:$0xff]
    %v670 = vld [vmem:[#allocation5 + $0x248] sm:$0xff]
    %v671 = vld [vmem:[#allocation5 + $0x250] sm:$0xff]
    %v672 = vld [vmem:[#allocation5 + $0x258] sm:$0xff]
    %v673 = vld [vmem:[#allocation5 + $0x260] sm:$0xff]
    %v674 = vld [vmem:[#allocation5 + $0x268] sm:$0xff]
    %v675 = vld [vmem:[#allocation5 + $0x270] sm:$0xff]
    %v676 = vld [vmem:[#allocation5 + $0x278] sm:$0xff]
    %v677 = vld [vmem:[#allocation5 + $0x280] sm:$0xff]
    %v678 = vld [vmem:[#allocation5 + $0x288] sm:$0xff]
    %v679 = vld [vmem:[#allocation5 + $0x290] sm:$0xff]
    %v680 = vld [vmem:[#allocation5 + $0x298] sm:$0xff]
    %v681 = vld [vmem:[#allocation5 + $0x2a0] sm:$0xff]
    %v682 = vld [vmem:[#allocation5 + $0x2a8] sm:$0xff]
    %v683 = vld [vmem:[#allocation5 + $0x2b0] sm:$0xff]
    %v684 = vld [vmem:[#allocation5 + $0x2b8] sm:$0xff]
    %v685 = vld [vmem:[#allocation5 + $0x2c0] sm:$0xff]
    %v686 = vld [vmem:[#allocation5 + $0x2c8] sm:$0xff]
    %v687 = vld [vmem:[#allocation5 + $0x2d0] sm:$0xff]
    %v688 = vld [vmem:[#allocation5 + $0x2d8] sm:$0xff]
    %v689 = vld [vmem:[#allocation5 + $0x2e0] sm:$0xff]
    %v690 = vld [vmem:[#allocation5 + $0x2e8] sm:$0xff]
    %v691 = vld [vmem:[#allocation5 + $0x2f0] sm:$0xff]
    %v692 = vld [vmem:[#allocation5 + $0x2f8] sm:$0xff]
    %v693 = vld [vmem:[#allocation5 + $0x300] sm:$0xff]
    %v694 = vld [vmem:[#allocation5 + $0x308] sm:$0xff]
    %v695 = vld [vmem:[#allocation5 + $0x310] sm:$0xff]
    %v696 = vld [vmem:[#allocation5 + $0x318] sm:$0xff]
    %v697 = vld [vmem:[#allocation5 + $0x320] sm:$0xff]
    %v698 = vld [vmem:[#allocation5 + $0x328] sm:$0xff]
    %v699 = vld [vmem:[#allocation5 + $0x330] sm:$0xff]
    %v700 = vld [vmem:[#allocation5 + $0x338] sm:$0xff]
    %v701 = vld [vmem:[#allocation5 + $0x340] sm:$0xff]
    %v702 = vld [vmem:[#allocation5 + $0x348] sm:$0xff]
    %v703 = vld [vmem:[#allocation5 + $0x350] sm:$0xff]
    %v704 = vld [vmem:[#allocation5 + $0x358] sm:$0xff]
    %v705 = vld [vmem:[#allocation5 + $0x360] sm:$0xff]
    %v706 = vld [vmem:[#allocation5 + $0x368] sm:$0xff]
    %v707 = vld [vmem:[#allocation5 + $0x370] sm:$0xff]
    %v708 = vld [vmem:[#allocation5 + $0x378] sm:$0xff]
    %v709 = vld [vmem:[#allocation5 + $0x380] sm:$0xff]
    %v710 = vld [vmem:[#allocation5 + $0x388] sm:$0xff]
    %v711 = vld [vmem:[#allocation5 + $0x390] sm:$0xff]
    %v712 = vld [vmem:[#allocation5 + $0x398] sm:$0xff]
    %v713 = vld [vmem:[#allocation5 + $0x3a0] sm:$0xff]
    %v714 = vld [vmem:[#allocation5 + $0x3a8] sm:$0xff]
    %v715 = vld [vmem:[#allocation5 + $0x3b0] sm:$0xff]
    %v716 = vld [vmem:[#allocation5 + $0x3b8] sm:$0xff]
    %v717 = vld [vmem:[#allocation5 + $0x3c0] sm:$0xff]
    %v718 = vld [vmem:[#allocation5 + $0x3c8] sm:$0xff]
    %v719 = vld [vmem:[#allocation5 + $0x3d0] sm:$0xff]
    %v720 = vld [vmem:[#allocation5 + $0x3d8] sm:$0xff]
    %v721 = vld [vmem:[#allocation5 + $0x3e0] sm:$0xff]
    %v722 = vld [vmem:[#allocation5 + $0x3e8] sm:$0xff]
    %v723 = vld [vmem:[#allocation5 + $0x3f0] sm:$0xff]
    %v724 = vld [vmem:[#allocation5 + $0x3f8] sm:$0xff]
    %v725 = vld [vmem:[#allocation5 + $0x400] sm:$0xff]
    %v726 = vld [vmem:[#allocation5 + $0x408] sm:$0xff]
    %v727 = vld [vmem:[#allocation5 + $0x410] sm:$0xff]
    %v728 = vld [vmem:[#allocation5 + $0x418] sm:$0xff]
    %v729 = vld [vmem:[#allocation5 + $0x420] sm:$0xff]
    %v730 = vld [vmem:[#allocation5 + $0x428] sm:$0xff]
    %v731 = vld [vmem:[#allocation5 + $0x430] sm:$0xff]
    %v732 = vld [vmem:[#allocation5 + $0x438] sm:$0xff]
    %v733 = vld [vmem:[#allocation5 + $0x440] sm:$0xff]
    %v734 = vld [vmem:[#allocation5 + $0x448] sm:$0xff]
    %v735 = vld [vmem:[#allocation5 + $0x450] sm:$0xff]
    %v736 = vld [vmem:[#allocation5 + $0x458] sm:$0xff]
    %v737 = vld [vmem:[#allocation5 + $0x460] sm:$0xff]
    %v738 = vld [vmem:[#allocation5 + $0x468] sm:$0xff]
    %v739 = vld [vmem:[#allocation5 + $0x470] sm:$0xff]
    %v740 = vld [vmem:[#allocation5 + $0x478] sm:$0xff]
    %v741 = vld [vmem:[#allocation5 + $0x480] sm:$0xff]
    %v742 = vld [vmem:[#allocation5 + $0x488] sm:$0xff]
    %v743 = vld [vmem:[#allocation5 + $0x490] sm:$0xff]
    %v744 = vld [vmem:[#allocation5 + $0x498] sm:$0xff]
    %v745 = vld [vmem:[#allocation5 + $0x4a0] sm:$0xff]
    %v746 = vld [vmem:[#allocation5 + $0x4a8] sm:$0xff]
    %v747 = vld [vmem:[#allocation5 + $0x4b0] sm:$0xff]
    %v748 = vld [vmem:[#allocation5 + $0x4b8] sm:$0xff]
    %v749 = vld [vmem:[#allocation5 + $0x4c0] sm:$0xff]
    %v750 = vld [vmem:[#allocation5 + $0x4c8] sm:$0xff]
    %v751 = vld [vmem:[#allocation5 + $0x4d0] sm:$0xff]
    %v752 = vld [vmem:[#allocation5 + $0x4d8] sm:$0xff]
    %v753 = vld [vmem:[#allocation5 + $0x4e0] sm:$0xff]
    %v754 = vld [vmem:[#allocation5 + $0x4e8] sm:$0xff]
    %v755 = vld [vmem:[#allocation5 + $0x4f0] sm:$0xff]
    %v756 = vld [vmem:[#allocation5 + $0x4f8] sm:$0xff]
    %v757 = vld [vmem:[#allocation5 + $0x500] sm:$0xff]
    %v758 = vld [vmem:[#allocation5 + $0x508] sm:$0xff]
    %v759 = vld [vmem:[#allocation5 + $0x510] sm:$0xff]
    %v760 = vld [vmem:[#allocation5 + $0x518] sm:$0xff]
    %v761 = vld [vmem:[#allocation5 + $0x520] sm:$0xff]
    %v762 = vld [vmem:[#allocation5 + $0x528] sm:$0xff]
    %v763 = vld [vmem:[#allocation5 + $0x530] sm:$0xff]
    %v764 = vld [vmem:[#allocation5 + $0x538] sm:$0xff]
    %v765 = vld [vmem:[#allocation5 + $0x540] sm:$0xff]
    %v766 = vld [vmem:[#allocation5 + $0x548] sm:$0xff]
    %v767 = vld [vmem:[#allocation5 + $0x550] sm:$0xff]
    %v768 = vld [vmem:[#allocation5 + $0x558] sm:$0xff]
    %v769 = vld [vmem:[#allocation5 + $0x560] sm:$0xff]
    %v770 = vld [vmem:[#allocation5 + $0x568] sm:$0xff]
    %v771 = vld [vmem:[#allocation5 + $0x570] sm:$0xff]
    %v772 = vld [vmem:[#allocation5 + $0x578] sm:$0xff]
    %v773 = vld [vmem:[#allocation5 + $0x580] sm:$0xff]
    %v774 = vld [vmem:[#allocation5 + $0x588] sm:$0xff]
    %v775 = vld [vmem:[#allocation5 + $0x590] sm:$0xff]
    %v776 = vld [vmem:[#allocation5 + $0x598] sm:$0xff]
    %v777 = vld [vmem:[#allocation5 + $0x5a0] sm:$0xff]
    %v778 = vld [vmem:[#allocation5 + $0x5a8] sm:$0xff]
    %v779 = vld [vmem:[#allocation5 + $0x5b0] sm:$0xff]
    %v780 = vld [vmem:[#allocation5 + $0x5b8] sm:$0xff]
    %v781 = vld [vmem:[#allocation5 + $0x5c0] sm:$0xff]
    %v782 = vld [vmem:[#allocation5 + $0x5c8] sm:$0xff]
    %v783 = vld [vmem:[#allocation5 + $0x5d0] sm:$0xff]
    %v784 = vld [vmem:[#allocation5 + $0x5d8] sm:$0xff]
    %v785 = vld [vmem:[#allocation5 + $0x5e0] sm:$0xff]
    %v786 = vld [vmem:[#allocation5 + $0x5e8] sm:$0xff]
    %v787 = vld [vmem:[#allocation5 + $0x5f0] sm:$0xff]
    %v788 = vld [vmem:[#allocation5 + $0x5f8] sm:$0xff]
    %v789 = vld [vmem:[#allocation5 + $0x600] sm:$0xff]
    %v790 = vld [vmem:[#allocation5 + $0x608] sm:$0xff]
    %v791 = vld [vmem:[#allocation5 + $0x610] sm:$0xff]
    %v792 = vld [vmem:[#allocation5 + $0x618] sm:$0xff]
    %v793 = vld [vmem:[#allocation5 + $0x620] sm:$0xff]
    %v794 = vld [vmem:[#allocation5 + $0x628] sm:$0xff]
    %v795 = vld [vmem:[#allocation5 + $0x630] sm:$0xff]
    %v796 = vld [vmem:[#allocation5 + $0x638] sm:$0xff]
    %v797 = vld [vmem:[#allocation5 + $0x640] sm:$0xff]
    %v798 = vld [vmem:[#allocation5 + $0x648] sm:$0xff]
    %v799 = vld [vmem:[#allocation5 + $0x650] sm:$0xff]
    %v800 = vld [vmem:[#allocation5 + $0x658] sm:$0xff]
    %v801 = vld [vmem:[#allocation5 + $0x660] sm:$0xff]
    %v802 = vld [vmem:[#allocation5 + $0x668] sm:$0xff]
    %v803 = vld [vmem:[#allocation5 + $0x670] sm:$0xff]
    %v804 = vld [vmem:[#allocation5 + $0x678] sm:$0xff]
    %v805 = vld [vmem:[#allocation5 + $0x680] sm:$0xff]
    %v806 = vld [vmem:[#allocation5 + $0x688] sm:$0xff]
    %v807 = vld [vmem:[#allocation5 + $0x690] sm:$0xff]
    %v808 = vld [vmem:[#allocation5 + $0x698] sm:$0xff]
    %v809 = vld [vmem:[#allocation5 + $0x6a0] sm:$0xff]
    %v810 = vld [vmem:[#allocation5 + $0x6a8] sm:$0xff]
    %v811 = vld [vmem:[#allocation5 + $0x6b0] sm:$0xff]
    %v812 = vld [vmem:[#allocation5 + $0x6b8] sm:$0xff]
    %v813 = vld [vmem:[#allocation5 + $0x6c0] sm:$0xff]
    %v814 = vld [vmem:[#allocation5 + $0x6c8] sm:$0xff]
    %v815 = vld [vmem:[#allocation5 + $0x6d0] sm:$0xff]
    %v816 = vld [vmem:[#allocation5 + $0x6d8] sm:$0xff]
    %v817 = vld [vmem:[#allocation5 + $0x6e0] sm:$0xff]
    %v818 = vld [vmem:[#allocation5 + $0x6e8] sm:$0xff]
    %v819 = vld [vmem:[#allocation5 + $0x6f0] sm:$0xff]
    %v820 = vld [vmem:[#allocation5 + $0x6f8] sm:$0xff]
    %v821 = vld [vmem:[#allocation5 + $0x700] sm:$0xff]
    %v822 = vld [vmem:[#allocation5 + $0x708] sm:$0xff]
    %v823 = vld [vmem:[#allocation5 + $0x710] sm:$0xff]
    %v824 = vld [vmem:[#allocation5 + $0x718] sm:$0xff]
    %v825 = vld [vmem:[#allocation5 + $0x720] sm:$0xff]
    %v826 = vld [vmem:[#allocation5 + $0x728] sm:$0xff]
    %v827 = vld [vmem:[#allocation5 + $0x730] sm:$0xff]
    %v828 = vld [vmem:[#allocation5 + $0x738] sm:$0xff]
    %v829 = vld [vmem:[#allocation5 + $0x740] sm:$0xff]
    %v830 = vld [vmem:[#allocation5 + $0x748] sm:$0xff]
    %v831 = vld [vmem:[#allocation5 + $0x750] sm:$0xff]
    %v832 = vld [vmem:[#allocation5 + $0x758] sm:$0xff]
    %v833 = vld [vmem:[#allocation5 + $0x760] sm:$0xff]
    %v834 = vld [vmem:[#allocation5 + $0x768] sm:$0xff]
    %v835 = vld [vmem:[#allocation5 + $0x770] sm:$0xff]
    %v836 = vld [vmem:[#allocation5 + $0x778] sm:$0xff]
    %v837 = vld [vmem:[#allocation5 + $0x780] sm:$0xff]
    %v838 = vld [vmem:[#allocation5 + $0x788] sm:$0xff]
    %v839 = vld [vmem:[#allocation5 + $0x790] sm:$0xff]
    %v840 = vld [vmem:[#allocation5 + $0x798] sm:$0xff]
    %v841 = vld [vmem:[#allocation5 + $0x7a0] sm:$0xff]
    %v842 = vld [vmem:[#allocation5 + $0x7a8] sm:$0xff]
    %v843 = vld [vmem:[#allocation5 + $0x7b0] sm:$0xff]
    %v844 = vld [vmem:[#allocation5 + $0x7b8] sm:$0xff]
    %v845 = vld [vmem:[#allocation5 + $0x7c0] sm:$0xff]
    %v846 = vld [vmem:[#allocation5 + $0x7c8] sm:$0xff]
    %v847 = vld [vmem:[#allocation5 + $0x7d0] sm:$0xff]
    %v848 = vld [vmem:[#allocation5 + $0x7d8] sm:$0xff]
    %v849 = vld [vmem:[#allocation5 + $0x7e0] sm:$0xff]
    %v850 = vld [vmem:[#allocation5 + $0x7e8] sm:$0xff]
    %v851 = vld [vmem:[#allocation5 + $0x7f0] sm:$0xff]
    %v852 = vld [vmem:[#allocation5 + $0x7f8] sm:$0xff]
    %v853 = vld [vmem:[#allocation5 + $0x800] sm:$0xff]
    %v854 = vld [vmem:[#allocation5 + $0x808] sm:$0xff]
    %v855 = vld [vmem:[#allocation5 + $0x810] sm:$0xff]
    %v856 = vld [vmem:[#allocation5 + $0x818] sm:$0xff]
    %v857 = vld [vmem:[#allocation5 + $0x820] sm:$0xff]
    %v858 = vld [vmem:[#allocation5 + $0x828] sm:$0xff]
    %v859 = vld [vmem:[#allocation5 + $0x830] sm:$0xff]
    %v860 = vld [vmem:[#allocation5 + $0x838] sm:$0xff]
    %v861 = vld [vmem:[#allocation5 + $0x840] sm:$0xff]
    %v862 = vld [vmem:[#allocation5 + $0x848] sm:$0xff]
    %v863 = vld [vmem:[#allocation5 + $0x850] sm:$0xff]
    %v864 = vld [vmem:[#allocation5 + $0x858] sm:$0xff]
    %v865 = vld [vmem:[#allocation5 + $0x860] sm:$0xff]
    %v866 = vld [vmem:[#allocation5 + $0x868] sm:$0xff]
    %v867 = vld [vmem:[#allocation5 + $0x870] sm:$0xff]
    %v868 = vld [vmem:[#allocation5 + $0x878] sm:$0xff]
    %v869 = vld [vmem:[#allocation5 + $0x880] sm:$0xff]
    %v870 = vld [vmem:[#allocation5 + $0x888] sm:$0xff]
    %v871 = vld [vmem:[#allocation5 + $0x890] sm:$0xff]
    %v872 = vld [vmem:[#allocation5 + $0x898] sm:$0xff]
    %v873 = vld [vmem:[#allocation5 + $0x8a0] sm:$0xff]
    %v874 = vld [vmem:[#allocation5 + $0x8a8] sm:$0xff]
    %v875 = vld [vmem:[#allocation5 + $0x8b0] sm:$0xff]
    %v876 = vld [vmem:[#allocation5 + $0x8b8] sm:$0xff]
    %v877 = vld [vmem:[#allocation5 + $0x8c0] sm:$0xff]
    %v878 = vld [vmem:[#allocation5 + $0x8c8] sm:$0xff]
    %v879 = vld [vmem:[#allocation5 + $0x8d0] sm:$0xff]
    %v880 = vld [vmem:[#allocation5 + $0x8d8] sm:$0xff]
    %v881 = vld [vmem:[#allocation5 + $0x8e0] sm:$0xff]
    %v882 = vld [vmem:[#allocation5 + $0x8e8] sm:$0xff]
    %v883 = vld [vmem:[#allocation5 + $0x8f0] sm:$0xff]
    %v884 = vld [vmem:[#allocation5 + $0x8f8] sm:$0xff]
    %v885 = vld [vmem:[#allocation5 + $0x900] sm:$0xff]
    %v886 = vld [vmem:[#allocation5 + $0x908] sm:$0xff]
    %v887 = vld [vmem:[#allocation5 + $0x910] sm:$0xff]
    %v888 = vld [vmem:[#allocation5 + $0x918] sm:$0xff]
    %v889 = vld [vmem:[#allocation5 + $0x920] sm:$0xff]
    %v890 = vld [vmem:[#allocation5 + $0x928] sm:$0xff]
    %v891 = vld [vmem:[#allocation5 + $0x930] sm:$0xff]
    %v892 = vld [vmem:[#allocation5 + $0x938] sm:$0xff]
    %v893 = vld [vmem:[#allocation5 + $0x940] sm:$0xff]
    %v894 = vld [vmem:[#allocation5 + $0x948] sm:$0xff]
    %v895 = vld [vmem:[#allocation5 + $0x950] sm:$0xff]
    %v896 = vld [vmem:[#allocation5 + $0x958] sm:$0xff]
    %v897 = vld [vmem:[#allocation5 + $0x960] sm:$0xff]
    %v898 = vld [vmem:[#allocation5 + $0x968] sm:$0xff]
    %v899 = vld [vmem:[#allocation5 + $0x970] sm:$0xff]
    %v900 = vld [vmem:[#allocation5 + $0x978] sm:$0xff]
    %v901 = vld [vmem:[#allocation5 + $0x980] sm:$0xff]
    %v902 = vld [vmem:[#allocation5 + $0x988] sm:$0xff]
    %v903 = vld [vmem:[#allocation5 + $0x990] sm:$0xff]
    %v904 = vld [vmem:[#allocation5 + $0x998] sm:$0xff]
    %v905 = vld [vmem:[#allocation5 + $0x9a0] sm:$0xff]
    %v906 = vld [vmem:[#allocation5 + $0x9a8] sm:$0xff]
    %v907 = vld [vmem:[#allocation5 + $0x9b0] sm:$0xff]
    %v908 = vld [vmem:[#allocation5 + $0x9b8] sm:$0xff]
    %v909 = vld [vmem:[#allocation5 + $0x9c0] sm:$0xff]
    %v910 = vld [vmem:[#allocation5 + $0x9c8] sm:$0xff]
    %v911 = vld [vmem:[#allocation5 + $0x9d0] sm:$0xff]
    %v912 = vld [vmem:[#allocation5 + $0x9d8] sm:$0xff]
    %v913 = vld [vmem:[#allocation5 + $0x9e0] sm:$0xff]
    %v914 = vld [vmem:[#allocation5 + $0x9e8] sm:$0xff]
    %v915 = vld [vmem:[#allocation5 + $0x9f0] sm:$0xff]
    %v916 = vld [vmem:[#allocation5 + $0x9f8] sm:$0xff]
    %v917 = vld [vmem:[#allocation5 + $0xa00] sm:$0xff]
    %v918 = vld [vmem:[#allocation5 + $0xa08] sm:$0xff]
    %v919 = vld [vmem:[#allocation5 + $0xa10] sm:$0xff]
    %v920 = vld [vmem:[#allocation5 + $0xa18] sm:$0xff]
    %v921 = vld [vmem:[#allocation5 + $0xa20] sm:$0xff]
    %v922 = vld [vmem:[#allocation5 + $0xa28] sm:$0xff]
    %v923 = vld [vmem:[#allocation5 + $0xa30] sm:$0xff]
    %v924 = vld [vmem:[#allocation5 + $0xa38] sm:$0xff]
    %v925 = vld [vmem:[#allocation5 + $0xa40] sm:$0xff]
    %v926 = vld [vmem:[#allocation5 + $0xa48] sm:$0xff]
    %v927 = vld [vmem:[#allocation5 + $0xa50] sm:$0xff]
    %v928 = vld [vmem:[#allocation5 + $0xa58] sm:$0xff]
    %v929 = vld [vmem:[#allocation5 + $0xa60] sm:$0xff]
    %v930 = vld [vmem:[#allocation5 + $0xa68] sm:$0xff]
    %v931 = vld [vmem:[#allocation5 + $0xa70] sm:$0xff]
    %v932 = vld [vmem:[#allocation5 + $0xa78] sm:$0xff]
    %v933 = vld [vmem:[#allocation5 + $0xa80] sm:$0xff]
    %v934 = vld [vmem:[#allocation5 + $0xa88] sm:$0xff]
    %v935 = vld [vmem:[#allocation5 + $0xa90] sm:$0xff]
    %v936 = vld [vmem:[#allocation5 + $0xa98] sm:$0xff]
    %v937 = vld [vmem:[#allocation5 + $0xaa0] sm:$0xff]
    %v938 = vld [vmem:[#allocation5 + $0xaa8] sm:$0xff]
    %v939 = vld [vmem:[#allocation5 + $0xab0] sm:$0xff]
    %v940 = vld [vmem:[#allocation5 + $0xab8] sm:$0xff]
    %v941 = vld [vmem:[#allocation5 + $0xac0] sm:$0xff]
    %v942 = vld [vmem:[#allocation5 + $0xac8] sm:$0xff]
    %v943 = vld [vmem:[#allocation5 + $0xad0] sm:$0xff]
    %v944 = vld [vmem:[#allocation5 + $0xad8] sm:$0xff]
    %v945 = vld [vmem:[#allocation5 + $0xae0] sm:$0xff]
    %v946 = vld [vmem:[#allocation5 + $0xae8] sm:$0xff]
    %v947 = vld [vmem:[#allocation5 + $0xaf0] sm:$0xff]
    %v948 = vld [vmem:[#allocation5 + $0xaf8] sm:$0xff]
    %v949 = vld [vmem:[#allocation5 + $0xb00] sm:$0xff]
    %v950 = vld [vmem:[#allocation5 + $0xb08] sm:$0xff]
    %v951 = vld [vmem:[#allocation5 + $0xb10] sm:$0xff]
    %v952 = vld [vmem:[#allocation5 + $0xb18] sm:$0xff]
    %v953 = vld [vmem:[#allocation5 + $0xb20] sm:$0xff]
    %v954 = vld [vmem:[#allocation5 + $0xb28] sm:$0xff]
    %v955 = vld [vmem:[#allocation5 + $0xb30] sm:$0xff]
    %v956 = vld [vmem:[#allocation5 + $0xb38] sm:$0xff]
    %v957 = vld [vmem:[#allocation5 + $0xb40] sm:$0xff]
    %v958 = vld [vmem:[#allocation5 + $0xb48] sm:$0xff]
    %v959 = vld [vmem:[#allocation5 + $0xb50] sm:$0xff]
    %v960 = vld [vmem:[#allocation5 + $0xb58] sm:$0xff]
    %v961 = vld [vmem:[#allocation5 + $0xb60] sm:$0xff]
    %v962 = vld [vmem:[#allocation5 + $0xb68] sm:$0xff]
    %v963 = vld [vmem:[#allocation5 + $0xb70] sm:$0xff]
    %v964 = vld [vmem:[#allocation5 + $0xb78] sm:$0xff]
    %v965 = vld [vmem:[#allocation5 + $0xb80] sm:$0xff]
    %v966 = vld [vmem:[#allocation5 + $0xb88] sm:$0xff]
    %v967 = vld [vmem:[#allocation5 + $0xb90] sm:$0xff]
    %v968 = vld [vmem:[#allocation5 + $0xb98] sm:$0xff]
    %v969 = vld [vmem:[#allocation5 + $0xba0] sm:$0xff]
    %v970 = vld [vmem:[#allocation5 + $0xba8] sm:$0xff]
    %v971 = vld [vmem:[#allocation5 + $0xbb0] sm:$0xff]
    %v972 = vld [vmem:[#allocation5 + $0xbb8] sm:$0xff]
    %v973 = vld [vmem:[#allocation5 + $0xbc0] sm:$0xff]
    %v974 = vld [vmem:[#allocation5 + $0xbc8] sm:$0xff]
    %v975 = vld [vmem:[#allocation5 + $0xbd0] sm:$0xff]
    %v976 = vld [vmem:[#allocation5 + $0xbd8] sm:$0xff]
    %v977 = vld [vmem:[#allocation5 + $0xbe0] sm:$0xff]
    %v978 = vld [vmem:[#allocation5 + $0xbe8] sm:$0xff]
    %v979 = vld [vmem:[#allocation5 + $0xbf0] sm:$0xff]
    %v980 = vld [vmem:[#allocation5 + $0xbf8] sm:$0xff]
    %v981 = vld [vmem:[#allocation5 + $0xc00] sm:$0xff]
    %v982 = vld [vmem:[#allocation5 + $0xc08] sm:$0xff]
    %v983 = vld [vmem:[#allocation5 + $0xc10] sm:$0xff]
    %v984 = vld [vmem:[#allocation5 + $0xc18] sm:$0xff]
    %v985 = vld [vmem:[#allocation5 + $0xc20] sm:$0xff]
    %v986 = vld [vmem:[#allocation5 + $0xc28] sm:$0xff]
    %v987 = vld [vmem:[#allocation5 + $0xc30] sm:$0xff]
    %v988 = vld [vmem:[#allocation5 + $0xc38] sm:$0xff]
    %v989 = vld [vmem:[#allocation5 + $0xc40] sm:$0xff]
    %v990 = vld [vmem:[#allocation5 + $0xc48] sm:$0xff]
    %v991 = vld [vmem:[#allocation5 + $0xc50] sm:$0xff]
    %v992 = vld [vmem:[#allocation5 + $0xc58] sm:$0xff]
    %v993 = vld [vmem:[#allocation5 + $0xc60] sm:$0xff]
    %v994 = vld [vmem:[#allocation5 + $0xc68] sm:$0xff]
    %v995 = vld [vmem:[#allocation5 + $0xc70] sm:$0xff]
    %v996 = vld [vmem:[#allocation5 + $0xc78] sm:$0xff]
    %v997 = vld [vmem:[#allocation5 + $0xc80] sm:$0xff]
    %v998 = vld [vmem:[#allocation5 + $0xc88] sm:$0xff]
    %v999 = vld [vmem:[#allocation5 + $0xc90] sm:$0xff]
    %v1000 = vld [vmem:[#allocation5 + $0xc98] sm:$0xff]
    %v1001 = vld [vmem:[#allocation5 + $0xca0] sm:$0xff]
    %v1002 = vld [vmem:[#allocation5 + $0xca8] sm:$0xff]
    %v1003 = vld [vmem:[#allocation5 + $0xcb0] sm:$0xff]
    %v1004 = vld [vmem:[#allocation5 + $0xcb8] sm:$0xff]
    %v1005 = vld [vmem:[#allocation5 + $0xcc0] sm:$0xff]
    %v1006 = vld [vmem:[#allocation5 + $0xcc8] sm:$0xff]
    %v1007 = vld [vmem:[#allocation5 + $0xcd0] sm:$0xff]
    %v1008 = vld [vmem:[#allocation5 + $0xcd8] sm:$0xff]
    %v1009 = vld [vmem:[#allocation5 + $0xce0] sm:$0xff]
    %v1010 = vld [vmem:[#allocation5 + $0xce8] sm:$0xff]
    %v1011 = vld [vmem:[#allocation5 + $0xcf0] sm:$0xff]
    %v1012 = vld [vmem:[#allocation5 + $0xcf8] sm:$0xff]
    %v1013 = vld [vmem:[#allocation5 + $0xd00] sm:$0xff]
    %v1014 = vld [vmem:[#allocation5 + $0xd08] sm:$0xff]
    %v1015 = vld [vmem:[#allocation5 + $0xd10] sm:$0xff]
    %v1016 = vld [vmem:[#allocation5 + $0xd18] sm:$0xff]
    %v1017 = vld [vmem:[#allocation5 + $0xd20] sm:$0xff]
    %v1018 = vld [vmem:[#allocation5 + $0xd28] sm:$0xff]
    %v1019 = vld [vmem:[#allocation5 + $0xd30] sm:$0xff]
    %v1020 = vld [vmem:[#allocation5 + $0xd38] sm:$0xff]
    %v1021 = vld [vmem:[#allocation5 + $0xd40] sm:$0xff]
    %v1022 = vld [vmem:[#allocation5 + $0xd48] sm:$0xff]
    %v1023 = vld [vmem:[#allocation5 + $0xd50] sm:$0xff]
    %v1024 = vld [vmem:[#allocation5 + $0xd58] sm:$0xff]
    %v1025 = vld [vmem:[#allocation5 + $0xd60] sm:$0xff]
    %v1026 = vld [vmem:[#allocation5 + $0xd68] sm:$0xff]
    %v1027 = vld [vmem:[#allocation5 + $0xd70] sm:$0xff]
    %v1028 = vld [vmem:[#allocation5 + $0xd78] sm:$0xff]
    %v1029 = vld [vmem:[#allocation5 + $0xd80] sm:$0xff]
    %v1030 = vld [vmem:[#allocation5 + $0xd88] sm:$0xff]
    %v1031 = vld [vmem:[#allocation5 + $0xd90] sm:$0xff]
    %v1032 = vld [vmem:[#allocation5 + $0xd98] sm:$0xff]
    %v1033 = vld [vmem:[#allocation5 + $0xda0] sm:$0xff]
    %v1034 = vld [vmem:[#allocation5 + $0xda8] sm:$0xff]
    %v1035 = vld [vmem:[#allocation5 + $0xdb0] sm:$0xff]
    %v1036 = vld [vmem:[#allocation5 + $0xdb8] sm:$0xff]
    %v1037 = vld [vmem:[#allocation5 + $0xdc0] sm:$0xff]
    %v1038 = vld [vmem:[#allocation5 + $0xdc8] sm:$0xff]
    %v1039 = vld [vmem:[#allocation5 + $0xdd0] sm:$0xff]
    %v1040 = vld [vmem:[#allocation5 + $0xdd8] sm:$0xff]
    %v1041 = vld [vmem:[#allocation5 + $0xde0] sm:$0xff]
    %v1042 = vld [vmem:[#allocation5 + $0xde8] sm:$0xff]
    %v1043 = vld [vmem:[#allocation5 + $0xdf0] sm:$0xff]
    %v1044 = vld [vmem:[#allocation5 + $0xdf8] sm:$0xff]
    %v1045 = vld [vmem:[#allocation5 + $0xe00] sm:$0xff]
    %v1046 = vld [vmem:[#allocation5 + $0xe08] sm:$0xff]
    %v1047 = vld [vmem:[#allocation5 + $0xe10] sm:$0xff]
    %v1048 = vld [vmem:[#allocation5 + $0xe18] sm:$0xff]
    %v1049 = vld [vmem:[#allocation5 + $0xe20] sm:$0xff]
    %v1050 = vld [vmem:[#allocation5 + $0xe28] sm:$0xff]
    %v1051 = vld [vmem:[#allocation5 + $0xe30] sm:$0xff]
    %v1052 = vld [vmem:[#allocation5 + $0xe38] sm:$0xff]
    %v1053 = vld [vmem:[#allocation5 + $0xe40] sm:$0xff]
    %v1054 = vld [vmem:[#allocation5 + $0xe48] sm:$0xff]
    %v1055 = vld [vmem:[#allocation5 + $0xe50] sm:$0xff]
    %v1056 = vld [vmem:[#allocation5 + $0xe58] sm:$0xff]
    %v1057 = vld [vmem:[#allocation5 + $0xe60] sm:$0xff]
    %v1058 = vld [vmem:[#allocation5 + $0xe68] sm:$0xff]
    %v1059 = vld [vmem:[#allocation5 + $0xe70] sm:$0xff]
    %v1060 = vld [vmem:[#allocation5 + $0xe78] sm:$0xff]
    %v1061 = vld [vmem:[#allocation5 + $0xe80] sm:$0xff]
    %v1062 = vld [vmem:[#allocation5 + $0xe88] sm:$0xff]
    %v1063 = vld [vmem:[#allocation5 + $0xe90] sm:$0xff]
    %v1064 = vld [vmem:[#allocation5 + $0xe98] sm:$0xff]
    %v1065 = vld [vmem:[#allocation5 + $0xea0] sm:$0xff]
    %v1066 = vld [vmem:[#allocation5 + $0xea8] sm:$0xff]
    %v1067 = vld [vmem:[#allocation5 + $0xeb0] sm:$0xff]
    %v1068 = vld [vmem:[#allocation5 + $0xeb8] sm:$0xff]
    %v1069 = vld [vmem:[#allocation5 + $0xec0] sm:$0xff]
    %v1070 = vld [vmem:[#allocation5 + $0xec8] sm:$0xff]
    %v1071 = vld [vmem:[#allocation5 + $0xed0] sm:$0xff]
    %v1072 = vld [vmem:[#allocation5 + $0xed8] sm:$0xff]
    %v1073 = vld [vmem:[#allocation5 + $0xee0] sm:$0xff]
    %v1074 = vld [vmem:[#allocation5 + $0xee8] sm:$0xff]
    %v1075 = vld [vmem:[#allocation5 + $0xef0] sm:$0xff]
    %v1076 = vld [vmem:[#allocation5 + $0xef8] sm:$0xff]
    %v1077 = vld [vmem:[#allocation5 + $0xf00] sm:$0xff]
    %v1078 = vld [vmem:[#allocation5 + $0xf08] sm:$0xff]
    %v1079 = vld [vmem:[#allocation5 + $0xf10] sm:$0xff]
    %v1080 = vld [vmem:[#allocation5 + $0xf18] sm:$0xff]
    %v1081 = vld [vmem:[#allocation5 + $0xf20] sm:$0xff]
    %v1082 = vld [vmem:[#allocation5 + $0xf28] sm:$0xff]
    %v1083 = vld [vmem:[#allocation5 + $0xf30] sm:$0xff]
    %v1084 = vld [vmem:[#allocation5 + $0xf38] sm:$0xff]
    %v1085 = vld [vmem:[#allocation5 + $0xf40] sm:$0xff]
    %v1086 = vld [vmem:[#allocation5 + $0xf48] sm:$0xff]
    %v1087 = vld [vmem:[#allocation5 + $0xf50] sm:$0xff]
    %v1088 = vld [vmem:[#allocation5 + $0xf58] sm:$0xff]
    %v1089 = vld [vmem:[#allocation5 + $0xf60] sm:$0xff]
    %v1090 = vld [vmem:[#allocation5 + $0xf68] sm:$0xff]
    %v1091 = vld [vmem:[#allocation5 + $0xf70] sm:$0xff]
    %v1092 = vld [vmem:[#allocation5 + $0xf78] sm:$0xff]
    %v1093 = vld [vmem:[#allocation5 + $0xf80] sm:$0xff]
    %v1094 = vld [vmem:[#allocation5 + $0xf88] sm:$0xff]
    %v1095 = vld [vmem:[#allocation5 + $0xf90] sm:$0xff]
    %v1096 = vld [vmem:[#allocation5 + $0xf98] sm:$0xff]
    %v1097 = vld [vmem:[#allocation5 + $0xfa0] sm:$0xff]
    %v1098 = vld [vmem:[#allocation5 + $0xfa8] sm:$0xff]
    %v1099 = vld [vmem:[#allocation5 + $0xfb0] sm:$0xff]
    %v1100 = vld [vmem:[#allocation5 + $0xfb8] sm:$0xff]
    %v1101 = vld [vmem:[#allocation5 + $0xfc0] sm:$0xff]
    %v1102 = vld [vmem:[#allocation5 + $0xfc8] sm:$0xff]
    %v1103 = vld [vmem:[#allocation5 + $0xfd0] sm:$0xff]
    %v1104 = vld [vmem:[#allocation5 + $0xfd8] sm:$0xff]
    %v1105 = vld [vmem:[#allocation5 + $0xfe0] sm:$0xff]
    %v1106 = vld [vmem:[#allocation5 + $0xfe8] sm:$0xff]
    %v1107 = vld [vmem:[#allocation5 + $0xff0] sm:$0xff]
    %v1108 = vld [vmem:[#allocation5 + $0xff8] sm:$0xff]
    %v1109 = vld [vmem:[#allocation7] sm:$0xff]
    %v1110 = vld [vmem:[#allocation7 + $0x8] sm:$0xff]
    %v1111 = vld [vmem:[#allocation7 + $0x10] sm:$0xff]
    %v1112 = vld [vmem:[#allocation7 + $0x18] sm:$0xff]
    %v1113 = vld [vmem:[#allocation7 + $0x20] sm:$0xff]
    %v1114 = vld [vmem:[#allocation7 + $0x28] sm:$0xff]
    %v1115 = vld [vmem:[#allocation7 + $0x30] sm:$0xff]
    %v1116 = vld [vmem:[#allocation7 + $0x38] sm:$0xff]
    %v1117 = vld [vmem:[#allocation7 + $0x40] sm:$0xff]
    %v1118 = vld [vmem:[#allocation7 + $0x48] sm:$0xff]
    %v1119 = vld [vmem:[#allocation7 + $0x50] sm:$0xff]
    %v1120 = vld [vmem:[#allocation7 + $0x58] sm:$0xff]
    %v1121 = vld [vmem:[#allocation7 + $0x60] sm:$0xff]
    %v1122 = vld [vmem:[#allocation7 + $0x68] sm:$0xff]
    %v1123 = vld [vmem:[#allocation7 + $0x70] sm:$0xff]
    %v1124 = vld [vmem:[#allocation7 + $0x78] sm:$0xff]
    %v1125 = vld [vmem:[#allocation7 + $0x80] sm:$0xff]
    %v1126 = vld [vmem:[#allocation7 + $0x88] sm:$0xff]
    %v1127 = vld [vmem:[#allocation7 + $0x90] sm:$0xff]
    %v1128 = vld [vmem:[#allocation7 + $0x98] sm:$0xff]
    %v1129 = vld [vmem:[#allocation7 + $0xa0] sm:$0xff]
    %v1130 = vld [vmem:[#allocation7 + $0xa8] sm:$0xff]
    %v1131 = vld [vmem:[#allocation7 + $0xb0] sm:$0xff]
    %v1132 = vld [vmem:[#allocation7 + $0xb8] sm:$0xff]
    %v1133 = vld [vmem:[#allocation7 + $0xc0] sm:$0xff]
    %v1134 = vld [vmem:[#allocation7 + $0xc8] sm:$0xff]
    %v1135 = vld [vmem:[#allocation7 + $0xd0] sm:$0xff]
    %v1136 = vld [vmem:[#allocation7 + $0xd8] sm:$0xff]
    %v1137 = vld [vmem:[#allocation7 + $0xe0] sm:$0xff]
    %v1138 = vld [vmem:[#allocation7 + $0xe8] sm:$0xff]
    %v1139 = vld [vmem:[#allocation7 + $0xf0] sm:$0xff]
    %v1140 = vld [vmem:[#allocation7 + $0xf8] sm:$0xff]
    %v1141 = vld [vmem:[#allocation7 + $0x100] sm:$0xff]
    %v1142 = vld [vmem:[#allocation7 + $0x108] sm:$0xff]
    %v1143 = vld [vmem:[#allocation7 + $0x110] sm:$0xff]
    %v1144 = vld [vmem:[#allocation7 + $0x118] sm:$0xff]
    %v1145 = vld [vmem:[#allocation7 + $0x120] sm:$0xff]
    %v1146 = vld [vmem:[#allocation7 + $0x128] sm:$0xff]
    %v1147 = vld [vmem:[#allocation7 + $0x130] sm:$0xff]
    %v1148 = vld [vmem:[#allocation7 + $0x138] sm:$0xff]
    %v1149 = vld [vmem:[#allocation7 + $0x140] sm:$0xff]
    %v1150 = vld [vmem:[#allocation7 + $0x148] sm:$0xff]
    %v1151 = vld [vmem:[#allocation7 + $0x150] sm:$0xff]
    %v1152 = vld [vmem:[#allocation7 + $0x158] sm:$0xff]
    %v1153 = vld [vmem:[#allocation7 + $0x160] sm:$0xff]
    %v1154 = vld [vmem:[#allocation7 + $0x168] sm:$0xff]
    %v1155 = vld [vmem:[#allocation7 + $0x170] sm:$0xff]
    %v1156 = vld [vmem:[#allocation7 + $0x178] sm:$0xff]
    %v1157 = vld [vmem:[#allocation7 + $0x180] sm:$0xff]
    %v1158 = vld [vmem:[#allocation7 + $0x188] sm:$0xff]
    %v1159 = vld [vmem:[#allocation7 + $0x190] sm:$0xff]
    %v1160 = vld [vmem:[#allocation7 + $0x198] sm:$0xff]
    %v1161 = vld [vmem:[#allocation7 + $0x1a0] sm:$0xff]
    %v1162 = vld [vmem:[#allocation7 + $0x1a8] sm:$0xff]
    %v1163 = vld [vmem:[#allocation7 + $0x1b0] sm:$0xff]
    %v1164 = vld [vmem:[#allocation7 + $0x1b8] sm:$0xff]
    %v1165 = vld [vmem:[#allocation7 + $0x1c0] sm:$0xff]
    %v1166 = vld [vmem:[#allocation7 + $0x1c8] sm:$0xff]
    %v1167 = vld [vmem:[#allocation7 + $0x1d0] sm:$0xff]
    %v1168 = vld [vmem:[#allocation7 + $0x1d8] sm:$0xff]
    %v1169 = vld [vmem:[#allocation7 + $0x1e0] sm:$0xff]
    %v1170 = vld [vmem:[#allocation7 + $0x1e8] sm:$0xff]
    %v1171 = vld [vmem:[#allocation7 + $0x1f0] sm:$0xff]
    %v1172 = vld [vmem:[#allocation7 + $0x1f8] sm:$0xff]
    %v1173 = vld [vmem:[#allocation7 + $0x200] sm:$0xff]
    %v1174 = vld [vmem:[#allocation7 + $0x208] sm:$0xff]
    %v1175 = vld [vmem:[#allocation7 + $0x210] sm:$0xff]
    %v1176 = vld [vmem:[#allocation7 + $0x218] sm:$0xff]
    %v1177 = vld [vmem:[#allocation7 + $0x220] sm:$0xff]
    %v1178 = vld [vmem:[#allocation7 + $0x228] sm:$0xff]
    %v1179 = vld [vmem:[#allocation7 + $0x230] sm:$0xff]
    %v1180 = vld [vmem:[#allocation7 + $0x238] sm:$0xff]
    %v1181 = vld [vmem:[#allocation7 + $0x240] sm:$0xff]
    %v1182 = vld [vmem:[#allocation7 + $0x248] sm:$0xff]
    %v1183 = vld [vmem:[#allocation7 + $0x250] sm:$0xff]
    %v1184 = vld [vmem:[#allocation7 + $0x258] sm:$0xff]
    %v1185 = vld [vmem:[#allocation7 + $0x260] sm:$0xff]
    %v1186 = vld [vmem:[#allocation7 + $0x268] sm:$0xff]
    %v1187 = vld [vmem:[#allocation7 + $0x270] sm:$0xff]
    %v1188 = vld [vmem:[#allocation7 + $0x278] sm:$0xff]
    %v1189 = vld [vmem:[#allocation7 + $0x280] sm:$0xff]
    %v1190 = vld [vmem:[#allocation7 + $0x288] sm:$0xff]
    %v1191 = vld [vmem:[#allocation7 + $0x290] sm:$0xff]
    %v1192 = vld [vmem:[#allocation7 + $0x298] sm:$0xff]
    %v1193 = vld [vmem:[#allocation7 + $0x2a0] sm:$0xff]
    %v1194 = vld [vmem:[#allocation7 + $0x2a8] sm:$0xff]
    %v1195 = vld [vmem:[#allocation7 + $0x2b0] sm:$0xff]
    %v1196 = vld [vmem:[#allocation7 + $0x2b8] sm:$0xff]
    %v1197 = vld [vmem:[#allocation7 + $0x2c0] sm:$0xff]
    %v1198 = vld [vmem:[#allocation7 + $0x2c8] sm:$0xff]
    %v1199 = vld [vmem:[#allocation7 + $0x2d0] sm:$0xff]
    %v1200 = vld [vmem:[#allocation7 + $0x2d8] sm:$0xff]
    %v1201 = vld [vmem:[#allocation7 + $0x2e0] sm:$0xff]
    %v1202 = vld [vmem:[#allocation7 + $0x2e8] sm:$0xff]
    %v1203 = vld [vmem:[#allocation7 + $0x2f0] sm:$0xff]
    %v1204 = vld [vmem:[#allocation7 + $0x2f8] sm:$0xff]
    %v1205 = vld [vmem:[#allocation7 + $0x300] sm:$0xff]
    %v1206 = vld [vmem:[#allocation7 + $0x308] sm:$0xff]
    %v1207 = vld [vmem:[#allocation7 + $0x310] sm:$0xff]
    %v1208 = vld [vmem:[#allocation7 + $0x318] sm:$0xff]
    %v1209 = vld [vmem:[#allocation7 + $0x320] sm:$0xff]
    %v1210 = vld [vmem:[#allocation7 + $0x328] sm:$0xff]
    %v1211 = vld [vmem:[#allocation7 + $0x330] sm:$0xff]
    %v1212 = vld [vmem:[#allocation7 + $0x338] sm:$0xff]
    %v1213 = vld [vmem:[#allocation7 + $0x340] sm:$0xff]
    %v1214 = vld [vmem:[#allocation7 + $0x348] sm:$0xff]
    %v1215 = vld [vmem:[#allocation7 + $0x350] sm:$0xff]
    %v1216 = vld [vmem:[#allocation7 + $0x358] sm:$0xff]
    %v1217 = vld [vmem:[#allocation7 + $0x360] sm:$0xff]
    %v1218 = vld [vmem:[#allocation7 + $0x368] sm:$0xff]
    %v1219 = vld [vmem:[#allocation7 + $0x370] sm:$0xff]
    %v1220 = vld [vmem:[#allocation7 + $0x378] sm:$0xff]
    %v1221 = vld [vmem:[#allocation7 + $0x380] sm:$0xff]
    %v1222 = vld [vmem:[#allocation7 + $0x388] sm:$0xff]
    %v1223 = vld [vmem:[#allocation7 + $0x390] sm:$0xff]
    %v1224 = vld [vmem:[#allocation7 + $0x398] sm:$0xff]
    %v1225 = vld [vmem:[#allocation7 + $0x3a0] sm:$0xff]
    %v1226 = vld [vmem:[#allocation7 + $0x3a8] sm:$0xff]
    %v1227 = vld [vmem:[#allocation7 + $0x3b0] sm:$0xff]
    %v1228 = vld [vmem:[#allocation7 + $0x3b8] sm:$0xff]
    %v1229 = vld [vmem:[#allocation7 + $0x3c0] sm:$0xff]
    %v1230 = vld [vmem:[#allocation7 + $0x3c8] sm:$0xff]
    %v1231 = vld [vmem:[#allocation7 + $0x3d0] sm:$0xff]
    %v1232 = vld [vmem:[#allocation7 + $0x3d8] sm:$0xff]
    %v1233 = vld [vmem:[#allocation7 + $0x3e0] sm:$0xff]
    %v1234 = vld [vmem:[#allocation7 + $0x3e8] sm:$0xff]
    %v1235 = vld [vmem:[#allocation7 + $0x3f0] sm:$0xff]
    %v1236 = vld [vmem:[#allocation7 + $0x3f8] sm:$0xff]
    %v1237 = vld [vmem:[#allocation7 + $0x400] sm:$0xff]
    %v1238 = vld [vmem:[#allocation7 + $0x408] sm:$0xff]
    %v1239 = vld [vmem:[#allocation7 + $0x410] sm:$0xff]
    %v1240 = vld [vmem:[#allocation7 + $0x418] sm:$0xff]
    %v1241 = vld [vmem:[#allocation7 + $0x420] sm:$0xff]
    %v1242 = vld [vmem:[#allocation7 + $0x428] sm:$0xff]
    %v1243 = vld [vmem:[#allocation7 + $0x430] sm:$0xff]
    %v1244 = vld [vmem:[#allocation7 + $0x438] sm:$0xff]
    %v1245 = vld [vmem:[#allocation7 + $0x440] sm:$0xff]
    %v1246 = vld [vmem:[#allocation7 + $0x448] sm:$0xff]
    %v1247 = vld [vmem:[#allocation7 + $0x450] sm:$0xff]
    %v1248 = vld [vmem:[#allocation7 + $0x458] sm:$0xff]
    %v1249 = vld [vmem:[#allocation7 + $0x460] sm:$0xff]
    %v1250 = vld [vmem:[#allocation7 + $0x468] sm:$0xff]
    %v1251 = vld [vmem:[#allocation7 + $0x470] sm:$0xff]
    %v1252 = vld [vmem:[#allocation7 + $0x478] sm:$0xff]
    %v1253 = vld [vmem:[#allocation7 + $0x480] sm:$0xff]
    %v1254 = vld [vmem:[#allocation7 + $0x488] sm:$0xff]
    %v1255 = vld [vmem:[#allocation7 + $0x490] sm:$0xff]
    %v1256 = vld [vmem:[#allocation7 + $0x498] sm:$0xff]
    %v1257 = vld [vmem:[#allocation7 + $0x4a0] sm:$0xff]
    %v1258 = vld [vmem:[#allocation7 + $0x4a8] sm:$0xff]
    %v1259 = vld [vmem:[#allocation7 + $0x4b0] sm:$0xff]
    %v1260 = vld [vmem:[#allocation7 + $0x4b8] sm:$0xff]
    %v1261 = vld [vmem:[#allocation7 + $0x4c0] sm:$0xff]
    %v1262 = vld [vmem:[#allocation7 + $0x4c8] sm:$0xff]
    %v1263 = vld [vmem:[#allocation7 + $0x4d0] sm:$0xff]
    %v1264 = vld [vmem:[#allocation7 + $0x4d8] sm:$0xff]
    %v1265 = vld [vmem:[#allocation7 + $0x4e0] sm:$0xff]
    %v1266 = vld [vmem:[#allocation7 + $0x4e8] sm:$0xff]
    %v1267 = vld [vmem:[#allocation7 + $0x4f0] sm:$0xff]
    %v1268 = vld [vmem:[#allocation7 + $0x4f8] sm:$0xff]
    %v1269 = vld [vmem:[#allocation7 + $0x500] sm:$0xff]
    %v1270 = vld [vmem:[#allocation7 + $0x508] sm:$0xff]
    %v1271 = vld [vmem:[#allocation7 + $0x510] sm:$0xff]
    %v1272 = vld [vmem:[#allocation7 + $0x518] sm:$0xff]
    %v1273 = vld [vmem:[#allocation7 + $0x520] sm:$0xff]
    %v1274 = vld [vmem:[#allocation7 + $0x528] sm:$0xff]
    %v1275 = vld [vmem:[#allocation7 + $0x530] sm:$0xff]
    %v1276 = vld [vmem:[#allocation7 + $0x538] sm:$0xff]
    %v1277 = vld [vmem:[#allocation7 + $0x540] sm:$0xff]
    %v1278 = vld [vmem:[#allocation7 + $0x548] sm:$0xff]
    %v1279 = vld [vmem:[#allocation7 + $0x550] sm:$0xff]
    %v1280 = vld [vmem:[#allocation7 + $0x558] sm:$0xff]
    %v1281 = vld [vmem:[#allocation7 + $0x560] sm:$0xff]
    %v1282 = vld [vmem:[#allocation7 + $0x568] sm:$0xff]
    %v1283 = vld [vmem:[#allocation7 + $0x570] sm:$0xff]
    %v1284 = vld [vmem:[#allocation7 + $0x578] sm:$0xff]
    %v1285 = vld [vmem:[#allocation7 + $0x580] sm:$0xff]
    %v1286 = vld [vmem:[#allocation7 + $0x588] sm:$0xff]
    %v1287 = vld [vmem:[#allocation7 + $0x590] sm:$0xff]
    %v1288 = vld [vmem:[#allocation7 + $0x598] sm:$0xff]
    %v1289 = vld [vmem:[#allocation7 + $0x5a0] sm:$0xff]
    %v1290 = vld [vmem:[#allocation7 + $0x5a8] sm:$0xff]
    %v1291 = vld [vmem:[#allocation7 + $0x5b0] sm:$0xff]
    %v1292 = vld [vmem:[#allocation7 + $0x5b8] sm:$0xff]
    %v1293 = vld [vmem:[#allocation7 + $0x5c0] sm:$0xff]
    %v1294 = vld [vmem:[#allocation7 + $0x5c8] sm:$0xff]
    %v1295 = vld [vmem:[#allocation7 + $0x5d0] sm:$0xff]
    %v1296 = vld [vmem:[#allocation7 + $0x5d8] sm:$0xff]
    %v1297 = vld [vmem:[#allocation7 + $0x5e0] sm:$0xff]
    %v1298 = vld [vmem:[#allocation7 + $0x5e8] sm:$0xff]
    %v1299 = vld [vmem:[#allocation7 + $0x5f0] sm:$0xff]
    %v1300 = vld [vmem:[#allocation7 + $0x5f8] sm:$0xff]
    %v1301 = vld [vmem:[#allocation7 + $0x600] sm:$0xff]
    %v1302 = vld [vmem:[#allocation7 + $0x608] sm:$0xff]
    %v1303 = vld [vmem:[#allocation7 + $0x610] sm:$0xff]
    %v1304 = vld [vmem:[#allocation7 + $0x618] sm:$0xff]
    %v1305 = vld [vmem:[#allocation7 + $0x620] sm:$0xff]
    %v1306 = vld [vmem:[#allocation7 + $0x628] sm:$0xff]
    %v1307 = vld [vmem:[#allocation7 + $0x630] sm:$0xff]
    %v1308 = vld [vmem:[#allocation7 + $0x638] sm:$0xff]
    %v1309 = vld [vmem:[#allocation7 + $0x640] sm:$0xff]
    %v1310 = vld [vmem:[#allocation7 + $0x648] sm:$0xff]
    %v1311 = vld [vmem:[#allocation7 + $0x650] sm:$0xff]
    %v1312 = vld [vmem:[#allocation7 + $0x658] sm:$0xff]
    %v1313 = vld [vmem:[#allocation7 + $0x660] sm:$0xff]
    %v1314 = vld [vmem:[#allocation7 + $0x668] sm:$0xff]
    %v1315 = vld [vmem:[#allocation7 + $0x670] sm:$0xff]
    %v1316 = vld [vmem:[#allocation7 + $0x678] sm:$0xff]
    %v1317 = vld [vmem:[#allocation7 + $0x680] sm:$0xff]
    %v1318 = vld [vmem:[#allocation7 + $0x688] sm:$0xff]
    %v1319 = vld [vmem:[#allocation7 + $0x690] sm:$0xff]
    %v1320 = vld [vmem:[#allocation7 + $0x698] sm:$0xff]
    %v1321 = vld [vmem:[#allocation7 + $0x6a0] sm:$0xff]
    %v1322 = vld [vmem:[#allocation7 + $0x6a8] sm:$0xff]
    %v1323 = vld [vmem:[#allocation7 + $0x6b0] sm:$0xff]
    %v1324 = vld [vmem:[#allocation7 + $0x6b8] sm:$0xff]
    %v1325 = vld [vmem:[#allocation7 + $0x6c0] sm:$0xff]
    %v1326 = vld [vmem:[#allocation7 + $0x6c8] sm:$0xff]
    %v1327 = vld [vmem:[#allocation7 + $0x6d0] sm:$0xff]
    %v1328 = vld [vmem:[#allocation7 + $0x6d8] sm:$0xff]
    %v1329 = vld [vmem:[#allocation7 + $0x6e0] sm:$0xff]
    %v1330 = vld [vmem:[#allocation7 + $0x6e8] sm:$0xff]
    %v1331 = vld [vmem:[#allocation7 + $0x6f0] sm:$0xff]
    %v1332 = vld [vmem:[#allocation7 + $0x6f8] sm:$0xff]
    %v1333 = vld [vmem:[#allocation7 + $0x700] sm:$0xff]
    %v1334 = vld [vmem:[#allocation7 + $0x708] sm:$0xff]
    %v1335 = vld [vmem:[#allocation7 + $0x710] sm:$0xff]
    %v1336 = vld [vmem:[#allocation7 + $0x718] sm:$0xff]
    %v1337 = vld [vmem:[#allocation7 + $0x720] sm:$0xff]
    %v1338 = vld [vmem:[#allocation7 + $0x728] sm:$0xff]
    %v1339 = vld [vmem:[#allocation7 + $0x730] sm:$0xff]
    %v1340 = vld [vmem:[#allocation7 + $0x738] sm:$0xff]
    %v1341 = vld [vmem:[#allocation7 + $0x740] sm:$0xff]
    %v1342 = vld [vmem:[#allocation7 + $0x748] sm:$0xff]
    %v1343 = vld [vmem:[#allocation7 + $0x750] sm:$0xff]
    %v1344 = vld [vmem:[#allocation7 + $0x758] sm:$0xff]
    %v1345 = vld [vmem:[#allocation7 + $0x760] sm:$0xff]
    %v1346 = vld [vmem:[#allocation7 + $0x768] sm:$0xff]
    %v1347 = vld [vmem:[#allocation7 + $0x770] sm:$0xff]
    %v1348 = vld [vmem:[#allocation7 + $0x778] sm:$0xff]
    %v1349 = vld [vmem:[#allocation7 + $0x780] sm:$0xff]
    %v1350 = vld [vmem:[#allocation7 + $0x788] sm:$0xff]
    %v1351 = vld [vmem:[#allocation7 + $0x790] sm:$0xff]
    %v1352 = vld [vmem:[#allocation7 + $0x798] sm:$0xff]
    %v1353 = vld [vmem:[#allocation7 + $0x7a0] sm:$0xff]
    %v1354 = vld [vmem:[#allocation7 + $0x7a8] sm:$0xff]
    %v1355 = vld [vmem:[#allocation7 + $0x7b0] sm:$0xff]
    %v1356 = vld [vmem:[#allocation7 + $0x7b8] sm:$0xff]
    %v1357 = vld [vmem:[#allocation7 + $0x7c0] sm:$0xff]
    %v1358 = vld [vmem:[#allocation7 + $0x7c8] sm:$0xff]
    %v1359 = vld [vmem:[#allocation7 + $0x7d0] sm:$0xff]
    %v1360 = vld [vmem:[#allocation7 + $0x7d8] sm:$0xff]
    %v1361 = vld [vmem:[#allocation7 + $0x7e0] sm:$0xff]
    %v1362 = vld [vmem:[#allocation7 + $0x7e8] sm:$0xff]
    %v1363 = vld [vmem:[#allocation7 + $0x7f0] sm:$0xff]
    %v1364 = vld [vmem:[#allocation7 + $0x7f8] sm:$0xff]
    %v1365 = vld [vmem:[#allocation7 + $0x800] sm:$0xff]
    %v1366 = vld [vmem:[#allocation7 + $0x808] sm:$0xff]
    %v1367 = vld [vmem:[#allocation7 + $0x810] sm:$0xff]
    %v1368 = vld [vmem:[#allocation7 + $0x818] sm:$0xff]
    %v1369 = vld [vmem:[#allocation7 + $0x820] sm:$0xff]
    %v1370 = vld [vmem:[#allocation7 + $0x828] sm:$0xff]
    %v1371 = vld [vmem:[#allocation7 + $0x830] sm:$0xff]
    %v1372 = vld [vmem:[#allocation7 + $0x838] sm:$0xff]
    %v1373 = vld [vmem:[#allocation7 + $0x840] sm:$0xff]
    %v1374 = vld [vmem:[#allocation7 + $0x848] sm:$0xff]
    %v1375 = vld [vmem:[#allocation7 + $0x850] sm:$0xff]
    %v1376 = vld [vmem:[#allocation7 + $0x858] sm:$0xff]
    %v1377 = vld [vmem:[#allocation7 + $0x860] sm:$0xff]
    %v1378 = vld [vmem:[#allocation7 + $0x868] sm:$0xff]
    %v1379 = vld [vmem:[#allocation7 + $0x870] sm:$0xff]
    %v1380 = vld [vmem:[#allocation7 + $0x878] sm:$0xff]
    %v1381 = vld [vmem:[#allocation7 + $0x880] sm:$0xff]
    %v1382 = vld [vmem:[#allocation7 + $0x888] sm:$0xff]
    %v1383 = vld [vmem:[#allocation7 + $0x890] sm:$0xff]
    %v1384 = vld [vmem:[#allocation7 + $0x898] sm:$0xff]
    %v1385 = vld [vmem:[#allocation7 + $0x8a0] sm:$0xff]
    %v1386 = vld [vmem:[#allocation7 + $0x8a8] sm:$0xff]
    %v1387 = vld [vmem:[#allocation7 + $0x8b0] sm:$0xff]
    %v1388 = vld [vmem:[#allocation7 + $0x8b8] sm:$0xff]
    %v1389 = vld [vmem:[#allocation7 + $0x8c0] sm:$0xff]
    %v1390 = vld [vmem:[#allocation7 + $0x8c8] sm:$0xff]
    %v1391 = vld [vmem:[#allocation7 + $0x8d0] sm:$0xff]
    %v1392 = vld [vmem:[#allocation7 + $0x8d8] sm:$0xff]
    %v1393 = vld [vmem:[#allocation7 + $0x8e0] sm:$0xff]
    %v1394 = vld [vmem:[#allocation7 + $0x8e8] sm:$0xff]
    %v1395 = vld [vmem:[#allocation7 + $0x8f0] sm:$0xff]
    %v1396 = vld [vmem:[#allocation7 + $0x8f8] sm:$0xff]
    %v1397 = vld [vmem:[#allocation7 + $0x900] sm:$0xff]
    %v1398 = vld [vmem:[#allocation7 + $0x908] sm:$0xff]
    %v1399 = vld [vmem:[#allocation7 + $0x910] sm:$0xff]
    %v1400 = vld [vmem:[#allocation7 + $0x918] sm:$0xff]
    %v1401 = vld [vmem:[#allocation7 + $0x920] sm:$0xff]
    %v1402 = vld [vmem:[#allocation7 + $0x928] sm:$0xff]
    %v1403 = vld [vmem:[#allocation7 + $0x930] sm:$0xff]
    %v1404 = vld [vmem:[#allocation7 + $0x938] sm:$0xff]
    %v1405 = vld [vmem:[#allocation7 + $0x940] sm:$0xff]
    %v1406 = vld [vmem:[#allocation7 + $0x948] sm:$0xff]
    %v1407 = vld [vmem:[#allocation7 + $0x950] sm:$0xff]
    %v1408 = vld [vmem:[#allocation7 + $0x958] sm:$0xff]
    %v1409 = vld [vmem:[#allocation7 + $0x960] sm:$0xff]
    %v1410 = vld [vmem:[#allocation7 + $0x968] sm:$0xff]
    %v1411 = vld [vmem:[#allocation7 + $0x970] sm:$0xff]
    %v1412 = vld [vmem:[#allocation7 + $0x978] sm:$0xff]
    %v1413 = vld [vmem:[#allocation7 + $0x980] sm:$0xff]
    %v1414 = vld [vmem:[#allocation7 + $0x988] sm:$0xff]
    %v1415 = vld [vmem:[#allocation7 + $0x990] sm:$0xff]
    %v1416 = vld [vmem:[#allocation7 + $0x998] sm:$0xff]
    %v1417 = vld [vmem:[#allocation7 + $0x9a0] sm:$0xff]
    %v1418 = vld [vmem:[#allocation7 + $0x9a8] sm:$0xff]
    %v1419 = vld [vmem:[#allocation7 + $0x9b0] sm:$0xff]
    %v1420 = vld [vmem:[#allocation7 + $0x9b8] sm:$0xff]
    %v1421 = vld [vmem:[#allocation7 + $0x9c0] sm:$0xff]
    %v1422 = vld [vmem:[#allocation7 + $0x9c8] sm:$0xff]
    %v1423 = vld [vmem:[#allocation7 + $0x9d0] sm:$0xff]
    %v1424 = vld [vmem:[#allocation7 + $0x9d8] sm:$0xff]
    %v1425 = vld [vmem:[#allocation7 + $0x9e0] sm:$0xff]
    %v1426 = vld [vmem:[#allocation7 + $0x9e8] sm:$0xff]
    %v1427 = vld [vmem:[#allocation7 + $0x9f0] sm:$0xff]
    %v1428 = vld [vmem:[#allocation7 + $0x9f8] sm:$0xff]
    %v1429 = vld [vmem:[#allocation7 + $0xa00] sm:$0xff]
    %v1430 = vld [vmem:[#allocation7 + $0xa08] sm:$0xff]
    %v1431 = vld [vmem:[#allocation7 + $0xa10] sm:$0xff]
    %v1432 = vld [vmem:[#allocation7 + $0xa18] sm:$0xff]
    %v1433 = vld [vmem:[#allocation7 + $0xa20] sm:$0xff]
    %v1434 = vld [vmem:[#allocation7 + $0xa28] sm:$0xff]
    %v1435 = vld [vmem:[#allocation7 + $0xa30] sm:$0xff]
    %v1436 = vld [vmem:[#allocation7 + $0xa38] sm:$0xff]
    %v1437 = vld [vmem:[#allocation7 + $0xa40] sm:$0xff]
    %v1438 = vld [vmem:[#allocation7 + $0xa48] sm:$0xff]
    %v1439 = vld [vmem:[#allocation7 + $0xa50] sm:$0xff]
    %v1440 = vld [vmem:[#allocation7 + $0xa58] sm:$0xff]
    %v1441 = vld [vmem:[#allocation7 + $0xa60] sm:$0xff]
    %v1442 = vld [vmem:[#allocation7 + $0xa68] sm:$0xff]
    %v1443 = vld [vmem:[#allocation7 + $0xa70] sm:$0xff]
    %v1444 = vld [vmem:[#allocation7 + $0xa78] sm:$0xff]
    %v1445 = vld [vmem:[#allocation7 + $0xa80] sm:$0xff]
    %v1446 = vld [vmem:[#allocation7 + $0xa88] sm:$0xff]
    %v1447 = vld [vmem:[#allocation7 + $0xa90] sm:$0xff]
    %v1448 = vld [vmem:[#allocation7 + $0xa98] sm:$0xff]
    %v1449 = vld [vmem:[#allocation7 + $0xaa0] sm:$0xff]
    %v1450 = vld [vmem:[#allocation7 + $0xaa8] sm:$0xff]
    %v1451 = vld [vmem:[#allocation7 + $0xab0] sm:$0xff]
    %v1452 = vld [vmem:[#allocation7 + $0xab8] sm:$0xff]
    %v1453 = vld [vmem:[#allocation7 + $0xac0] sm:$0xff]
    %v1454 = vld [vmem:[#allocation7 + $0xac8] sm:$0xff]
    %v1455 = vld [vmem:[#allocation7 + $0xad0] sm:$0xff]
    %v1456 = vld [vmem:[#allocation7 + $0xad8] sm:$0xff]
    %v1457 = vld [vmem:[#allocation7 + $0xae0] sm:$0xff]
    %v1458 = vld [vmem:[#allocation7 + $0xae8] sm:$0xff]
    %v1459 = vld [vmem:[#allocation7 + $0xaf0] sm:$0xff]
    %v1460 = vld [vmem:[#allocation7 + $0xaf8] sm:$0xff]
    %v1461 = vld [vmem:[#allocation7 + $0xb00] sm:$0xff]
    %v1462 = vld [vmem:[#allocation7 + $0xb08] sm:$0xff]
    %v1463 = vld [vmem:[#allocation7 + $0xb10] sm:$0xff]
    %v1464 = vld [vmem:[#allocation7 + $0xb18] sm:$0xff]
    %v1465 = vld [vmem:[#allocation7 + $0xb20] sm:$0xff]
    %v1466 = vld [vmem:[#allocation7 + $0xb28] sm:$0xff]
    %v1467 = vld [vmem:[#allocation7 + $0xb30] sm:$0xff]
    %v1468 = vld [vmem:[#allocation7 + $0xb38] sm:$0xff]
    %v1469 = vld [vmem:[#allocation7 + $0xb40] sm:$0xff]
    %v1470 = vld [vmem:[#allocation7 + $0xb48] sm:$0xff]
    %v1471 = vld [vmem:[#allocation7 + $0xb50] sm:$0xff]
    %v1472 = vld [vmem:[#allocation7 + $0xb58] sm:$0xff]
    %v1473 = vld [vmem:[#allocation7 + $0xb60] sm:$0xff]
    %v1474 = vld [vmem:[#allocation7 + $0xb68] sm:$0xff]
    %v1475 = vld [vmem:[#allocation7 + $0xb70] sm:$0xff]
    %v1476 = vld [vmem:[#allocation7 + $0xb78] sm:$0xff]
    %v1477 = vld [vmem:[#allocation7 + $0xb80] sm:$0xff]
    %v1478 = vld [vmem:[#allocation7 + $0xb88] sm:$0xff]
    %v1479 = vld [vmem:[#allocation7 + $0xb90] sm:$0xff]
    %v1480 = vld [vmem:[#allocation7 + $0xb98] sm:$0xff]
    %v1481 = vld [vmem:[#allocation7 + $0xba0] sm:$0xff]
    %v1482 = vld [vmem:[#allocation7 + $0xba8] sm:$0xff]
    %v1483 = vld [vmem:[#allocation7 + $0xbb0] sm:$0xff]
    %v1484 = vld [vmem:[#allocation7 + $0xbb8] sm:$0xff]
    %v1485 = vld [vmem:[#allocation7 + $0xbc0] sm:$0xff]
    %v1486 = vld [vmem:[#allocation7 + $0xbc8] sm:$0xff]
    %v1487 = vld [vmem:[#allocation7 + $0xbd0] sm:$0xff]
    %v1488 = vld [vmem:[#allocation7 + $0xbd8] sm:$0xff]
    %v1489 = vld [vmem:[#allocation7 + $0xbe0] sm:$0xff]
    %v1490 = vld [vmem:[#allocation7 + $0xbe8] sm:$0xff]
    %v1491 = vld [vmem:[#allocation7 + $0xbf0] sm:$0xff]
    %v1492 = vld [vmem:[#allocation7 + $0xbf8] sm:$0xff]
    %v1493 = vld [vmem:[#allocation7 + $0xc00] sm:$0xff]
    %v1494 = vld [vmem:[#allocation7 + $0xc08] sm:$0xff]
    %v1495 = vld [vmem:[#allocation7 + $0xc10] sm:$0xff]
    %v1496 = vld [vmem:[#allocation7 + $0xc18] sm:$0xff]
    %v1497 = vld [vmem:[#allocation7 + $0xc20] sm:$0xff]
    %v1498 = vld [vmem:[#allocation7 + $0xc28] sm:$0xff]
    %v1499 = vld [vmem:[#allocation7 + $0xc30] sm:$0xff]
    %v1500 = vld [vmem:[#allocation7 + $0xc38] sm:$0xff]
    %v1501 = vld [vmem:[#allocation7 + $0xc40] sm:$0xff]
    %v1502 = vld [vmem:[#allocation7 + $0xc48] sm:$0xff]
    %v1503 = vld [vmem:[#allocation7 + $0xc50] sm:$0xff]
    %v1504 = vld [vmem:[#allocation7 + $0xc58] sm:$0xff]
    %v1505 = vld [vmem:[#allocation7 + $0xc60] sm:$0xff]
    %v1506 = vld [vmem:[#allocation7 + $0xc68] sm:$0xff]
    %v1507 = vld [vmem:[#allocation7 + $0xc70] sm:$0xff]
    %v1508 = vld [vmem:[#allocation7 + $0xc78] sm:$0xff]
    %v1509 = vld [vmem:[#allocation7 + $0xc80] sm:$0xff]
    %v1510 = vld [vmem:[#allocation7 + $0xc88] sm:$0xff]
    %v1511 = vld [vmem:[#allocation7 + $0xc90] sm:$0xff]
    %v1512 = vld [vmem:[#allocation7 + $0xc98] sm:$0xff]
    %v1513 = vld [vmem:[#allocation7 + $0xca0] sm:$0xff]
    %v1514 = vld [vmem:[#allocation7 + $0xca8] sm:$0xff]
    %v1515 = vld [vmem:[#allocation7 + $0xcb0] sm:$0xff]
    %v1516 = vld [vmem:[#allocation7 + $0xcb8] sm:$0xff]
    %v1517 = vld [vmem:[#allocation7 + $0xcc0] sm:$0xff]
    %v1518 = vld [vmem:[#allocation7 + $0xcc8] sm:$0xff]
    %v1519 = vld [vmem:[#allocation7 + $0xcd0] sm:$0xff]
    %v1520 = vld [vmem:[#allocation7 + $0xcd8] sm:$0xff]
    %v1521 = vld [vmem:[#allocation7 + $0xce0] sm:$0xff]
    %v1522 = vld [vmem:[#allocation7 + $0xce8] sm:$0xff]
    %v1523 = vld [vmem:[#allocation7 + $0xcf0] sm:$0xff]
    %v1524 = vld [vmem:[#allocation7 + $0xcf8] sm:$0xff]
    %v1525 = vld [vmem:[#allocation7 + $0xd00] sm:$0xff]
    %v1526 = vld [vmem:[#allocation7 + $0xd08] sm:$0xff]
    %v1527 = vld [vmem:[#allocation7 + $0xd10] sm:$0xff]
    %v1528 = vld [vmem:[#allocation7 + $0xd18] sm:$0xff]
    %v1529 = vld [vmem:[#allocation7 + $0xd20] sm:$0xff]
    %v1530 = vld [vmem:[#allocation7 + $0xd28] sm:$0xff]
    %v1531 = vld [vmem:[#allocation7 + $0xd30] sm:$0xff]
    %v1532 = vld [vmem:[#allocation7 + $0xd38] sm:$0xff]
    %v1533 = vld [vmem:[#allocation7 + $0xd40] sm:$0xff]
    %v1534 = vld [vmem:[#allocation7 + $0xd48] sm:$0xff]
    %v1535 = vld [vmem:[#allocation7 + $0xd50] sm:$0xff]
    %v1536 = vld [vmem:[#allocation7 + $0xd58] sm:$0xff]
    %v1537 = vld [vmem:[#allocation7 + $0xd60] sm:$0xff]
    %v1538 = vld [vmem:[#allocation7 + $0xd68] sm:$0xff]
    %v1539 = vld [vmem:[#allocation7 + $0xd70] sm:$0xff]
    %v1540 = vld [vmem:[#allocation7 + $0xd78] sm:$0xff]
    %v1541 = vld [vmem:[#allocation7 + $0xd80] sm:$0xff]
    %v1542 = vld [vmem:[#allocation7 + $0xd88] sm:$0xff]
    %v1543 = vld [vmem:[#allocation7 + $0xd90] sm:$0xff]
    %v1544 = vld [vmem:[#allocation7 + $0xd98] sm:$0xff]
    %v1545 = vld [vmem:[#allocation7 + $0xda0] sm:$0xff]
    %v1546 = vld [vmem:[#allocation7 + $0xda8] sm:$0xff]
    %v1547 = vld [vmem:[#allocation7 + $0xdb0] sm:$0xff]
    %v1548 = vld [vmem:[#allocation7 + $0xdb8] sm:$0xff]
    %v1549 = vld [vmem:[#allocation7 + $0xdc0] sm:$0xff]
    %v1550 = vld [vmem:[#allocation7 + $0xdc8] sm:$0xff]
    %v1551 = vld [vmem:[#allocation7 + $0xdd0] sm:$0xff]
    %v1552 = vld [vmem:[#allocation7 + $0xdd8] sm:$0xff]
    %v1553 = vld [vmem:[#allocation7 + $0xde0] sm:$0xff]
    %v1554 = vld [vmem:[#allocation7 + $0xde8] sm:$0xff]
    %v1555 = vld [vmem:[#allocation7 + $0xdf0] sm:$0xff]
    %v1556 = vld [vmem:[#allocation7 + $0xdf8] sm:$0xff]
    %v1557 = vld [vmem:[#allocation7 + $0xe00] sm:$0xff]
    %v1558 = vld [vmem:[#allocation7 + $0xe08] sm:$0xff]
    %v1559 = vld [vmem:[#allocation7 + $0xe10] sm:$0xff]
    %v1560 = vld [vmem:[#allocation7 + $0xe18] sm:$0xff]
    %v1561 = vld [vmem:[#allocation7 + $0xe20] sm:$0xff]
    %v1562 = vld [vmem:[#allocation7 + $0xe28] sm:$0xff]
    %v1563 = vld [vmem:[#allocation7 + $0xe30] sm:$0xff]
    %v1564 = vld [vmem:[#allocation7 + $0xe38] sm:$0xff]
    %v1565 = vld [vmem:[#allocation7 + $0xe40] sm:$0xff]
    %v1566 = vld [vmem:[#allocation7 + $0xe48] sm:$0xff]
    %v1567 = vld [vmem:[#allocation7 + $0xe50] sm:$0xff]
    %v1568 = vld [vmem:[#allocation7 + $0xe58] sm:$0xff]
    %v1569 = vld [vmem:[#allocation7 + $0xe60] sm:$0xff]
    %v1570 = vld [vmem:[#allocation7 + $0xe68] sm:$0xff]
    %v1571 = vld [vmem:[#allocation7 + $0xe70] sm:$0xff]
    %v1572 = vld [vmem:[#allocation7 + $0xe78] sm:$0xff]
    %v1573 = vld [vmem:[#allocation7 + $0xe80] sm:$0xff]
    %v1574 = vld [vmem:[#allocation7 + $0xe88] sm:$0xff]
    %v1575 = vld [vmem:[#allocation7 + $0xe90] sm:$0xff]
    %v1576 = vld [vmem:[#allocation7 + $0xe98] sm:$0xff]
    %v1577 = vld [vmem:[#allocation7 + $0xea0] sm:$0xff]
    %v1578 = vld [vmem:[#allocation7 + $0xea8] sm:$0xff]
    %v1579 = vld [vmem:[#allocation7 + $0xeb0] sm:$0xff]
    %v1580 = vld [vmem:[#allocation7 + $0xeb8] sm:$0xff]
    %v1581 = vld [vmem:[#allocation7 + $0xec0] sm:$0xff]
    %v1582 = vld [vmem:[#allocation7 + $0xec8] sm:$0xff]
    %v1583 = vld [vmem:[#allocation7 + $0xed0] sm:$0xff]
    %v1584 = vld [vmem:[#allocation7 + $0xed8] sm:$0xff]
    %v1585 = vld [vmem:[#allocation7 + $0xee0] sm:$0xff]
    %v1586 = vld [vmem:[#allocation7 + $0xee8] sm:$0xff]
    %v1587 = vld [vmem:[#allocation7 + $0xef0] sm:$0xff]
    %v1588 = vld [vmem:[#allocation7 + $0xef8] sm:$0xff]
    %v1589 = vld [vmem:[#allocation7 + $0xf00] sm:$0xff]
    %v1590 = vld [vmem:[#allocation7 + $0xf08] sm:$0xff]
    %v1591 = vld [vmem:[#allocation7 + $0xf10] sm:$0xff]
    %v1592 = vld [vmem:[#allocation7 + $0xf18] sm:$0xff]
    %v1593 = vld [vmem:[#allocation7 + $0xf20] sm:$0xff]
    %v1594 = vld [vmem:[#allocation7 + $0xf28] sm:$0xff]
    %v1595 = vld [vmem:[#allocation7 + $0xf30] sm:$0xff]
    %v1596 = vld [vmem:[#allocation7 + $0xf38] sm:$0xff]
    %v1597 = vld [vmem:[#allocation7 + $0xf40] sm:$0xff]
    %v1598 = vld [vmem:[#allocation7 + $0xf48] sm:$0xff]
    %v1599 = vld [vmem:[#allocation7 + $0xf50] sm:$0xff]
    %v1600 = vld [vmem:[#allocation7 + $0xf58] sm:$0xff]
    %v1601 = vld [vmem:[#allocation7 + $0xf60] sm:$0xff]
    %v1602 = vld [vmem:[#allocation7 + $0xf68] sm:$0xff]
    %v1603 = vld [vmem:[#allocation7 + $0xf70] sm:$0xff]
    %v1604 = vld [vmem:[#allocation7 + $0xf78] sm:$0xff]
    %v1605 = vld [vmem:[#allocation7 + $0xf80] sm:$0xff]
    %v1606 = vld [vmem:[#allocation7 + $0xf88] sm:$0xff]
    %v1607 = vld [vmem:[#allocation7 + $0xf90] sm:$0xff]
    %v1608 = vld [vmem:[#allocation7 + $0xf98] sm:$0xff]
    %v1609 = vld [vmem:[#allocation7 + $0xfa0] sm:$0xff]
    %v1610 = vld [vmem:[#allocation7 + $0xfa8] sm:$0xff]
    %v1611 = vld [vmem:[#allocation7 + $0xfb0] sm:$0xff]
    %v1612 = vld [vmem:[#allocation7 + $0xfb8] sm:$0xff]
    %v1613 = vld [vmem:[#allocation7 + $0xfc0] sm:$0xff]
    %v1614 = vld [vmem:[#allocation7 + $0xfc8] sm:$0xff]
    %v1615 = vld [vmem:[#allocation7 + $0xfd0] sm:$0xff]
    %v1616 = vld [vmem:[#allocation7 + $0xfd8] sm:$0xff]
    %v1617 = vld [vmem:[#allocation7 + $0xfe0] sm:$0xff]
    %v1618 = vld [vmem:[#allocation7 + $0xfe8] sm:$0xff]
    %v1619 = vld [vmem:[#allocation7 + $0xff0] sm:$0xff]
    %v1620 = vld [vmem:[#allocation7 + $0xff8] sm:$0xff]
    %v1621 = vsub.f32 %v85, %v597
    %v1622 = vsub.f32 %v86, %v598
    %v1623 = vsub.f32 %v87, %v599
    %v1624 = vsub.f32 %v88, %v600
    %v1625 = vsub.f32 %v89, %v601
    %v1626 = vsub.f32 %v90, %v602
    %v1627 = vsub.f32 %v91, %v603
    %v1628 = vsub.f32 %v92, %v604
    %v1629 = vsub.f32 %v93, %v605
    %v1630 = vsub.f32 %v94, %v606
    %v1631 = vsub.f32 %v95, %v607
    %v1632 = vsub.f32 %v96, %v608
    %v1633 = vsub.f32 %v97, %v609
    %v1634 = vsub.f32 %v98, %v610
    %v1635 = vsub.f32 %v99, %v611
    %v1636 = vsub.f32 %v100, %v612
    %v1637 = vsub.f32 %v101, %v613
    %v1638 = vsub.f32 %v102, %v614
    %v1639 = vsub.f32 %v103, %v615
    %v1640 = vsub.f32 %v104, %v616
    %v1641 = vsub.f32 %v105, %v617
    %v1642 = vsub.f32 %v106, %v618
    %v1643 = vsub.f32 %v107, %v619
    %v1644 = vsub.f32 %v108, %v620
    %v1645 = vsub.f32 %v109, %v621
    %v1646 = vsub.f32 %v110, %v622
    %v1647 = vsub.f32 %v111, %v623
    %v1648 = vsub.f32 %v112, %v624
    %v1649 = vsub.f32 %v113, %v625
    %v1650 = vsub.f32 %v114, %v626
    %v1651 = vsub.f32 %v115, %v627
    %v1652 = vsub.f32 %v116, %v628
    %v1653 = vsub.f32 %v117, %v629
    %v1654 = vsub.f32 %v118, %v630
    %v1655 = vsub.f32 %v119, %v631
    %v1656 = vsub.f32 %v120, %v632
    %v1657 = vsub.f32 %v121, %v633
    %v1658 = vsub.f32 %v122, %v634
    %v1659 = vsub.f32 %v123, %v635
    %v1660 = vsub.f32 %v124, %v636
    %v1661 = vsub.f32 %v125, %v637
    %v1662 = vsub.f32 %v126, %v638
    %v1663 = vsub.f32 %v127, %v639
    %v1664 = vsub.f32 %v128, %v640
    %v1665 = vsub.f32 %v129, %v641
    %v1666 = vsub.f32 %v130, %v642
    %v1667 = vsub.f32 %v131, %v643
    %v1668 = vsub.f32 %v132, %v644
    %v1669 = vsub.f32 %v133, %v645
    %v1670 = vsub.f32 %v134, %v646
    %v1671 = vsub.f32 %v135, %v647
    %v1672 = vsub.f32 %v136, %v648
    %v1673 = vsub.f32 %v137, %v649
    %v1674 = vsub.f32 %v138, %v650
    %v1675 = vsub.f32 %v139, %v651
    %v1676 = vsub.f32 %v140, %v652
    %v1677 = vsub.f32 %v141, %v653
    %v1678 = vsub.f32 %v142, %v654
    %v1679 = vsub.f32 %v143, %v655
    %v1680 = vsub.f32 %v144, %v656
    %v1681 = vsub.f32 %v145, %v657
    %v1682 = vsub.f32 %v146, %v658
    %v1683 = vsub.f32 %v147, %v659
    %v1684 = vsub.f32 %v148, %v660
    %v1685 = vsub.f32 %v149, %v661
    %v1686 = vsub.f32 %v150, %v662
    %v1687 = vsub.f32 %v151, %v663
    %v1688 = vsub.f32 %v152, %v664
    %v1689 = vsub.f32 %v153, %v665
    %v1690 = vsub.f32 %v154, %v666
    %v1691 = vsub.f32 %v155, %v667
    %v1692 = vsub.f32 %v156, %v668
    %v1693 = vsub.f32 %v157, %v669
    %v1694 = vsub.f32 %v158, %v670
    %v1695 = vsub.f32 %v159, %v671
    %v1696 = vsub.f32 %v160, %v672
    %v1697 = vsub.f32 %v161, %v673
    %v1698 = vsub.f32 %v162, %v674
    %v1699 = vsub.f32 %v163, %v675
    %v1700 = vsub.f32 %v164, %v676
    %v1701 = vsub.f32 %v165, %v677
    %v1702 = vsub.f32 %v166, %v678
    %v1703 = vsub.f32 %v167, %v679
    %v1704 = vsub.f32 %v168, %v680
    %v1705 = vsub.f32 %v169, %v681
    %v1706 = vsub.f32 %v170, %v682
    %v1707 = vsub.f32 %v171, %v683
    %v1708 = vsub.f32 %v172, %v684
    %v1709 = vsub.f32 %v173, %v685
    %v1710 = vsub.f32 %v174, %v686
    %v1711 = vsub.f32 %v175, %v687
    %v1712 = vsub.f32 %v176, %v688
    %v1713 = vsub.f32 %v177, %v689
    %v1714 = vsub.f32 %v178, %v690
    %v1715 = vsub.f32 %v179, %v691
    %v1716 = vsub.f32 %v180, %v692
    %v1717 = vsub.f32 %v181, %v693
    %v1718 = vsub.f32 %v182, %v694
    %v1719 = vsub.f32 %v183, %v695
    %v1720 = vsub.f32 %v184, %v696
    %v1721 = vsub.f32 %v185, %v697
    %v1722 = vsub.f32 %v186, %v698
    %v1723 = vsub.f32 %v187, %v699
    %v1724 = vsub.f32 %v188, %v700
    %v1725 = vsub.f32 %v189, %v701
    %v1726 = vsub.f32 %v190, %v702
    %v1727 = vsub.f32 %v191, %v703
    %v1728 = vsub.f32 %v192, %v704
    %v1729 = vsub.f32 %v193, %v705
    %v1730 = vsub.f32 %v194, %v706
    %v1731 = vsub.f32 %v195, %v707
    %v1732 = vsub.f32 %v196, %v708
    %v1733 = vsub.f32 %v197, %v709
    %v1734 = vsub.f32 %v198, %v710
    %v1735 = vsub.f32 %v199, %v711
    %v1736 = vsub.f32 %v200, %v712
    %v1737 = vsub.f32 %v201, %v713
    %v1738 = vsub.f32 %v202, %v714
    %v1739 = vsub.f32 %v203, %v715
    %v1740 = vsub.f32 %v204, %v716
    %v1741 = vsub.f32 %v205, %v717
    %v1742 = vsub.f32 %v206, %v718
    %v1743 = vsub.f32 %v207, %v719
    %v1744 = vsub.f32 %v208, %v720
    %v1745 = vsub.f32 %v209, %v721
    %v1746 = vsub.f32 %v210, %v722
    %v1747 = vsub.f32 %v211, %v723
    %v1748 = vsub.f32 %v212, %v724
    %v1749 = vsub.f32 %v213, %v725
    %v1750 = vsub.f32 %v214, %v726
    %v1751 = vsub.f32 %v215, %v727
    %v1752 = vsub.f32 %v216, %v728
    %v1753 = vsub.f32 %v217, %v729
    %v1754 = vsub.f32 %v218, %v730
    %v1755 = vsub.f32 %v219, %v731
    %v1756 = vsub.f32 %v220, %v732
    %v1757 = vsub.f32 %v221, %v733
    %v1758 = vsub.f32 %v222, %v734
    %v1759 = vsub.f32 %v223, %v735
    %v1760 = vsub.f32 %v224, %v736
    %v1761 = vsub.f32 %v225, %v737
    %v1762 = vsub.f32 %v226, %v738
    %v1763 = vsub.f32 %v227, %v739
    %v1764 = vsub.f32 %v228, %v740
    %v1765 = vsub.f32 %v229, %v741
    %v1766 = vsub.f32 %v230, %v742
    %v1767 = vsub.f32 %v231, %v743
    %v1768 = vsub.f32 %v232, %v744
    %v1769 = vsub.f32 %v233, %v745
    %v1770 = vsub.f32 %v234, %v746
    %v1771 = vsub.f32 %v235, %v747
    %v1772 = vsub.f32 %v236, %v748
    %v1773 = vsub.f32 %v237, %v749
    %v1774 = vsub.f32 %v238, %v750
    %v1775 = vsub.f32 %v239, %v751
    %v1776 = vsub.f32 %v240, %v752
    %v1777 = vsub.f32 %v241, %v753
    %v1778 = vsub.f32 %v242, %v754
    %v1779 = vsub.f32 %v243, %v755
    %v1780 = vsub.f32 %v244, %v756
    %v1781 = vsub.f32 %v245, %v757
    %v1782 = vsub.f32 %v246, %v758
    %v1783 = vsub.f32 %v247, %v759
    %v1784 = vsub.f32 %v248, %v760
    %v1785 = vsub.f32 %v249, %v761
    %v1786 = vsub.f32 %v250, %v762
    %v1787 = vsub.f32 %v251, %v763
    %v1788 = vsub.f32 %v252, %v764
    %v1789 = vsub.f32 %v253, %v765
    %v1790 = vsub.f32 %v254, %v766
    %v1791 = vsub.f32 %v255, %v767
    %v1792 = vsub.f32 %v256, %v768
    %v1793 = vsub.f32 %v257, %v769
    %v1794 = vsub.f32 %v258, %v770
    %v1795 = vsub.f32 %v259, %v771
    %v1796 = vsub.f32 %v260, %v772
    %v1797 = vsub.f32 %v261, %v773
    %v1798 = vsub.f32 %v262, %v774
    %v1799 = vsub.f32 %v263, %v775
    %v1800 = vsub.f32 %v264, %v776
    %v1801 = vsub.f32 %v265, %v777
    %v1802 = vsub.f32 %v266, %v778
    %v1803 = vsub.f32 %v267, %v779
    %v1804 = vsub.f32 %v268, %v780
    %v1805 = vsub.f32 %v269, %v781
    %v1806 = vsub.f32 %v270, %v782
    %v1807 = vsub.f32 %v271, %v783
    %v1808 = vsub.f32 %v272, %v784
    %v1809 = vsub.f32 %v273, %v785
    %v1810 = vsub.f32 %v274, %v786
    %v1811 = vsub.f32 %v275, %v787
    %v1812 = vsub.f32 %v276, %v788
    %v1813 = vsub.f32 %v277, %v789
    %v1814 = vsub.f32 %v278, %v790
    %v1815 = vsub.f32 %v279, %v791
    %v1816 = vsub.f32 %v280, %v792
    %v1817 = vsub.f32 %v281, %v793
    %v1818 = vsub.f32 %v282, %v794
    %v1819 = vsub.f32 %v283, %v795
    %v1820 = vsub.f32 %v284, %v796
    %v1821 = vsub.f32 %v285, %v797
    %v1822 = vsub.f32 %v286, %v798
    %v1823 = vsub.f32 %v287, %v799
    %v1824 = vsub.f32 %v288, %v800
    %v1825 = vsub.f32 %v289, %v801
    %v1826 = vsub.f32 %v290, %v802
    %v1827 = vsub.f32 %v291, %v803
    %v1828 = vsub.f32 %v292, %v804
    %v1829 = vsub.f32 %v293, %v805
    %v1830 = vsub.f32 %v294, %v806
    %v1831 = vsub.f32 %v295, %v807
    %v1832 = vsub.f32 %v296, %v808
    %v1833 = vsub.f32 %v297, %v809
    %v1834 = vsub.f32 %v298, %v810
    %v1835 = vsub.f32 %v299, %v811
    %v1836 = vsub.f32 %v300, %v812
    %v1837 = vsub.f32 %v301, %v813
    %v1838 = vsub.f32 %v302, %v814
    %v1839 = vsub.f32 %v303, %v815
    %v1840 = vsub.f32 %v304, %v816
    %v1841 = vsub.f32 %v305, %v817
    %v1842 = vsub.f32 %v306, %v818
    %v1843 = vsub.f32 %v307, %v819
    %v1844 = vsub.f32 %v308, %v820
    %v1845 = vsub.f32 %v309, %v821
    %v1846 = vsub.f32 %v310, %v822
    %v1847 = vsub.f32 %v311, %v823
    %v1848 = vsub.f32 %v312, %v824
    %v1849 = vsub.f32 %v313, %v825
    %v1850 = vsub.f32 %v314, %v826
    %v1851 = vsub.f32 %v315, %v827
    %v1852 = vsub.f32 %v316, %v828
    %v1853 = vsub.f32 %v317, %v829
    %v1854 = vsub.f32 %v318, %v830
    %v1855 = vsub.f32 %v319, %v831
    %v1856 = vsub.f32 %v320, %v832
    %v1857 = vsub.f32 %v321, %v833
    %v1858 = vsub.f32 %v322, %v834
    %v1859 = vsub.f32 %v323, %v835
    %v1860 = vsub.f32 %v324, %v836
    %v1861 = vsub.f32 %v325, %v837
    %v1862 = vsub.f32 %v326, %v838
    %v1863 = vsub.f32 %v327, %v839
    %v1864 = vsub.f32 %v328, %v840
    %v1865 = vsub.f32 %v329, %v841
    %v1866 = vsub.f32 %v330, %v842
    %v1867 = vsub.f32 %v331, %v843
    %v1868 = vsub.f32 %v332, %v844
    %v1869 = vsub.f32 %v333, %v845
    %v1870 = vsub.f32 %v334, %v846
    %v1871 = vsub.f32 %v335, %v847
    %v1872 = vsub.f32 %v336, %v848
    %v1873 = vsub.f32 %v337, %v849
    %v1874 = vsub.f32 %v338, %v850
    %v1875 = vsub.f32 %v339, %v851
    %v1876 = vsub.f32 %v340, %v852
    %v1877 = vsub.f32 %v341, %v853
    %v1878 = vsub.f32 %v342, %v854
    %v1879 = vsub.f32 %v343, %v855
    %v1880 = vsub.f32 %v344, %v856
    %v1881 = vsub.f32 %v345, %v857
    %v1882 = vsub.f32 %v346, %v858
    %v1883 = vsub.f32 %v347, %v859
    %v1884 = vsub.f32 %v348, %v860
    %v1885 = vsub.f32 %v349, %v861
    %v1886 = vsub.f32 %v350, %v862
    %v1887 = vsub.f32 %v351, %v863
    %v1888 = vsub.f32 %v352, %v864
    %v1889 = vsub.f32 %v353, %v865
    %v1890 = vsub.f32 %v354, %v866
    %v1891 = vsub.f32 %v355, %v867
    %v1892 = vsub.f32 %v356, %v868
    %v1893 = vsub.f32 %v357, %v869
    %v1894 = vsub.f32 %v358, %v870
    %v1895 = vsub.f32 %v359, %v871
    %v1896 = vsub.f32 %v360, %v872
    %v1897 = vsub.f32 %v361, %v873
    %v1898 = vsub.f32 %v362, %v874
    %v1899 = vsub.f32 %v363, %v875
    %v1900 = vsub.f32 %v364, %v876
    %v1901 = vsub.f32 %v365, %v877
    %v1902 = vsub.f32 %v366, %v878
    %v1903 = vsub.f32 %v367, %v879
    %v1904 = vsub.f32 %v368, %v880
    %v1905 = vsub.f32 %v369, %v881
    %v1906 = vsub.f32 %v370, %v882
    %v1907 = vsub.f32 %v371, %v883
    %v1908 = vsub.f32 %v372, %v884
    %v1909 = vsub.f32 %v373, %v885
    %v1910 = vsub.f32 %v374, %v886
    %v1911 = vsub.f32 %v375, %v887
    %v1912 = vsub.f32 %v376, %v888
    %v1913 = vsub.f32 %v377, %v889
    %v1914 = vsub.f32 %v378, %v890
    %v1915 = vsub.f32 %v379, %v891
    %v1916 = vsub.f32 %v380, %v892
    %v1917 = vsub.f32 %v381, %v893
    %v1918 = vsub.f32 %v382, %v894
    %v1919 = vsub.f32 %v383, %v895
    %v1920 = vsub.f32 %v384, %v896
    %v1921 = vsub.f32 %v385, %v897
    %v1922 = vsub.f32 %v386, %v898
    %v1923 = vsub.f32 %v387, %v899
    %v1924 = vsub.f32 %v388, %v900
    %v1925 = vsub.f32 %v389, %v901
    %v1926 = vsub.f32 %v390, %v902
    %v1927 = vsub.f32 %v391, %v903
    %v1928 = vsub.f32 %v392, %v904
    %v1929 = vsub.f32 %v393, %v905
    %v1930 = vsub.f32 %v394, %v906
    %v1931 = vsub.f32 %v395, %v907
    %v1932 = vsub.f32 %v396, %v908
    %v1933 = vsub.f32 %v397, %v909
    %v1934 = vsub.f32 %v398, %v910
    %v1935 = vsub.f32 %v399, %v911
    %v1936 = vsub.f32 %v400, %v912
    %v1937 = vsub.f32 %v401, %v913
    %v1938 = vsub.f32 %v402, %v914
    %v1939 = vsub.f32 %v403, %v915
    %v1940 = vsub.f32 %v404, %v916
    %v1941 = vsub.f32 %v405, %v917
    %v1942 = vsub.f32 %v406, %v918
    %v1943 = vsub.f32 %v407, %v919
    %v1944 = vsub.f32 %v408, %v920
    %v1945 = vsub.f32 %v409, %v921
    %v1946 = vsub.f32 %v410, %v922
    %v1947 = vsub.f32 %v411, %v923
    %v1948 = vsub.f32 %v412, %v924
    %v1949 = vsub.f32 %v413, %v925
    %v1950 = vsub.f32 %v414, %v926
    %v1951 = vsub.f32 %v415, %v927
    %v1952 = vsub.f32 %v416, %v928
    %v1953 = vsub.f32 %v417, %v929
    %v1954 = vsub.f32 %v418, %v930
    %v1955 = vsub.f32 %v419, %v931
    %v1956 = vsub.f32 %v420, %v932
    %v1957 = vsub.f32 %v421, %v933
    %v1958 = vsub.f32 %v422, %v934
    %v1959 = vsub.f32 %v423, %v935
    %v1960 = vsub.f32 %v424, %v936
    %v1961 = vsub.f32 %v425, %v937
    %v1962 = vsub.f32 %v426, %v938
    %v1963 = vsub.f32 %v427, %v939
    %v1964 = vsub.f32 %v428, %v940
    %v1965 = vsub.f32 %v429, %v941
    %v1966 = vsub.f32 %v430, %v942
    %v1967 = vsub.f32 %v431, %v943
    %v1968 = vsub.f32 %v432, %v944
    %v1969 = vsub.f32 %v433, %v945
    %v1970 = vsub.f32 %v434, %v946
    %v1971 = vsub.f32 %v435, %v947
    %v1972 = vsub.f32 %v436, %v948
    %v1973 = vsub.f32 %v437, %v949
    %v1974 = vsub.f32 %v438, %v950
    %v1975 = vsub.f32 %v439, %v951
    %v1976 = vsub.f32 %v440, %v952
    %v1977 = vsub.f32 %v441, %v953
    %v1978 = vsub.f32 %v442, %v954
    %v1979 = vsub.f32 %v443, %v955
    %v1980 = vsub.f32 %v444, %v956
    %v1981 = vsub.f32 %v445, %v957
    %v1982 = vsub.f32 %v446, %v958
    %v1983 = vsub.f32 %v447, %v959
    %v1984 = vsub.f32 %v448, %v960
    %v1985 = vsub.f32 %v449, %v961
    %v1986 = vsub.f32 %v450, %v962
    %v1987 = vsub.f32 %v451, %v963
    %v1988 = vsub.f32 %v452, %v964
    %v1989 = vsub.f32 %v453, %v965
    %v1990 = vsub.f32 %v454, %v966
    %v1991 = vsub.f32 %v455, %v967
    %v1992 = vsub.f32 %v456, %v968
    %v1993 = vsub.f32 %v457, %v969
    %v1994 = vsub.f32 %v458, %v970
    %v1995 = vsub.f32 %v459, %v971
    %v1996 = vsub.f32 %v460, %v972
    %v1997 = vsub.f32 %v461, %v973
    %v1998 = vsub.f32 %v462, %v974
    %v1999 = vsub.f32 %v463, %v975
    %v2000 = vsub.f32 %v464, %v976
    %v2001 = vsub.f32 %v465, %v977
    %v2002 = vsub.f32 %v466, %v978
    %v2003 = vsub.f32 %v467, %v979
    %v2004 = vsub.f32 %v468, %v980
    %v2005 = vsub.f32 %v469, %v981
    %v2006 = vsub.f32 %v470, %v982
    %v2007 = vsub.f32 %v471, %v983
    %v2008 = vsub.f32 %v472, %v984
    %v2009 = vsub.f32 %v473, %v985
    %v2010 = vsub.f32 %v474, %v986
    %v2011 = vsub.f32 %v475, %v987
    %v2012 = vsub.f32 %v476, %v988
    %v2013 = vsub.f32 %v477, %v989
    %v2014 = vsub.f32 %v478, %v990
    %v2015 = vsub.f32 %v479, %v991
    %v2016 = vsub.f32 %v480, %v992
    %v2017 = vsub.f32 %v481, %v993
    %v2018 = vsub.f32 %v482, %v994
    %v2019 = vsub.f32 %v483, %v995
    %v2020 = vsub.f32 %v484, %v996
    %v2021 = vsub.f32 %v485, %v997
    %v2022 = vsub.f32 %v486, %v998
    %v2023 = vsub.f32 %v487, %v999
    %v2024 = vsub.f32 %v488, %v1000
    %v2025 = vsub.f32 %v489, %v1001
    %v2026 = vsub.f32 %v490, %v1002
    %v2027 = vsub.f32 %v491, %v1003
    %v2028 = vsub.f32 %v492, %v1004
    %v2029 = vsub.f32 %v493, %v1005
    %v2030 = vsub.f32 %v494, %v1006
    %v2031 = vsub.f32 %v495, %v1007
    %v2032 = vsub.f32 %v496, %v1008
    %v2033 = vsub.f32 %v497, %v1009
    %v2034 = vsub.f32 %v498, %v1010
    %v2035 = vsub.f32 %v499, %v1011
    %v2036 = vsub.f32 %v500, %v1012
    %v2037 = vsub.f32 %v501, %v1013
    %v2038 = vsub.f32 %v502, %v1014
    %v2039 = vsub.f32 %v503, %v1015
    %v2040 = vsub.f32 %v504, %v1016
    %v2041 = vsub.f32 %v505, %v1017
    %v2042 = vsub.f32 %v506, %v1018
    %v2043 = vsub.f32 %v507, %v1019
    %v2044 = vsub.f32 %v508, %v1020
    %v2045 = vsub.f32 %v509, %v1021
    %v2046 = vsub.f32 %v510, %v1022
    %v2047 = vsub.f32 %v511, %v1023
    %v2048 = vsub.f32 %v512, %v1024
    %v2049 = vsub.f32 %v513, %v1025
    %v2050 = vsub.f32 %v514, %v1026
    %v2051 = vsub.f32 %v515, %v1027
    %v2052 = vsub.f32 %v516, %v1028
    %v2053 = vsub.f32 %v517, %v1029
    %v2054 = vsub.f32 %v518, %v1030
    %v2055 = vsub.f32 %v519, %v1031
    %v2056 = vsub.f32 %v520, %v1032
    %v2057 = vsub.f32 %v521, %v1033
    %v2058 = vsub.f32 %v522, %v1034
    %v2059 = vsub.f32 %v523, %v1035
    %v2060 = vsub.f32 %v524, %v1036
    %v2061 = vsub.f32 %v525, %v1037
    %v2062 = vsub.f32 %v526, %v1038
    %v2063 = vsub.f32 %v527, %v1039
    %v2064 = vsub.f32 %v528, %v1040
    %v2065 = vsub.f32 %v529, %v1041
    %v2066 = vsub.f32 %v530, %v1042
    %v2067 = vsub.f32 %v531, %v1043
    %v2068 = vsub.f32 %v532, %v1044
    %v2069 = vsub.f32 %v533, %v1045
    %v2070 = vsub.f32 %v534, %v1046
    %v2071 = vsub.f32 %v535, %v1047
    %v2072 = vsub.f32 %v536, %v1048
    %v2073 = vsub.f32 %v537, %v1049
    %v2074 = vsub.f32 %v538, %v1050
    %v2075 = vsub.f32 %v539, %v1051
    %v2076 = vsub.f32 %v540, %v1052
    %v2077 = vsub.f32 %v541, %v1053
    %v2078 = vsub.f32 %v542, %v1054
    %v2079 = vsub.f32 %v543, %v1055
    %v2080 = vsub.f32 %v544, %v1056
    %v2081 = vsub.f32 %v545, %v1057
    %v2082 = vsub.f32 %v546, %v1058
    %v2083 = vsub.f32 %v547, %v1059
    %v2084 = vsub.f32 %v548, %v1060
    %v2085 = vsub.f32 %v549, %v1061
    %v2086 = vsub.f32 %v550, %v1062
    %v2087 = vsub.f32 %v551, %v1063
    %v2088 = vsub.f32 %v552, %v1064
    %v2089 = vsub.f32 %v553, %v1065
    %v2090 = vsub.f32 %v554, %v1066
    %v2091 = vsub.f32 %v555, %v1067
    %v2092 = vsub.f32 %v556, %v1068
    %v2093 = vsub.f32 %v557, %v1069
    %v2094 = vsub.f32 %v558, %v1070
    %v2095 = vsub.f32 %v559, %v1071
    %v2096 = vsub.f32 %v560, %v1072
    %v2097 = vsub.f32 %v561, %v1073
    %v2098 = vsub.f32 %v562, %v1074
    %v2099 = vsub.f32 %v563, %v1075
    %v2100 = vsub.f32 %v564, %v1076
    %v2101 = vsub.f32 %v565, %v1077
    %v2102 = vsub.f32 %v566, %v1078
    %v2103 = vsub.f32 %v567, %v1079
    %v2104 = vsub.f32 %v568, %v1080
    %v2105 = vsub.f32 %v569, %v1081
    %v2106 = vsub.f32 %v570, %v1082
    %v2107 = vsub.f32 %v571, %v1083
    %v2108 = vsub.f32 %v572, %v1084
    %v2109 = vsub.f32 %v573, %v1085
    %v2110 = vsub.f32 %v574, %v1086
    %v2111 = vsub.f32 %v575, %v1087
    %v2112 = vsub.f32 %v576, %v1088
    %v2113 = vsub.f32 %v577, %v1089
    %v2114 = vsub.f32 %v578, %v1090
    %v2115 = vsub.f32 %v579, %v1091
    %v2116 = vsub.f32 %v580, %v1092
    %v2117 = vsub.f32 %v581, %v1093
    %v2118 = vsub.f32 %v582, %v1094
    %v2119 = vsub.f32 %v583, %v1095
    %v2120 = vsub.f32 %v584, %v1096
    %v2121 = vsub.f32 %v585, %v1097
    %v2122 = vsub.f32 %v586, %v1098
    %v2123 = vsub.f32 %v587, %v1099
    %v2124 = vsub.f32 %v588, %v1100
    %v2125 = vsub.f32 %v589, %v1101
    %v2126 = vsub.f32 %v590, %v1102
    %v2127 = vsub.f32 %v591, %v1103
    %v2128 = vsub.f32 %v592, %v1104
    %v2129 = vsub.f32 %v593, %v1105
    %v2130 = vsub.f32 %v594, %v1106
    %v2131 = vsub.f32 %v595, %v1107
    %v2132 = vsub.f32 %v596, %v1108
    %v2133 = vmul.f32 %v1109, %v1621
    %v2134 = vmul.f32 %v1110, %v1622
    %v2135 = vmul.f32 %v1111, %v1623
    %v2136 = vmul.f32 %v1112, %v1624
    %v2137 = vmul.f32 %v1113, %v1625
    %v2138 = vmul.f32 %v1114, %v1626
    %v2139 = vmul.f32 %v1115, %v1627
    %v2140 = vmul.f32 %v1116, %v1628
    %v2141 = vmul.f32 %v1117, %v1629
    %v2142 = vmul.f32 %v1118, %v1630
    %v2143 = vmul.f32 %v1119, %v1631
    %v2144 = vmul.f32 %v1120, %v1632
    %v2145 = vmul.f32 %v1121, %v1633
    %v2146 = vmul.f32 %v1122, %v1634
    %v2147 = vmul.f32 %v1123, %v1635
    %v2148 = vmul.f32 %v1124, %v1636
    %v2149 = vmul.f32 %v1125, %v1637
    %v2150 = vmul.f32 %v1126, %v1638
    %v2151 = vmul.f32 %v1127, %v1639
    %v2152 = vmul.f32 %v1128, %v1640
    %v2153 = vmul.f32 %v1129, %v1641
    %v2154 = vmul.f32 %v1130, %v1642
    %v2155 = vmul.f32 %v1131, %v1643
    %v2156 = vmul.f32 %v1132, %v1644
    %v2157 = vmul.f32 %v1133, %v1645
    %v2158 = vmul.f32 %v1134, %v1646
    %v2159 = vmul.f32 %v1135, %v1647
    %v2160 = vmul.f32 %v1136, %v1648
    %v2161 = vmul.f32 %v1137, %v1649
    %v2162 = vmul.f32 %v1138, %v1650
    %v2163 = vmul.f32 %v1139, %v1651
    %v2164 = vmul.f32 %v1140, %v1652
    %v2165 = vmul.f32 %v1141, %v1653
    %v2166 = vmul.f32 %v1142, %v1654
    %v2167 = vmul.f32 %v1143, %v1655
    %v2168 = vmul.f32 %v1144, %v1656
    %v2169 = vmul.f32 %v1145, %v1657
    %v2170 = vmul.f32 %v1146, %v1658
    %v2171 = vmul.f32 %v1147, %v1659
    %v2172 = vmul.f32 %v1148, %v1660
    %v2173 = vmul.f32 %v1149, %v1661
    %v2174 = vmul.f32 %v1150, %v1662
    %v2175 = vmul.f32 %v1151, %v1663
    %v2176 = vmul.f32 %v1152, %v1664
    %v2177 = vmul.f32 %v1153, %v1665
    %v2178 = vmul.f32 %v1154, %v1666
    %v2179 = vmul.f32 %v1155, %v1667
    %v2180 = vmul.f32 %v1156, %v1668
    %v2181 = vmul.f32 %v1157, %v1669
    %v2182 = vmul.f32 %v1158, %v1670
    %v2183 = vmul.f32 %v1159, %v1671
    %v2184 = vmul.f32 %v1160, %v1672
    %v2185 = vmul.f32 %v1161, %v1673
    %v2186 = vmul.f32 %v1162, %v1674
    %v2187 = vmul.f32 %v1163, %v1675
    %v2188 = vmul.f32 %v1164, %v1676
    %v2189 = vmul.f32 %v1165, %v1677
    %v2190 = vmul.f32 %v1166, %v1678
    %v2191 = vmul.f32 %v1167, %v1679
    %v2192 = vmul.f32 %v1168, %v1680
    %v2193 = vmul.f32 %v1169, %v1681
    %v2194 = vmul.f32 %v1170, %v1682
    %v2195 = vmul.f32 %v1171, %v1683
    %v2196 = vmul.f32 %v1172, %v1684
    %v2197 = vmul.f32 %v1173, %v1685
    %v2198 = vmul.f32 %v1174, %v1686
    %v2199 = vmul.f32 %v1175, %v1687
    %v2200 = vmul.f32 %v1176, %v1688
    %v2201 = vmul.f32 %v1177, %v1689
    %v2202 = vmul.f32 %v1178, %v1690
    %v2203 = vmul.f32 %v1179, %v1691
    %v2204 = vmul.f32 %v1180, %v1692
    %v2205 = vmul.f32 %v1181, %v1693
    %v2206 = vmul.f32 %v1182, %v1694
    %v2207 = vmul.f32 %v1183, %v1695
    %v2208 = vmul.f32 %v1184, %v1696
    %v2209 = vmul.f32 %v1185, %v1697
    %v2210 = vmul.f32 %v1186, %v1698
    %v2211 = vmul.f32 %v1187, %v1699
    %v2212 = vmul.f32 %v1188, %v1700
    %v2213 = vmul.f32 %v1189, %v1701
    %v2214 = vmul.f32 %v1190, %v1702
    %v2215 = vmul.f32 %v1191, %v1703
    %v2216 = vmul.f32 %v1192, %v1704
    %v2217 = vmul.f32 %v1193, %v1705
    %v2218 = vmul.f32 %v1194, %v1706
    %v2219 = vmul.f32 %v1195, %v1707
    %v2220 = vmul.f32 %v1196, %v1708
    %v2221 = vmul.f32 %v1197, %v1709
    %v2222 = vmul.f32 %v1198, %v1710
    %v2223 = vmul.f32 %v1199, %v1711
    %v2224 = vmul.f32 %v1200, %v1712
    %v2225 = vmul.f32 %v1201, %v1713
    %v2226 = vmul.f32 %v1202, %v1714
    %v2227 = vmul.f32 %v1203, %v1715
    %v2228 = vmul.f32 %v1204, %v1716
    %v2229 = vmul.f32 %v1205, %v1717
    %v2230 = vmul.f32 %v1206, %v1718
    %v2231 = vmul.f32 %v1207, %v1719
    %v2232 = vmul.f32 %v1208, %v1720
    %v2233 = vmul.f32 %v1209, %v1721
    %v2234 = vmul.f32 %v1210, %v1722
    %v2235 = vmul.f32 %v1211, %v1723
    %v2236 = vmul.f32 %v1212, %v1724
    %v2237 = vmul.f32 %v1213, %v1725
    %v2238 = vmul.f32 %v1214, %v1726
    %v2239 = vmul.f32 %v1215, %v1727
    %v2240 = vmul.f32 %v1216, %v1728
    %v2241 = vmul.f32 %v1217, %v1729
    %v2242 = vmul.f32 %v1218, %v1730
    %v2243 = vmul.f32 %v1219, %v1731
    %v2244 = vmul.f32 %v1220, %v1732
    %v2245 = vmul.f32 %v1221, %v1733
    %v2246 = vmul.f32 %v1222, %v1734
    %v2247 = vmul.f32 %v1223, %v1735
    %v2248 = vmul.f32 %v1224, %v1736
    %v2249 = vmul.f32 %v1225, %v1737
    %v2250 = vmul.f32 %v1226, %v1738
    %v2251 = vmul.f32 %v1227, %v1739
    %v2252 = vmul.f32 %v1228, %v1740
    %v2253 = vmul.f32 %v1229, %v1741
    %v2254 = vmul.f32 %v1230, %v1742
    %v2255 = vmul.f32 %v1231, %v1743
    %v2256 = vmul.f32 %v1232, %v1744
    %v2257 = vmul.f32 %v1233, %v1745
    %v2258 = vmul.f32 %v1234, %v1746
    %v2259 = vmul.f32 %v1235, %v1747
    %v2260 = vmul.f32 %v1236, %v1748
    %v2261 = vmul.f32 %v1237, %v1749
    %v2262 = vmul.f32 %v1238, %v1750
    %v2263 = vmul.f32 %v1239, %v1751
    %v2264 = vmul.f32 %v1240, %v1752
    %v2265 = vmul.f32 %v1241, %v1753
    %v2266 = vmul.f32 %v1242, %v1754
    %v2267 = vmul.f32 %v1243, %v1755
    %v2268 = vmul.f32 %v1244, %v1756
    %v2269 = vmul.f32 %v1245, %v1757
    %v2270 = vmul.f32 %v1246, %v1758
    %v2271 = vmul.f32 %v1247, %v1759
    %v2272 = vmul.f32 %v1248, %v1760
    %v2273 = vmul.f32 %v1249, %v1761
    %v2274 = vmul.f32 %v1250, %v1762
    %v2275 = vmul.f32 %v1251, %v1763
    %v2276 = vmul.f32 %v1252, %v1764
    %v2277 = vmul.f32 %v1253, %v1765
    %v2278 = vmul.f32 %v1254, %v1766
    %v2279 = vmul.f32 %v1255, %v1767
    %v2280 = vmul.f32 %v1256, %v1768
    %v2281 = vmul.f32 %v1257, %v1769
    %v2282 = vmul.f32 %v1258, %v1770
    %v2283 = vmul.f32 %v1259, %v1771
    %v2284 = vmul.f32 %v1260, %v1772
    %v2285 = vmul.f32 %v1261, %v1773
    %v2286 = vmul.f32 %v1262, %v1774
    %v2287 = vmul.f32 %v1263, %v1775
    %v2288 = vmul.f32 %v1264, %v1776
    %v2289 = vmul.f32 %v1265, %v1777
    %v2290 = vmul.f32 %v1266, %v1778
    %v2291 = vmul.f32 %v1267, %v1779
    %v2292 = vmul.f32 %v1268, %v1780
    %v2293 = vmul.f32 %v1269, %v1781
    %v2294 = vmul.f32 %v1270, %v1782
    %v2295 = vmul.f32 %v1271, %v1783
    %v2296 = vmul.f32 %v1272, %v1784
    %v2297 = vmul.f32 %v1273, %v1785
    %v2298 = vmul.f32 %v1274, %v1786
    %v2299 = vmul.f32 %v1275, %v1787
    %v2300 = vmul.f32 %v1276, %v1788
    %v2301 = vmul.f32 %v1277, %v1789
    %v2302 = vmul.f32 %v1278, %v1790
    %v2303 = vmul.f32 %v1279, %v1791
    %v2304 = vmul.f32 %v1280, %v1792
    %v2305 = vmul.f32 %v1281, %v1793
    %v2306 = vmul.f32 %v1282, %v1794
    %v2307 = vmul.f32 %v1283, %v1795
    %v2308 = vmul.f32 %v1284, %v1796
    %v2309 = vmul.f32 %v1285, %v1797
    %v2310 = vmul.f32 %v1286, %v1798
    %v2311 = vmul.f32 %v1287, %v1799
    %v2312 = vmul.f32 %v1288, %v1800
    %v2313 = vmul.f32 %v1289, %v1801
    %v2314 = vmul.f32 %v1290, %v1802
    %v2315 = vmul.f32 %v1291, %v1803
    %v2316 = vmul.f32 %v1292, %v1804
    %v2317 = vmul.f32 %v1293, %v1805
    %v2318 = vmul.f32 %v1294, %v1806
    %v2319 = vmul.f32 %v1295, %v1807
    %v2320 = vmul.f32 %v1296, %v1808
    %v2321 = vmul.f32 %v1297, %v1809
    %v2322 = vmul.f32 %v1298, %v1810
    %v2323 = vmul.f32 %v1299, %v1811
    %v2324 = vmul.f32 %v1300, %v1812
    %v2325 = vmul.f32 %v1301, %v1813
    %v2326 = vmul.f32 %v1302, %v1814
    %v2327 = vmul.f32 %v1303, %v1815
    %v2328 = vmul.f32 %v1304, %v1816
    %v2329 = vmul.f32 %v1305, %v1817
    %v2330 = vmul.f32 %v1306, %v1818
    %v2331 = vmul.f32 %v1307, %v1819
    %v2332 = vmul.f32 %v1308, %v1820
    %v2333 = vmul.f32 %v1309, %v1821
    %v2334 = vmul.f32 %v1310, %v1822
    %v2335 = vmul.f32 %v1311, %v1823
    %v2336 = vmul.f32 %v1312, %v1824
    %v2337 = vmul.f32 %v1313, %v1825
    %v2338 = vmul.f32 %v1314, %v1826
    %v2339 = vmul.f32 %v1315, %v1827
    %v2340 = vmul.f32 %v1316, %v1828
    %v2341 = vmul.f32 %v1317, %v1829
    %v2342 = vmul.f32 %v1318, %v1830
    %v2343 = vmul.f32 %v1319, %v1831
    %v2344 = vmul.f32 %v1320, %v1832
    %v2345 = vmul.f32 %v1321, %v1833
    %v2346 = vmul.f32 %v1322, %v1834
    %v2347 = vmul.f32 %v1323, %v1835
    %v2348 = vmul.f32 %v1324, %v1836
    %v2349 = vmul.f32 %v1325, %v1837
    %v2350 = vmul.f32 %v1326, %v1838
    %v2351 = vmul.f32 %v1327, %v1839
    %v2352 = vmul.f32 %v1328, %v1840
    %v2353 = vmul.f32 %v1329, %v1841
    %v2354 = vmul.f32 %v1330, %v1842
    %v2355 = vmul.f32 %v1331, %v1843
    %v2356 = vmul.f32 %v1332, %v1844
    %v2357 = vmul.f32 %v1333, %v1845
    %v2358 = vmul.f32 %v1334, %v1846
    %v2359 = vmul.f32 %v1335, %v1847
    %v2360 = vmul.f32 %v1336, %v1848
    %v2361 = vmul.f32 %v1337, %v1849
    %v2362 = vmul.f32 %v1338, %v1850
    %v2363 = vmul.f32 %v1339, %v1851
    %v2364 = vmul.f32 %v1340, %v1852
    %v2365 = vmul.f32 %v1341, %v1853
    %v2366 = vmul.f32 %v1342, %v1854
    %v2367 = vmul.f32 %v1343, %v1855
    %v2368 = vmul.f32 %v1344, %v1856
    %v2369 = vmul.f32 %v1345, %v1857
    %v2370 = vmul.f32 %v1346, %v1858
    %v2371 = vmul.f32 %v1347, %v1859
    %v2372 = vmul.f32 %v1348, %v1860
    %v2373 = vmul.f32 %v1349, %v1861
    %v2374 = vmul.f32 %v1350, %v1862
    %v2375 = vmul.f32 %v1351, %v1863
    %v2376 = vmul.f32 %v1352, %v1864
    %v2377 = vmul.f32 %v1353, %v1865
    %v2378 = vmul.f32 %v1354, %v1866
    %v2379 = vmul.f32 %v1355, %v1867
    %v2380 = vmul.f32 %v1356, %v1868
    %v2381 = vmul.f32 %v1357, %v1869
    %v2382 = vmul.f32 %v1358, %v1870
    %v2383 = vmul.f32 %v1359, %v1871
    %v2384 = vmul.f32 %v1360, %v1872
    %v2385 = vmul.f32 %v1361, %v1873
    %v2386 = vmul.f32 %v1362, %v1874
    %v2387 = vmul.f32 %v1363, %v1875
    %v2388 = vmul.f32 %v1364, %v1876
    %v2389 = vmul.f32 %v1365, %v1877
    %v2390 = vmul.f32 %v1366, %v1878
    %v2391 = vmul.f32 %v1367, %v1879
    %v2392 = vmul.f32 %v1368, %v1880
    %v2393 = vmul.f32 %v1369, %v1881
    %v2394 = vmul.f32 %v1370, %v1882
    %v2395 = vmul.f32 %v1371, %v1883
    %v2396 = vmul.f32 %v1372, %v1884
    %v2397 = vmul.f32 %v1373, %v1885
    %v2398 = vmul.f32 %v1374, %v1886
    %v2399 = vmul.f32 %v1375, %v1887
    %v2400 = vmul.f32 %v1376, %v1888
    %v2401 = vmul.f32 %v1377, %v1889
    %v2402 = vmul.f32 %v1378, %v1890
    %v2403 = vmul.f32 %v1379, %v1891
    %v2404 = vmul.f32 %v1380, %v1892
    %v2405 = vmul.f32 %v1381, %v1893
    %v2406 = vmul.f32 %v1382, %v1894
    %v2407 = vmul.f32 %v1383, %v1895
    %v2408 = vmul.f32 %v1384, %v1896
    %v2409 = vmul.f32 %v1385, %v1897
    %v2410 = vmul.f32 %v1386, %v1898
    %v2411 = vmul.f32 %v1387, %v1899
    %v2412 = vmul.f32 %v1388, %v1900
    %v2413 = vmul.f32 %v1389, %v1901
    %v2414 = vmul.f32 %v1390, %v1902
    %v2415 = vmul.f32 %v1391, %v1903
    %v2416 = vmul.f32 %v1392, %v1904
    %v2417 = vmul.f32 %v1393, %v1905
    %v2418 = vmul.f32 %v1394, %v1906
    %v2419 = vmul.f32 %v1395, %v1907
    %v2420 = vmul.f32 %v1396, %v1908
    %v2421 = vmul.f32 %v1397, %v1909
    %v2422 = vmul.f32 %v1398, %v1910
    %v2423 = vmul.f32 %v1399, %v1911
    %v2424 = vmul.f32 %v1400, %v1912
    %v2425 = vmul.f32 %v1401, %v1913
    %v2426 = vmul.f32 %v1402, %v1914
    %v2427 = vmul.f32 %v1403, %v1915
    %v2428 = vmul.f32 %v1404, %v1916
    %v2429 = vmul.f32 %v1405, %v1917
    %v2430 = vmul.f32 %v1406, %v1918
    %v2431 = vmul.f32 %v1407, %v1919
    %v2432 = vmul.f32 %v1408, %v1920
    %v2433 = vmul.f32 %v1409, %v1921
    %v2434 = vmul.f32 %v1410, %v1922
    %v2435 = vmul.f32 %v1411, %v1923
    %v2436 = vmul.f32 %v1412, %v1924
    %v2437 = vmul.f32 %v1413, %v1925
    %v2438 = vmul.f32 %v1414, %v1926
    %v2439 = vmul.f32 %v1415, %v1927
    %v2440 = vmul.f32 %v1416, %v1928
    %v2441 = vmul.f32 %v1417, %v1929
    %v2442 = vmul.f32 %v1418, %v1930
    %v2443 = vmul.f32 %v1419, %v1931
    %v2444 = vmul.f32 %v1420, %v1932
    %v2445 = vmul.f32 %v1421, %v1933
    %v2446 = vmul.f32 %v1422, %v1934
    %v2447 = vmul.f32 %v1423, %v1935
    %v2448 = vmul.f32 %v1424, %v1936
    %v2449 = vmul.f32 %v1425, %v1937
    %v2450 = vmul.f32 %v1426, %v1938
    %v2451 = vmul.f32 %v1427, %v1939
    %v2452 = vmul.f32 %v1428, %v1940
    %v2453 = vmul.f32 %v1429, %v1941
    %v2454 = vmul.f32 %v1430, %v1942
    %v2455 = vmul.f32 %v1431, %v1943
    %v2456 = vmul.f32 %v1432, %v1944
    %v2457 = vmul.f32 %v1433, %v1945
    %v2458 = vmul.f32 %v1434, %v1946
    %v2459 = vmul.f32 %v1435, %v1947
    %v2460 = vmul.f32 %v1436, %v1948
    %v2461 = vmul.f32 %v1437, %v1949
    %v2462 = vmul.f32 %v1438, %v1950
    %v2463 = vmul.f32 %v1439, %v1951
    %v2464 = vmul.f32 %v1440, %v1952
    %v2465 = vmul.f32 %v1441, %v1953
    %v2466 = vmul.f32 %v1442, %v1954
    %v2467 = vmul.f32 %v1443, %v1955
    %v2468 = vmul.f32 %v1444, %v1956
    %v2469 = vmul.f32 %v1445, %v1957
    %v2470 = vmul.f32 %v1446, %v1958
    %v2471 = vmul.f32 %v1447, %v1959
    %v2472 = vmul.f32 %v1448, %v1960
    %v2473 = vmul.f32 %v1449, %v1961
    %v2474 = vmul.f32 %v1450, %v1962
    %v2475 = vmul.f32 %v1451, %v1963
    %v2476 = vmul.f32 %v1452, %v1964
    %v2477 = vmul.f32 %v1453, %v1965
    %v2478 = vmul.f32 %v1454, %v1966
    %v2479 = vmul.f32 %v1455, %v1967
    %v2480 = vmul.f32 %v1456, %v1968
    %v2481 = vmul.f32 %v1457, %v1969
    %v2482 = vmul.f32 %v1458, %v1970
    %v2483 = vmul.f32 %v1459, %v1971
    %v2484 = vmul.f32 %v1460, %v1972
    %v2485 = vmul.f32 %v1461, %v1973
    %v2486 = vmul.f32 %v1462, %v1974
    %v2487 = vmul.f32 %v1463, %v1975
    %v2488 = vmul.f32 %v1464, %v1976
    %v2489 = vmul.f32 %v1465, %v1977
    %v2490 = vmul.f32 %v1466, %v1978
    %v2491 = vmul.f32 %v1467, %v1979
    %v2492 = vmul.f32 %v1468, %v1980
    %v2493 = vmul.f32 %v1469, %v1981
    %v2494 = vmul.f32 %v1470, %v1982
    %v2495 = vmul.f32 %v1471, %v1983
    %v2496 = vmul.f32 %v1472, %v1984
    %v2497 = vmul.f32 %v1473, %v1985
    %v2498 = vmul.f32 %v1474, %v1986
    %v2499 = vmul.f32 %v1475, %v1987
    %v2500 = vmul.f32 %v1476, %v1988
    %v2501 = vmul.f32 %v1477, %v1989
    %v2502 = vmul.f32 %v1478, %v1990
    %v2503 = vmul.f32 %v1479, %v1991
    %v2504 = vmul.f32 %v1480, %v1992
    %v2505 = vmul.f32 %v1481, %v1993
    %v2506 = vmul.f32 %v1482, %v1994
    %v2507 = vmul.f32 %v1483, %v1995
    %v2508 = vmul.f32 %v1484, %v1996
    %v2509 = vmul.f32 %v1485, %v1997
    %v2510 = vmul.f32 %v1486, %v1998
    %v2511 = vmul.f32 %v1487, %v1999
    %v2512 = vmul.f32 %v1488, %v2000
    %v2513 = vmul.f32 %v1489, %v2001
    %v2514 = vmul.f32 %v1490, %v2002
    %v2515 = vmul.f32 %v1491, %v2003
    %v2516 = vmul.f32 %v1492, %v2004
    %v2517 = vmul.f32 %v1493, %v2005
    %v2518 = vmul.f32 %v1494, %v2006
    %v2519 = vmul.f32 %v1495, %v2007
    %v2520 = vmul.f32 %v1496, %v2008
    %v2521 = vmul.f32 %v1497, %v2009
    %v2522 = vmul.f32 %v1498, %v2010
    %v2523 = vmul.f32 %v1499, %v2011
    %v2524 = vmul.f32 %v1500, %v2012
    %v2525 = vmul.f32 %v1501, %v2013
    %v2526 = vmul.f32 %v1502, %v2014
    %v2527 = vmul.f32 %v1503, %v2015
    %v2528 = vmul.f32 %v1504, %v2016
    %v2529 = vmul.f32 %v1505, %v2017
    %v2530 = vmul.f32 %v1506, %v2018
    %v2531 = vmul.f32 %v1507, %v2019
    %v2532 = vmul.f32 %v1508, %v2020
    %v2533 = vmul.f32 %v1509, %v2021
    %v2534 = vmul.f32 %v1510, %v2022
    %v2535 = vmul.f32 %v1511, %v2023
    %v2536 = vmul.f32 %v1512, %v2024
    %v2537 = vmul.f32 %v1513, %v2025
    %v2538 = vmul.f32 %v1514, %v2026
    %v2539 = vmul.f32 %v1515, %v2027
    %v2540 = vmul.f32 %v1516, %v2028
    %v2541 = vmul.f32 %v1517, %v2029
    %v2542 = vmul.f32 %v1518, %v2030
    %v2543 = vmul.f32 %v1519, %v2031
    %v2544 = vmul.f32 %v1520, %v2032
    %v2545 = vmul.f32 %v1521, %v2033
    %v2546 = vmul.f32 %v1522, %v2034
    %v2547 = vmul.f32 %v1523, %v2035
    %v2548 = vmul.f32 %v1524, %v2036
    %v2549 = vmul.f32 %v1525, %v2037
    %v2550 = vmul.f32 %v1526, %v2038
    %v2551 = vmul.f32 %v1527, %v2039
    %v2552 = vmul.f32 %v1528, %v2040
    %v2553 = vmul.f32 %v1529, %v2041
    %v2554 = vmul.f32 %v1530, %v2042
    %v2555 = vmul.f32 %v1531, %v2043
    %v2556 = vmul.f32 %v1532, %v2044
    %v2557 = vmul.f32 %v1533, %v2045
    %v2558 = vmul.f32 %v1534, %v2046
    %v2559 = vmul.f32 %v1535, %v2047
    %v2560 = vmul.f32 %v1536, %v2048
    %v2561 = vmul.f32 %v1537, %v2049
    %v2562 = vmul.f32 %v1538, %v2050
    %v2563 = vmul.f32 %v1539, %v2051
    %v2564 = vmul.f32 %v1540, %v2052
    %v2565 = vmul.f32 %v1541, %v2053
    %v2566 = vmul.f32 %v1542, %v2054
    %v2567 = vmul.f32 %v1543, %v2055
    %v2568 = vmul.f32 %v1544, %v2056
    %v2569 = vmul.f32 %v1545, %v2057
    %v2570 = vmul.f32 %v1546, %v2058
    %v2571 = vmul.f32 %v1547, %v2059
    %v2572 = vmul.f32 %v1548, %v2060
    %v2573 = vmul.f32 %v1549, %v2061
    %v2574 = vmul.f32 %v1550, %v2062
    %v2575 = vmul.f32 %v1551, %v2063
    %v2576 = vmul.f32 %v1552, %v2064
    %v2577 = vmul.f32 %v1553, %v2065
    %v2578 = vmul.f32 %v1554, %v2066
    %v2579 = vmul.f32 %v1555, %v2067
    %v2580 = vmul.f32 %v1556, %v2068
    %v2581 = vmul.f32 %v1557, %v2069
    %v2582 = vmul.f32 %v1558, %v2070
    %v2583 = vmul.f32 %v1559, %v2071
    %v2584 = vmul.f32 %v1560, %v2072
    %v2585 = vmul.f32 %v1561, %v2073
    %v2586 = vmul.f32 %v1562, %v2074
    %v2587 = vmul.f32 %v1563, %v2075
    %v2588 = vmul.f32 %v1564, %v2076
    %v2589 = vmul.f32 %v1565, %v2077
    %v2590 = vmul.f32 %v1566, %v2078
    %v2591 = vmul.f32 %v1567, %v2079
    %v2592 = vmul.f32 %v1568, %v2080
    %v2593 = vmul.f32 %v1569, %v2081
    %v2594 = vmul.f32 %v1570, %v2082
    %v2595 = vmul.f32 %v1571, %v2083
    %v2596 = vmul.f32 %v1572, %v2084
    %v2597 = vmul.f32 %v1573, %v2085
    %v2598 = vmul.f32 %v1574, %v2086
    %v2599 = vmul.f32 %v1575, %v2087
    %v2600 = vmul.f32 %v1576, %v2088
    %v2601 = vmul.f32 %v1577, %v2089
    %v2602 = vmul.f32 %v1578, %v2090
    %v2603 = vmul.f32 %v1579, %v2091
    %v2604 = vmul.f32 %v1580, %v2092
    %v2605 = vmul.f32 %v1581, %v2093
    %v2606 = vmul.f32 %v1582, %v2094
    %v2607 = vmul.f32 %v1583, %v2095
    %v2608 = vmul.f32 %v1584, %v2096
    %v2609 = vmul.f32 %v1585, %v2097
    %v2610 = vmul.f32 %v1586, %v2098
    %v2611 = vmul.f32 %v1587, %v2099
    %v2612 = vmul.f32 %v1588, %v2100
    %v2613 = vmul.f32 %v1589, %v2101
    %v2614 = vmul.f32 %v1590, %v2102
    %v2615 = vmul.f32 %v1591, %v2103
    %v2616 = vmul.f32 %v1592, %v2104
    %v2617 = vmul.f32 %v1593, %v2105
    %v2618 = vmul.f32 %v1594, %v2106
    %v2619 = vmul.f32 %v1595, %v2107
    %v2620 = vmul.f32 %v1596, %v2108
    %v2621 = vmul.f32 %v1597, %v2109
    %v2622 = vmul.f32 %v1598, %v2110
    %v2623 = vmul.f32 %v1599, %v2111
    %v2624 = vmul.f32 %v1600, %v2112
    %v2625 = vmul.f32 %v1601, %v2113
    %v2626 = vmul.f32 %v1602, %v2114
    %v2627 = vmul.f32 %v1603, %v2115
    %v2628 = vmul.f32 %v1604, %v2116
    %v2629 = vmul.f32 %v1605, %v2117
    %v2630 = vmul.f32 %v1606, %v2118
    %v2631 = vmul.f32 %v1607, %v2119
    %v2632 = vmul.f32 %v1608, %v2120
    %v2633 = vmul.f32 %v1609, %v2121
    %v2634 = vmul.f32 %v1610, %v2122
    %v2635 = vmul.f32 %v1611, %v2123
    %v2636 = vmul.f32 %v1612, %v2124
    %v2637 = vmul.f32 %v1613, %v2125
    %v2638 = vmul.f32 %v1614, %v2126
    %v2639 = vmul.f32 %v1615, %v2127
    %v2640 = vmul.f32 %v1616, %v2128
    %v2641 = vmul.f32 %v1617, %v2129
    %v2642 = vmul.f32 %v1618, %v2130
    %v2643 = vmul.f32 %v1619, %v2131
    %v2644 = vmul.f32 %v1620, %v2132
    %v2645 = vmul.f32 %v2133, %v1621
    %v2646 = vmul.f32 %v2134, %v1622
    %v2647 = vmul.f32 %v2135, %v1623
    %v2648 = vmul.f32 %v2136, %v1624
    %v2649 = vmul.f32 %v2137, %v1625
    %v2650 = vmul.f32 %v2138, %v1626
    %v2651 = vmul.f32 %v2139, %v1627
    %v2652 = vmul.f32 %v2140, %v1628
    %v2653 = vmul.f32 %v2141, %v1629
    %v2654 = vmul.f32 %v2142, %v1630
    %v2655 = vmul.f32 %v2143, %v1631
    %v2656 = vmul.f32 %v2144, %v1632
    %v2657 = vmul.f32 %v2145, %v1633
    %v2658 = vmul.f32 %v2146, %v1634
    %v2659 = vmul.f32 %v2147, %v1635
    %v2660 = vmul.f32 %v2148, %v1636
    %v2661 = vmul.f32 %v2149, %v1637
    %v2662 = vmul.f32 %v2150, %v1638
    %v2663 = vmul.f32 %v2151, %v1639
    %v2664 = vmul.f32 %v2152, %v1640
    %v2665 = vmul.f32 %v2153, %v1641
    %v2666 = vmul.f32 %v2154, %v1642
    %v2667 = vmul.f32 %v2155, %v1643
    %v2668 = vmul.f32 %v2156, %v1644
    %v2669 = vmul.f32 %v2157, %v1645
    %v2670 = vmul.f32 %v2158, %v1646
    %v2671 = vmul.f32 %v2159, %v1647
    %v2672 = vmul.f32 %v2160, %v1648
    %v2673 = vmul.f32 %v2161, %v1649
    %v2674 = vmul.f32 %v2162, %v1650
    %v2675 = vmul.f32 %v2163, %v1651
    %v2676 = vmul.f32 %v2164, %v1652
    %v2677 = vmul.f32 %v2165, %v1653
    %v2678 = vmul.f32 %v2166, %v1654
    %v2679 = vmul.f32 %v2167, %v1655
    %v2680 = vmul.f32 %v2168, %v1656
    %v2681 = vmul.f32 %v2169, %v1657
    %v2682 = vmul.f32 %v2170, %v1658
    %v2683 = vmul.f32 %v2171, %v1659
    %v2684 = vmul.f32 %v2172, %v1660
    %v2685 = vmul.f32 %v2173, %v1661
    %v2686 = vmul.f32 %v2174, %v1662
    %v2687 = vmul.f32 %v2175, %v1663
    %v2688 = vmul.f32 %v2176, %v1664
    %v2689 = vmul.f32 %v2177, %v1665
    %v2690 = vmul.f32 %v2178, %v1666
    %v2691 = vmul.f32 %v2179, %v1667
    %v2692 = vmul.f32 %v2180, %v1668
    %v2693 = vmul.f32 %v2181, %v1669
    %v2694 = vmul.f32 %v2182, %v1670
    %v2695 = vmul.f32 %v2183, %v1671
    %v2696 = vmul.f32 %v2184, %v1672
    %v2697 = vmul.f32 %v2185, %v1673
    %v2698 = vmul.f32 %v2186, %v1674
    %v2699 = vmul.f32 %v2187, %v1675
    %v2700 = vmul.f32 %v2188, %v1676
    %v2701 = vmul.f32 %v2189, %v1677
    %v2702 = vmul.f32 %v2190, %v1678
    %v2703 = vmul.f32 %v2191, %v1679
    %v2704 = vmul.f32 %v2192, %v1680
    %v2705 = vmul.f32 %v2193, %v1681
    %v2706 = vmul.f32 %v2194, %v1682
    %v2707 = vmul.f32 %v2195, %v1683
    %v2708 = vmul.f32 %v2196, %v1684
    %v2709 = vmul.f32 %v2197, %v1685
    %v2710 = vmul.f32 %v2198, %v1686
    %v2711 = vmul.f32 %v2199, %v1687
    %v2712 = vmul.f32 %v2200, %v1688
    %v2713 = vmul.f32 %v2201, %v1689
    %v2714 = vmul.f32 %v2202, %v1690
    %v2715 = vmul.f32 %v2203, %v1691
    %v2716 = vmul.f32 %v2204, %v1692
    %v2717 = vmul.f32 %v2205, %v1693
    %v2718 = vmul.f32 %v2206, %v1694
    %v2719 = vmul.f32 %v2207, %v1695
    %v2720 = vmul.f32 %v2208, %v1696
    %v2721 = vmul.f32 %v2209, %v1697
    %v2722 = vmul.f32 %v2210, %v1698
    %v2723 = vmul.f32 %v2211, %v1699
    %v2724 = vmul.f32 %v2212, %v1700
    %v2725 = vmul.f32 %v2213, %v1701
    %v2726 = vmul.f32 %v2214, %v1702
    %v2727 = vmul.f32 %v2215, %v1703
    %v2728 = vmul.f32 %v2216, %v1704
    %v2729 = vmul.f32 %v2217, %v1705
    %v2730 = vmul.f32 %v2218, %v1706
    %v2731 = vmul.f32 %v2219, %v1707
    %v2732 = vmul.f32 %v2220, %v1708
    %v2733 = vmul.f32 %v2221, %v1709
    %v2734 = vmul.f32 %v2222, %v1710
    %v2735 = vmul.f32 %v2223, %v1711
    %v2736 = vmul.f32 %v2224, %v1712
    %v2737 = vmul.f32 %v2225, %v1713
    %v2738 = vmul.f32 %v2226, %v1714
    %v2739 = vmul.f32 %v2227, %v1715
    %v2740 = vmul.f32 %v2228, %v1716
    %v2741 = vmul.f32 %v2229, %v1717
    %v2742 = vmul.f32 %v2230, %v1718
    %v2743 = vmul.f32 %v2231, %v1719
    %v2744 = vmul.f32 %v2232, %v1720
    %v2745 = vmul.f32 %v2233, %v1721
    %v2746 = vmul.f32 %v2234, %v1722
    %v2747 = vmul.f32 %v2235, %v1723
    %v2748 = vmul.f32 %v2236, %v1724
    %v2749 = vmul.f32 %v2237, %v1725
    %v2750 = vmul.f32 %v2238, %v1726
    %v2751 = vmul.f32 %v2239, %v1727
    %v2752 = vmul.f32 %v2240, %v1728
    %v2753 = vmul.f32 %v2241, %v1729
    %v2754 = vmul.f32 %v2242, %v1730
    %v2755 = vmul.f32 %v2243, %v1731
    %v2756 = vmul.f32 %v2244, %v1732
    %v2757 = vmul.f32 %v2245, %v1733
    %v2758 = vmul.f32 %v2246, %v1734
    %v2759 = vmul.f32 %v2247, %v1735
    %v2760 = vmul.f32 %v2248, %v1736
    %v2761 = vmul.f32 %v2249, %v1737
    %v2762 = vmul.f32 %v2250, %v1738
    %v2763 = vmul.f32 %v2251, %v1739
    %v2764 = vmul.f32 %v2252, %v1740
    %v2765 = vmul.f32 %v2253, %v1741
    %v2766 = vmul.f32 %v2254, %v1742
    %v2767 = vmul.f32 %v2255, %v1743
    %v2768 = vmul.f32 %v2256, %v1744
    %v2769 = vmul.f32 %v2257, %v1745
    %v2770 = vmul.f32 %v2258, %v1746
    %v2771 = vmul.f32 %v2259, %v1747
    %v2772 = vmul.f32 %v2260, %v1748
    %v2773 = vmul.f32 %v2261, %v1749
    %v2774 = vmul.f32 %v2262, %v1750
    %v2775 = vmul.f32 %v2263, %v1751
    %v2776 = vmul.f32 %v2264, %v1752
    %v2777 = vmul.f32 %v2265, %v1753
    %v2778 = vmul.f32 %v2266, %v1754
    %v2779 = vmul.f32 %v2267, %v1755
    %v2780 = vmul.f32 %v2268, %v1756
    %v2781 = vmul.f32 %v2269, %v1757
    %v2782 = vmul.f32 %v2270, %v1758
    %v2783 = vmul.f32 %v2271, %v1759
    %v2784 = vmul.f32 %v2272, %v1760
    %v2785 = vmul.f32 %v2273, %v1761
    %v2786 = vmul.f32 %v2274, %v1762
    %v2787 = vmul.f32 %v2275, %v1763
    %v2788 = vmul.f32 %v2276, %v1764
    %v2789 = vmul.f32 %v2277, %v1765
    %v2790 = vmul.f32 %v2278, %v1766
    %v2791 = vmul.f32 %v2279, %v1767
    %v2792 = vmul.f32 %v2280, %v1768
    %v2793 = vmul.f32 %v2281, %v1769
    %v2794 = vmul.f32 %v2282, %v1770
    %v2795 = vmul.f32 %v2283, %v1771
    %v2796 = vmul.f32 %v2284, %v1772
    %v2797 = vmul.f32 %v2285, %v1773
    %v2798 = vmul.f32 %v2286, %v1774
    %v2799 = vmul.f32 %v2287, %v1775
    %v2800 = vmul.f32 %v2288, %v1776
    %v2801 = vmul.f32 %v2289, %v1777
    %v2802 = vmul.f32 %v2290, %v1778
    %v2803 = vmul.f32 %v2291, %v1779
    %v2804 = vmul.f32 %v2292, %v1780
    %v2805 = vmul.f32 %v2293, %v1781
    %v2806 = vmul.f32 %v2294, %v1782
    %v2807 = vmul.f32 %v2295, %v1783
    %v2808 = vmul.f32 %v2296, %v1784
    %v2809 = vmul.f32 %v2297, %v1785
    %v2810 = vmul.f32 %v2298, %v1786
    %v2811 = vmul.f32 %v2299, %v1787
    %v2812 = vmul.f32 %v2300, %v1788
    %v2813 = vmul.f32 %v2301, %v1789
    %v2814 = vmul.f32 %v2302, %v1790
    %v2815 = vmul.f32 %v2303, %v1791
    %v2816 = vmul.f32 %v2304, %v1792
    %v2817 = vmul.f32 %v2305, %v1793
    %v2818 = vmul.f32 %v2306, %v1794
    %v2819 = vmul.f32 %v2307, %v1795
    %v2820 = vmul.f32 %v2308, %v1796
    %v2821 = vmul.f32 %v2309, %v1797
    %v2822 = vmul.f32 %v2310, %v1798
    %v2823 = vmul.f32 %v2311, %v1799
    %v2824 = vmul.f32 %v2312, %v1800
    %v2825 = vmul.f32 %v2313, %v1801
    %v2826 = vmul.f32 %v2314, %v1802
    %v2827 = vmul.f32 %v2315, %v1803
    %v2828 = vmul.f32 %v2316, %v1804
    %v2829 = vmul.f32 %v2317, %v1805
    %v2830 = vmul.f32 %v2318, %v1806
    %v2831 = vmul.f32 %v2319, %v1807
    %v2832 = vmul.f32 %v2320, %v1808
    %v2833 = vmul.f32 %v2321, %v1809
    %v2834 = vmul.f32 %v2322, %v1810
    %v2835 = vmul.f32 %v2323, %v1811
    %v2836 = vmul.f32 %v2324, %v1812
    %v2837 = vmul.f32 %v2325, %v1813
    %v2838 = vmul.f32 %v2326, %v1814
    %v2839 = vmul.f32 %v2327, %v1815
    %v2840 = vmul.f32 %v2328, %v1816
    %v2841 = vmul.f32 %v2329, %v1817
    %v2842 = vmul.f32 %v2330, %v1818
    %v2843 = vmul.f32 %v2331, %v1819
    %v2844 = vmul.f32 %v2332, %v1820
    %v2845 = vmul.f32 %v2333, %v1821
    %v2846 = vmul.f32 %v2334, %v1822
    %v2847 = vmul.f32 %v2335, %v1823
    %v2848 = vmul.f32 %v2336, %v1824
    %v2849 = vmul.f32 %v2337, %v1825
    %v2850 = vmul.f32 %v2338, %v1826
    %v2851 = vmul.f32 %v2339, %v1827
    %v2852 = vmul.f32 %v2340, %v1828
    %v2853 = vmul.f32 %v2341, %v1829
    %v2854 = vmul.f32 %v2342, %v1830
    %v2855 = vmul.f32 %v2343, %v1831
    %v2856 = vmul.f32 %v2344, %v1832
    %v2857 = vmul.f32 %v2345, %v1833
    %v2858 = vmul.f32 %v2346, %v1834
    %v2859 = vmul.f32 %v2347, %v1835
    %v2860 = vmul.f32 %v2348, %v1836
    %v2861 = vmul.f32 %v2349, %v1837
    %v2862 = vmul.f32 %v2350, %v1838
    %v2863 = vmul.f32 %v2351, %v1839
    %v2864 = vmul.f32 %v2352, %v1840
    %v2865 = vmul.f32 %v2353, %v1841
    %v2866 = vmul.f32 %v2354, %v1842
    %v2867 = vmul.f32 %v2355, %v1843
    %v2868 = vmul.f32 %v2356, %v1844
    %v2869 = vmul.f32 %v2357, %v1845
    %v2870 = vmul.f32 %v2358, %v1846
    %v2871 = vmul.f32 %v2359, %v1847
    %v2872 = vmul.f32 %v2360, %v1848
    %v2873 = vmul.f32 %v2361, %v1849
    %v2874 = vmul.f32 %v2362, %v1850
    %v2875 = vmul.f32 %v2363, %v1851
    %v2876 = vmul.f32 %v2364, %v1852
    %v2877 = vmul.f32 %v2365, %v1853
    %v2878 = vmul.f32 %v2366, %v1854
    %v2879 = vmul.f32 %v2367, %v1855
    %v2880 = vmul.f32 %v2368, %v1856
    %v2881 = vmul.f32 %v2369, %v1857
    %v2882 = vmul.f32 %v2370, %v1858
    %v2883 = vmul.f32 %v2371, %v1859
    %v2884 = vmul.f32 %v2372, %v1860
    %v2885 = vmul.f32 %v2373, %v1861
    %v2886 = vmul.f32 %v2374, %v1862
    %v2887 = vmul.f32 %v2375, %v1863
    %v2888 = vmul.f32 %v2376, %v1864
    %v2889 = vmul.f32 %v2377, %v1865
    %v2890 = vmul.f32 %v2378, %v1866
    %v2891 = vmul.f32 %v2379, %v1867
    %v2892 = vmul.f32 %v2380, %v1868
    %v2893 = vmul.f32 %v2381, %v1869
    %v2894 = vmul.f32 %v2382, %v1870
    %v2895 = vmul.f32 %v2383, %v1871
    %v2896 = vmul.f32 %v2384, %v1872
    %v2897 = vmul.f32 %v2385, %v1873
    %v2898 = vmul.f32 %v2386, %v1874
    %v2899 = vmul.f32 %v2387, %v1875
    %v2900 = vmul.f32 %v2388, %v1876
    %v2901 = vmul.f32 %v2389, %v1877
    %v2902 = vmul.f32 %v2390, %v1878
    %v2903 = vmul.f32 %v2391, %v1879
    %v2904 = vmul.f32 %v2392, %v1880
    %v2905 = vmul.f32 %v2393, %v1881
    %v2906 = vmul.f32 %v2394, %v1882
    %v2907 = vmul.f32 %v2395, %v1883
    %v2908 = vmul.f32 %v2396, %v1884
    %v2909 = vmul.f32 %v2397, %v1885
    %v2910 = vmul.f32 %v2398, %v1886
    %v2911 = vmul.f32 %v2399, %v1887
    %v2912 = vmul.f32 %v2400, %v1888
    %v2913 = vmul.f32 %v2401, %v1889
    %v2914 = vmul.f32 %v2402, %v1890
    %v2915 = vmul.f32 %v2403, %v1891
    %v2916 = vmul.f32 %v2404, %v1892
    %v2917 = vmul.f32 %v2405, %v1893
    %v2918 = vmul.f32 %v2406, %v1894
    %v2919 = vmul.f32 %v2407, %v1895
    %v2920 = vmul.f32 %v2408, %v1896
    %v2921 = vmul.f32 %v2409, %v1897
    %v2922 = vmul.f32 %v2410, %v1898
    %v2923 = vmul.f32 %v2411, %v1899
    %v2924 = vmul.f32 %v2412, %v1900
    %v2925 = vmul.f32 %v2413, %v1901
    %v2926 = vmul.f32 %v2414, %v1902
    %v2927 = vmul.f32 %v2415, %v1903
    %v2928 = vmul.f32 %v2416, %v1904
    %v2929 = vmul.f32 %v2417, %v1905
    %v2930 = vmul.f32 %v2418, %v1906
    %v2931 = vmul.f32 %v2419, %v1907
    %v2932 = vmul.f32 %v2420, %v1908
    %v2933 = vmul.f32 %v2421, %v1909
    %v2934 = vmul.f32 %v2422, %v1910
    %v2935 = vmul.f32 %v2423, %v1911
    %v2936 = vmul.f32 %v2424, %v1912
    %v2937 = vmul.f32 %v2425, %v1913
    %v2938 = vmul.f32 %v2426, %v1914
    %v2939 = vmul.f32 %v2427, %v1915
    %v2940 = vmul.f32 %v2428, %v1916
    %v2941 = vmul.f32 %v2429, %v1917
    %v2942 = vmul.f32 %v2430, %v1918
    %v2943 = vmul.f32 %v2431, %v1919
    %v2944 = vmul.f32 %v2432, %v1920
    %v2945 = vmul.f32 %v2433, %v1921
    %v2946 = vmul.f32 %v2434, %v1922
    %v2947 = vmul.f32 %v2435, %v1923
    %v2948 = vmul.f32 %v2436, %v1924
    %v2949 = vmul.f32 %v2437, %v1925
    %v2950 = vmul.f32 %v2438, %v1926
    %v2951 = vmul.f32 %v2439, %v1927
    %v2952 = vmul.f32 %v2440, %v1928
    %v2953 = vmul.f32 %v2441, %v1929
    %v2954 = vmul.f32 %v2442, %v1930
    %v2955 = vmul.f32 %v2443, %v1931
    %v2956 = vmul.f32 %v2444, %v1932
    %v2957 = vmul.f32 %v2445, %v1933
    %v2958 = vmul.f32 %v2446, %v1934
    %v2959 = vmul.f32 %v2447, %v1935
    %v2960 = vmul.f32 %v2448, %v1936
    %v2961 = vmul.f32 %v2449, %v1937
    %v2962 = vmul.f32 %v2450, %v1938
    %v2963 = vmul.f32 %v2451, %v1939
    %v2964 = vmul.f32 %v2452, %v1940
    %v2965 = vmul.f32 %v2453, %v1941
    %v2966 = vmul.f32 %v2454, %v1942
    %v2967 = vmul.f32 %v2455, %v1943
    %v2968 = vmul.f32 %v2456, %v1944
    %v2969 = vmul.f32 %v2457, %v1945
    %v2970 = vmul.f32 %v2458, %v1946
    %v2971 = vmul.f32 %v2459, %v1947
    %v2972 = vmul.f32 %v2460, %v1948
    %v2973 = vmul.f32 %v2461, %v1949
    %v2974 = vmul.f32 %v2462, %v1950
    %v2975 = vmul.f32 %v2463, %v1951
    %v2976 = vmul.f32 %v2464, %v1952
    %v2977 = vmul.f32 %v2465, %v1953
    %v2978 = vmul.f32 %v2466, %v1954
    %v2979 = vmul.f32 %v2467, %v1955
    %v2980 = vmul.f32 %v2468, %v1956
    %v2981 = vmul.f32 %v2469, %v1957
    %v2982 = vmul.f32 %v2470, %v1958
    %v2983 = vmul.f32 %v2471, %v1959
    %v2984 = vmul.f32 %v2472, %v1960
    %v2985 = vmul.f32 %v2473, %v1961
    %v2986 = vmul.f32 %v2474, %v1962
    %v2987 = vmul.f32 %v2475, %v1963
    %v2988 = vmul.f32 %v2476, %v1964
    %v2989 = vmul.f32 %v2477, %v1965
    %v2990 = vmul.f32 %v2478, %v1966
    %v2991 = vmul.f32 %v2479, %v1967
    %v2992 = vmul.f32 %v2480, %v1968
    %v2993 = vmul.f32 %v2481, %v1969
    %v2994 = vmul.f32 %v2482, %v1970
    %v2995 = vmul.f32 %v2483, %v1971
    %v2996 = vmul.f32 %v2484, %v1972
    %v2997 = vmul.f32 %v2485, %v1973
    %v2998 = vmul.f32 %v2486, %v1974
    %v2999 = vmul.f32 %v2487, %v1975
    %v3000 = vmul.f32 %v2488, %v1976
    %v3001 = vmul.f32 %v2489, %v1977
    %v3002 = vmul.f32 %v2490, %v1978
    %v3003 = vmul.f32 %v2491, %v1979
    %v3004 = vmul.f32 %v2492, %v1980
    %v3005 = vmul.f32 %v2493, %v1981
    %v3006 = vmul.f32 %v2494, %v1982
    %v3007 = vmul.f32 %v2495, %v1983
    %v3008 = vmul.f32 %v2496, %v1984
    %v3009 = vmul.f32 %v2497, %v1985
    %v3010 = vmul.f32 %v2498, %v1986
    %v3011 = vmul.f32 %v2499, %v1987
    %v3012 = vmul.f32 %v2500, %v1988
    %v3013 = vmul.f32 %v2501, %v1989
    %v3014 = vmul.f32 %v2502, %v1990
    %v3015 = vmul.f32 %v2503, %v1991
    %v3016 = vmul.f32 %v2504, %v1992
    %v3017 = vmul.f32 %v2505, %v1993
    %v3018 = vmul.f32 %v2506, %v1994
    %v3019 = vmul.f32 %v2507, %v1995
    %v3020 = vmul.f32 %v2508, %v1996
    %v3021 = vmul.f32 %v2509, %v1997
    %v3022 = vmul.f32 %v2510, %v1998
    %v3023 = vmul.f32 %v2511, %v1999
    %v3024 = vmul.f32 %v2512, %v2000
    %v3025 = vmul.f32 %v2513, %v2001
    %v3026 = vmul.f32 %v2514, %v2002
    %v3027 = vmul.f32 %v2515, %v2003
    %v3028 = vmul.f32 %v2516, %v2004
    %v3029 = vmul.f32 %v2517, %v2005
    %v3030 = vmul.f32 %v2518, %v2006
    %v3031 = vmul.f32 %v2519, %v2007
    %v3032 = vmul.f32 %v2520, %v2008
    %v3033 = vmul.f32 %v2521, %v2009
    %v3034 = vmul.f32 %v2522, %v2010
    %v3035 = vmul.f32 %v2523, %v2011
    %v3036 = vmul.f32 %v2524, %v2012
    %v3037 = vmul.f32 %v2525, %v2013
    %v3038 = vmul.f32 %v2526, %v2014
    %v3039 = vmul.f32 %v2527, %v2015
    %v3040 = vmul.f32 %v2528, %v2016
    %v3041 = vmul.f32 %v2529, %v2017
    %v3042 = vmul.f32 %v2530, %v2018
    %v3043 = vmul.f32 %v2531, %v2019
    %v3044 = vmul.f32 %v2532, %v2020
    %v3045 = vmul.f32 %v2533, %v2021
    %v3046 = vmul.f32 %v2534, %v2022
    %v3047 = vmul.f32 %v2535, %v2023
    %v3048 = vmul.f32 %v2536, %v2024
    %v3049 = vmul.f32 %v2537, %v2025
    %v3050 = vmul.f32 %v2538, %v2026
    %v3051 = vmul.f32 %v2539, %v2027
    %v3052 = vmul.f32 %v2540, %v2028
    %v3053 = vmul.f32 %v2541, %v2029
    %v3054 = vmul.f32 %v2542, %v2030
    %v3055 = vmul.f32 %v2543, %v2031
    %v3056 = vmul.f32 %v2544, %v2032
    %v3057 = vmul.f32 %v2545, %v2033
    %v3058 = vmul.f32 %v2546, %v2034
    %v3059 = vmul.f32 %v2547, %v2035
    %v3060 = vmul.f32 %v2548, %v2036
    %v3061 = vmul.f32 %v2549, %v2037
    %v3062 = vmul.f32 %v2550, %v2038
    %v3063 = vmul.f32 %v2551, %v2039
    %v3064 = vmul.f32 %v2552, %v2040
    %v3065 = vmul.f32 %v2553, %v2041
    %v3066 = vmul.f32 %v2554, %v2042
    %v3067 = vmul.f32 %v2555, %v2043
    %v3068 = vmul.f32 %v2556, %v2044
    %v3069 = vmul.f32 %v2557, %v2045
    %v3070 = vmul.f32 %v2558, %v2046
    %v3071 = vmul.f32 %v2559, %v2047
    %v3072 = vmul.f32 %v2560, %v2048
    %v3073 = vmul.f32 %v2561, %v2049
    %v3074 = vmul.f32 %v2562, %v2050
    %v3075 = vmul.f32 %v2563, %v2051
    %v3076 = vmul.f32 %v2564, %v2052
    %v3077 = vmul.f32 %v2565, %v2053
    %v3078 = vmul.f32 %v2566, %v2054
    %v3079 = vmul.f32 %v2567, %v2055
    %v3080 = vmul.f32 %v2568, %v2056
    %v3081 = vmul.f32 %v2569, %v2057
    %v3082 = vmul.f32 %v2570, %v2058
    %v3083 = vmul.f32 %v2571, %v2059
    %v3084 = vmul.f32 %v2572, %v2060
    %v3085 = vmul.f32 %v2573, %v2061
    %v3086 = vmul.f32 %v2574, %v2062
    %v3087 = vmul.f32 %v2575, %v2063
    %v3088 = vmul.f32 %v2576, %v2064
    %v3089 = vmul.f32 %v2577, %v2065
    %v3090 = vmul.f32 %v2578, %v2066
    %v3091 = vmul.f32 %v2579, %v2067
    %v3092 = vmul.f32 %v2580, %v2068
    %v3093 = vmul.f32 %v2581, %v2069
    %v3094 = vmul.f32 %v2582, %v2070
    %v3095 = vmul.f32 %v2583, %v2071
    %v3096 = vmul.f32 %v2584, %v2072
    %v3097 = vmul.f32 %v2585, %v2073
    %v3098 = vmul.f32 %v2586, %v2074
    %v3099 = vmul.f32 %v2587, %v2075
    %v3100 = vmul.f32 %v2588, %v2076
    %v3101 = vmul.f32 %v2589, %v2077
    %v3102 = vmul.f32 %v2590, %v2078
    %v3103 = vmul.f32 %v2591, %v2079
    %v3104 = vmul.f32 %v2592, %v2080
    %v3105 = vmul.f32 %v2593, %v2081
    %v3106 = vmul.f32 %v2594, %v2082
    %v3107 = vmul.f32 %v2595, %v2083
    %v3108 = vmul.f32 %v2596, %v2084
    %v3109 = vmul.f32 %v2597, %v2085
    %v3110 = vmul.f32 %v2598, %v2086
    %v3111 = vmul.f32 %v2599, %v2087
    %v3112 = vmul.f32 %v2600, %v2088
    %v3113 = vmul.f32 %v2601, %v2089
    %v3114 = vmul.f32 %v2602, %v2090
    %v3115 = vmul.f32 %v2603, %v2091
    %v3116 = vmul.f32 %v2604, %v2092
    %v3117 = vmul.f32 %v2605, %v2093
    %v3118 = vmul.f32 %v2606, %v2094
    %v3119 = vmul.f32 %v2607, %v2095
    %v3120 = vmul.f32 %v2608, %v2096
    %v3121 = vmul.f32 %v2609, %v2097
    %v3122 = vmul.f32 %v2610, %v2098
    %v3123 = vmul.f32 %v2611, %v2099
    %v3124 = vmul.f32 %v2612, %v2100
    %v3125 = vmul.f32 %v2613, %v2101
    %v3126 = vmul.f32 %v2614, %v2102
    %v3127 = vmul.f32 %v2615, %v2103
    %v3128 = vmul.f32 %v2616, %v2104
    %v3129 = vmul.f32 %v2617, %v2105
    %v3130 = vmul.f32 %v2618, %v2106
    %v3131 = vmul.f32 %v2619, %v2107
    %v3132 = vmul.f32 %v2620, %v2108
    %v3133 = vmul.f32 %v2621, %v2109
    %v3134 = vmul.f32 %v2622, %v2110
    %v3135 = vmul.f32 %v2623, %v2111
    %v3136 = vmul.f32 %v2624, %v2112
    %v3137 = vmul.f32 %v2625, %v2113
    %v3138 = vmul.f32 %v2626, %v2114
    %v3139 = vmul.f32 %v2627, %v2115
    %v3140 = vmul.f32 %v2628, %v2116
    %v3141 = vmul.f32 %v2629, %v2117
    %v3142 = vmul.f32 %v2630, %v2118
    %v3143 = vmul.f32 %v2631, %v2119
    %v3144 = vmul.f32 %v2632, %v2120
    %v3145 = vmul.f32 %v2633, %v2121
    %v3146 = vmul.f32 %v2634, %v2122
    %v3147 = vmul.f32 %v2635, %v2123
    %v3148 = vmul.f32 %v2636, %v2124
    %v3149 = vmul.f32 %v2637, %v2125
    %v3150 = vmul.f32 %v2638, %v2126
    %v3151 = vmul.f32 %v2639, %v2127
    %v3152 = vmul.f32 %v2640, %v2128
    %v3153 = vmul.f32 %v2641, %v2129
    %v3154 = vmul.f32 %v2642, %v2130
    %v3155 = vmul.f32 %v2643, %v2131
    %v3156 = vmul.f32 %v2644, %v2132
    %v3157 = vld [vmem:[#allocation8] sm:$0xff]
    %v3158 = vadd.f32 %v2645, %v2646
    %v3159 = vadd.f32 %v3158, %v2647
    %v3160 = vadd.f32 %v3159, %v2648
    %v3161 = vadd.f32 %v3160, %v2649
    %v3162 = vadd.f32 %v3161, %v2650
    %v3163 = vadd.f32 %v3162, %v2651
    %v3164 = vadd.f32 %v3163, %v2652
    %v3165 = vadd.f32 %v3164, %v2653
    %v3166 = vadd.f32 %v3165, %v2654
    %v3167 = vadd.f32 %v3166, %v2655
    %v3168 = vadd.f32 %v3167, %v2656
    %v3169 = vadd.f32 %v3168, %v2657
    %v3170 = vadd.f32 %v3169, %v2658
    %v3171 = vadd.f32 %v3170, %v2659
    %v3172 = vadd.f32 %v3171, %v2660
    %v3173 = vadd.f32 %v3172, %v2661
    %v3174 = vadd.f32 %v3173, %v2662
    %v3175 = vadd.f32 %v3174, %v2663
    %v3176 = vadd.f32 %v3175, %v2664
    %v3177 = vadd.f32 %v3176, %v2665
    %v3178 = vadd.f32 %v3177, %v2666
    %v3179 = vadd.f32 %v3178, %v2667
    %v3180 = vadd.f32 %v3179, %v2668
    %v3181 = vadd.f32 %v3180, %v2669
    %v3182 = vadd.f32 %v3181, %v2670
    %v3183 = vadd.f32 %v3182, %v2671
    %v3184 = vadd.f32 %v3183, %v2672
    %v3185 = vadd.f32 %v3184, %v2673
    %v3186 = vadd.f32 %v3185, %v2674
    %v3187 = vadd.f32 %v3186, %v2675
    %v3188 = vadd.f32 %v3187, %v2676
    %v3189 = vadd.f32 %v3188, %v2677
    %v3190 = vadd.f32 %v3189, %v2678
    %v3191 = vadd.f32 %v3190, %v2679
    %v3192 = vadd.f32 %v3191, %v2680
    %v3193 = vadd.f32 %v3192, %v2681
    %v3194 = vadd.f32 %v3193, %v2682
    %v3195 = vadd.f32 %v3194, %v2683
    %v3196 = vadd.f32 %v3195, %v2684
    %v3197 = vadd.f32 %v3196, %v2685
    %v3198 = vadd.f32 %v3197, %v2686
    %v3199 = vadd.f32 %v3198, %v2687
    %v3200 = vadd.f32 %v3199, %v2688
    %v3201 = vadd.f32 %v3200, %v2689
    %v3202 = vadd.f32 %v3201, %v2690
    %v3203 = vadd.f32 %v3202, %v2691
    %v3204 = vadd.f32 %v3203, %v2692
    %v3205 = vadd.f32 %v3204, %v2693
    %v3206 = vadd.f32 %v3205, %v2694
    %v3207 = vadd.f32 %v3206, %v2695
    %v3208 = vadd.f32 %v3207, %v2696
    %v3209 = vadd.f32 %v3208, %v2697
    %v3210 = vadd.f32 %v3209, %v2698
    %v3211 = vadd.f32 %v3210, %v2699
    %v3212 = vadd.f32 %v3211, %v2700
    %v3213 = vadd.f32 %v3212, %v2701
    %v3214 = vadd.f32 %v3213, %v2702
    %v3215 = vadd.f32 %v3214, %v2703
    %v3216 = vadd.f32 %v3215, %v2704
    %v3217 = vadd.f32 %v3216, %v2705
    %v3218 = vadd.f32 %v3217, %v2706
    %v3219 = vadd.f32 %v3218, %v2707
    %v3220 = vadd.f32 %v3219, %v2708
    %v3221 = vadd.f32 %v3220, %v2709
    %v3222 = vadd.f32 %v3221, %v2710
    %v3223 = vadd.f32 %v3222, %v2711
    %v3224 = vadd.f32 %v3223, %v2712
    %v3225 = vadd.f32 %v3224, %v2713
    %v3226 = vadd.f32 %v3225, %v2714
    %v3227 = vadd.f32 %v3226, %v2715
    %v3228 = vadd.f32 %v3227, %v2716
    %v3229 = vadd.f32 %v3228, %v2717
    %v3230 = vadd.f32 %v3229, %v2718
    %v3231 = vadd.f32 %v3230, %v2719
    %v3232 = vadd.f32 %v3231, %v2720
    %v3233 = vadd.f32 %v3232, %v2721
    %v3234 = vadd.f32 %v3233, %v2722
    %v3235 = vadd.f32 %v3234, %v2723
    %v3236 = vadd.f32 %v3235, %v2724
    %v3237 = vadd.f32 %v3236, %v2725
    %v3238 = vadd.f32 %v3237, %v2726
    %v3239 = vadd.f32 %v3238, %v2727
    %v3240 = vadd.f32 %v3239, %v2728
    %v3241 = vadd.f32 %v3240, %v2729
    %v3242 = vadd.f32 %v3241, %v2730
    %v3243 = vadd.f32 %v3242, %v2731
    %v3244 = vadd.f32 %v3243, %v2732
    %v3245 = vadd.f32 %v3244, %v2733
    %v3246 = vadd.f32 %v3245, %v2734
    %v3247 = vadd.f32 %v3246, %v2735
    %v3248 = vadd.f32 %v3247, %v2736
    %v3249 = vadd.f32 %v3248, %v2737
    %v3250 = vadd.f32 %v3249, %v2738
    %v3251 = vadd.f32 %v3250, %v2739
    %v3252 = vadd.f32 %v3251, %v2740
    %v3253 = vadd.f32 %v3252, %v2741
    %v3254 = vadd.f32 %v3253, %v2742
    %v3255 = vadd.f32 %v3254, %v2743
    %v3256 = vadd.f32 %v3255, %v2744
    %v3257 = vadd.f32 %v3256, %v2745
    %v3258 = vadd.f32 %v3257, %v2746
    %v3259 = vadd.f32 %v3258, %v2747
    %v3260 = vadd.f32 %v3259, %v2748
    %v3261 = vadd.f32 %v3260, %v2749
    %v3262 = vadd.f32 %v3261, %v2750
    %v3263 = vadd.f32 %v3262, %v2751
    %v3264 = vadd.f32 %v3263, %v2752
    %v3265 = vadd.f32 %v3264, %v2753
    %v3266 = vadd.f32 %v3265, %v2754
    %v3267 = vadd.f32 %v3266, %v2755
    %v3268 = vadd.f32 %v3267, %v2756
    %v3269 = vadd.f32 %v3268, %v2757
    %v3270 = vadd.f32 %v3269, %v2758
    %v3271 = vadd.f32 %v3270, %v2759
    %v3272 = vadd.f32 %v3271, %v2760
    %v3273 = vadd.f32 %v3272, %v2761
    %v3274 = vadd.f32 %v3273, %v2762
    %v3275 = vadd.f32 %v3274, %v2763
    %v3276 = vadd.f32 %v3275, %v2764
    %v3277 = vadd.f32 %v3276, %v2765
    %v3278 = vadd.f32 %v3277, %v2766
    %v3279 = vadd.f32 %v3278, %v2767
    %v3280 = vadd.f32 %v3279, %v2768
    %v3281 = vadd.f32 %v3280, %v2769
    %v3282 = vadd.f32 %v3281, %v2770
    %v3283 = vadd.f32 %v3282, %v2771
    %v3284 = vadd.f32 %v3283, %v2772
    %v3285 = vadd.f32 %v3284, %v2773
    %v3286 = vadd.f32 %v3285, %v2774
    %v3287 = vadd.f32 %v3286, %v2775
    %v3288 = vadd.f32 %v3287, %v2776
    %v3289 = vadd.f32 %v3288, %v2777
    %v3290 = vadd.f32 %v3289, %v2778
    %v3291 = vadd.f32 %v3290, %v2779
    %v3292 = vadd.f32 %v3291, %v2780
    %v3293 = vadd.f32 %v3292, %v2781
    %v3294 = vadd.f32 %v3293, %v2782
    %v3295 = vadd.f32 %v3294, %v2783
    %v3296 = vadd.f32 %v3295, %v2784
    %v3297 = vadd.f32 %v3296, %v2785
    %v3298 = vadd.f32 %v3297, %v2786
    %v3299 = vadd.f32 %v3298, %v2787
    %v3300 = vadd.f32 %v3299, %v2788
    %v3301 = vadd.f32 %v3300, %v2789
    %v3302 = vadd.f32 %v3301, %v2790
    %v3303 = vadd.f32 %v3302, %v2791
    %v3304 = vadd.f32 %v3303, %v2792
    %v3305 = vadd.f32 %v3304, %v2793
    %v3306 = vadd.f32 %v3305, %v2794
    %v3307 = vadd.f32 %v3306, %v2795
    %v3308 = vadd.f32 %v3307, %v2796
    %v3309 = vadd.f32 %v3308, %v2797
    %v3310 = vadd.f32 %v3309, %v2798
    %v3311 = vadd.f32 %v3310, %v2799
    %v3312 = vadd.f32 %v3311, %v2800
    %v3313 = vadd.f32 %v3312, %v2801
    %v3314 = vadd.f32 %v3313, %v2802
    %v3315 = vadd.f32 %v3314, %v2803
    %v3316 = vadd.f32 %v3315, %v2804
    %v3317 = vadd.f32 %v3316, %v2805
    %v3318 = vadd.f32 %v3317, %v2806
    %v3319 = vadd.f32 %v3318, %v2807
    %v3320 = vadd.f32 %v3319, %v2808
    %v3321 = vadd.f32 %v3320, %v2809
    %v3322 = vadd.f32 %v3321, %v2810
    %v3323 = vadd.f32 %v3322, %v2811
    %v3324 = vadd.f32 %v3323, %v2812
    %v3325 = vadd.f32 %v3324, %v2813
    %v3326 = vadd.f32 %v3325, %v2814
    %v3327 = vadd.f32 %v3326, %v2815
    %v3328 = vadd.f32 %v3327, %v2816
    %v3329 = vadd.f32 %v3328, %v2817
    %v3330 = vadd.f32 %v3329, %v2818
    %v3331 = vadd.f32 %v3330, %v2819
    %v3332 = vadd.f32 %v3331, %v2820
    %v3333 = vadd.f32 %v3332, %v2821
    %v3334 = vadd.f32 %v3333, %v2822
    %v3335 = vadd.f32 %v3334, %v2823
    %v3336 = vadd.f32 %v3335, %v2824
    %v3337 = vadd.f32 %v3336, %v2825
    %v3338 = vadd.f32 %v3337, %v2826
    %v3339 = vadd.f32 %v3338, %v2827
    %v3340 = vadd.f32 %v3339, %v2828
    %v3341 = vadd.f32 %v3340, %v2829
    %v3342 = vadd.f32 %v3341, %v2830
    %v3343 = vadd.f32 %v3342, %v2831
    %v3344 = vadd.f32 %v3343, %v2832
    %v3345 = vadd.f32 %v3344, %v2833
    %v3346 = vadd.f32 %v3345, %v2834
    %v3347 = vadd.f32 %v3346, %v2835
    %v3348 = vadd.f32 %v3347, %v2836
    %v3349 = vadd.f32 %v3348, %v2837
    %v3350 = vadd.f32 %v3349, %v2838
    %v3351 = vadd.f32 %v3350, %v2839
    %v3352 = vadd.f32 %v3351, %v2840
    %v3353 = vadd.f32 %v3352, %v2841
    %v3354 = vadd.f32 %v3353, %v2842
    %v3355 = vadd.f32 %v3354, %v2843
    %v3356 = vadd.f32 %v3355, %v2844
    %v3357 = vadd.f32 %v3356, %v2845
    %v3358 = vadd.f32 %v3357, %v2846
    %v3359 = vadd.f32 %v3358, %v2847
    %v3360 = vadd.f32 %v3359, %v2848
    %v3361 = vadd.f32 %v3360, %v2849
    %v3362 = vadd.f32 %v3361, %v2850
    %v3363 = vadd.f32 %v3362, %v2851
    %v3364 = vadd.f32 %v3363, %v2852
    %v3365 = vadd.f32 %v3364, %v2853
    %v3366 = vadd.f32 %v3365, %v2854
    %v3367 = vadd.f32 %v3366, %v2855
    %v3368 = vadd.f32 %v3367, %v2856
    %v3369 = vadd.f32 %v3368, %v2857
    %v3370 = vadd.f32 %v3369, %v2858
    %v3371 = vadd.f32 %v3370, %v2859
    %v3372 = vadd.f32 %v3371, %v2860
    %v3373 = vadd.f32 %v3372, %v2861
    %v3374 = vadd.f32 %v3373, %v2862
    %v3375 = vadd.f32 %v3374, %v2863
    %v3376 = vadd.f32 %v3375, %v2864
    %v3377 = vadd.f32 %v3376, %v2865
    %v3378 = vadd.f32 %v3377, %v2866
    %v3379 = vadd.f32 %v3378, %v2867
    %v3380 = vadd.f32 %v3379, %v2868
    %v3381 = vadd.f32 %v3380, %v2869
    %v3382 = vadd.f32 %v3381, %v2870
    %v3383 = vadd.f32 %v3382, %v2871
    %v3384 = vadd.f32 %v3383, %v2872
    %v3385 = vadd.f32 %v3384, %v2873
    %v3386 = vadd.f32 %v3385, %v2874
    %v3387 = vadd.f32 %v3386, %v2875
    %v3388 = vadd.f32 %v3387, %v2876
    %v3389 = vadd.f32 %v3388, %v2877
    %v3390 = vadd.f32 %v3389, %v2878
    %v3391 = vadd.f32 %v3390, %v2879
    %v3392 = vadd.f32 %v3391, %v2880
    %v3393 = vadd.f32 %v3392, %v2881
    %v3394 = vadd.f32 %v3393, %v2882
    %v3395 = vadd.f32 %v3394, %v2883
    %v3396 = vadd.f32 %v3395, %v2884
    %v3397 = vadd.f32 %v3396, %v2885
    %v3398 = vadd.f32 %v3397, %v2886
    %v3399 = vadd.f32 %v3398, %v2887
    %v3400 = vadd.f32 %v3399, %v2888
    %v3401 = vadd.f32 %v3400, %v2889
    %v3402 = vadd.f32 %v3401, %v2890
    %v3403 = vadd.f32 %v3402, %v2891
    %v3404 = vadd.f32 %v3403, %v2892
    %v3405 = vadd.f32 %v3404, %v2893
    %v3406 = vadd.f32 %v3405, %v2894
    %v3407 = vadd.f32 %v3406, %v2895
    %v3408 = vadd.f32 %v3407, %v2896
    %v3409 = vadd.f32 %v3408, %v2897
    %v3410 = vadd.f32 %v3409, %v2898
    %v3411 = vadd.f32 %v3410, %v2899
    %v3412 = vadd.f32 %v3411, %v2900
    %v3413 = vadd.f32 %v3412, %v2901
    %v3414 = vadd.f32 %v3413, %v2902
    %v3415 = vadd.f32 %v3414, %v2903
    %v3416 = vadd.f32 %v3415, %v2904
    %v3417 = vadd.f32 %v3416, %v2905
    %v3418 = vadd.f32 %v3417, %v2906
    %v3419 = vadd.f32 %v3418, %v2907
    %v3420 = vadd.f32 %v3419, %v2908
    %v3421 = vadd.f32 %v3420, %v2909
    %v3422 = vadd.f32 %v3421, %v2910
    %v3423 = vadd.f32 %v3422, %v2911
    %v3424 = vadd.f32 %v3423, %v2912
    %v3425 = vadd.f32 %v3424, %v2913
    %v3426 = vadd.f32 %v3425, %v2914
    %v3427 = vadd.f32 %v3426, %v2915
    %v3428 = vadd.f32 %v3427, %v2916
    %v3429 = vadd.f32 %v3428, %v2917
    %v3430 = vadd.f32 %v3429, %v2918
    %v3431 = vadd.f32 %v3430, %v2919
    %v3432 = vadd.f32 %v3431, %v2920
    %v3433 = vadd.f32 %v3432, %v2921
    %v3434 = vadd.f32 %v3433, %v2922
    %v3435 = vadd.f32 %v3434, %v2923
    %v3436 = vadd.f32 %v3435, %v2924
    %v3437 = vadd.f32 %v3436, %v2925
    %v3438 = vadd.f32 %v3437, %v2926
    %v3439 = vadd.f32 %v3438, %v2927
    %v3440 = vadd.f32 %v3439, %v2928
    %v3441 = vadd.f32 %v3440, %v2929
    %v3442 = vadd.f32 %v3441, %v2930
    %v3443 = vadd.f32 %v3442, %v2931
    %v3444 = vadd.f32 %v3443, %v2932
    %v3445 = vadd.f32 %v3444, %v2933
    %v3446 = vadd.f32 %v3445, %v2934
    %v3447 = vadd.f32 %v3446, %v2935
    %v3448 = vadd.f32 %v3447, %v2936
    %v3449 = vadd.f32 %v3448, %v2937
    %v3450 = vadd.f32 %v3449, %v2938
    %v3451 = vadd.f32 %v3450, %v2939
    %v3452 = vadd.f32 %v3451, %v2940
    %v3453 = vadd.f32 %v3452, %v2941
    %v3454 = vadd.f32 %v3453, %v2942
    %v3455 = vadd.f32 %v3454, %v2943
    %v3456 = vadd.f32 %v3455, %v2944
    %v3457 = vadd.f32 %v3456, %v2945
    %v3458 = vadd.f32 %v3457, %v2946
    %v3459 = vadd.f32 %v3458, %v2947
    %v3460 = vadd.f32 %v3459, %v2948
    %v3461 = vadd.f32 %v3460, %v2949
    %v3462 = vadd.f32 %v3461, %v2950
    %v3463 = vadd.f32 %v3462, %v2951
    %v3464 = vadd.f32 %v3463, %v2952
    %v3465 = vadd.f32 %v3464, %v2953
    %v3466 = vadd.f32 %v3465, %v2954
    %v3467 = vadd.f32 %v3466, %v2955
    %v3468 = vadd.f32 %v3467, %v2956
    %v3469 = vadd.f32 %v3468, %v2957
    %v3470 = vadd.f32 %v3469, %v2958
    %v3471 = vadd.f32 %v3470, %v2959
    %v3472 = vadd.f32 %v3471, %v2960
    %v3473 = vadd.f32 %v3472, %v2961
    %v3474 = vadd.f32 %v3473, %v2962
    %v3475 = vadd.f32 %v3474, %v2963
    %v3476 = vadd.f32 %v3475, %v2964
    %v3477 = vadd.f32 %v3476, %v2965
    %v3478 = vadd.f32 %v3477, %v2966
    %v3479 = vadd.f32 %v3478, %v2967
    %v3480 = vadd.f32 %v3479, %v2968
    %v3481 = vadd.f32 %v3480, %v2969
    %v3482 = vadd.f32 %v3481, %v2970
    %v3483 = vadd.f32 %v3482, %v2971
    %v3484 = vadd.f32 %v3483, %v2972
    %v3485 = vadd.f32 %v3484, %v2973
    %v3486 = vadd.f32 %v3485, %v2974
    %v3487 = vadd.f32 %v3486, %v2975
    %v3488 = vadd.f32 %v3487, %v2976
    %v3489 = vadd.f32 %v3488, %v2977
    %v3490 = vadd.f32 %v3489, %v2978
    %v3491 = vadd.f32 %v3490, %v2979
    %v3492 = vadd.f32 %v3491, %v2980
    %v3493 = vadd.f32 %v3492, %v2981
    %v3494 = vadd.f32 %v3493, %v2982
    %v3495 = vadd.f32 %v3494, %v2983
    %v3496 = vadd.f32 %v3495, %v2984
    %v3497 = vadd.f32 %v3496, %v2985
    %v3498 = vadd.f32 %v3497, %v2986
    %v3499 = vadd.f32 %v3498, %v2987
    %v3500 = vadd.f32 %v3499, %v2988
    %v3501 = vadd.f32 %v3500, %v2989
    %v3502 = vadd.f32 %v3501, %v2990
    %v3503 = vadd.f32 %v3502, %v2991
    %v3504 = vadd.f32 %v3503, %v2992
    %v3505 = vadd.f32 %v3504, %v2993
    %v3506 = vadd.f32 %v3505, %v2994
    %v3507 = vadd.f32 %v3506, %v2995
    %v3508 = vadd.f32 %v3507, %v2996
    %v3509 = vadd.f32 %v3508, %v2997
    %v3510 = vadd.f32 %v3509, %v2998
    %v3511 = vadd.f32 %v3510, %v2999
    %v3512 = vadd.f32 %v3511, %v3000
    %v3513 = vadd.f32 %v3512, %v3001
    %v3514 = vadd.f32 %v3513, %v3002
    %v3515 = vadd.f32 %v3514, %v3003
    %v3516 = vadd.f32 %v3515, %v3004
    %v3517 = vadd.f32 %v3516, %v3005
    %v3518 = vadd.f32 %v3517, %v3006
    %v3519 = vadd.f32 %v3518, %v3007
    %v3520 = vadd.f32 %v3519, %v3008
    %v3521 = vadd.f32 %v3520, %v3009
    %v3522 = vadd.f32 %v3521, %v3010
    %v3523 = vadd.f32 %v3522, %v3011
    %v3524 = vadd.f32 %v3523, %v3012
    %v3525 = vadd.f32 %v3524, %v3013
    %v3526 = vadd.f32 %v3525, %v3014
    %v3527 = vadd.f32 %v3526, %v3015
    %v3528 = vadd.f32 %v3527, %v3016
    %v3529 = vadd.f32 %v3528, %v3017
    %v3530 = vadd.f32 %v3529, %v3018
    %v3531 = vadd.f32 %v3530, %v3019
    %v3532 = vadd.f32 %v3531, %v3020
    %v3533 = vadd.f32 %v3532, %v3021
    %v3534 = vadd.f32 %v3533, %v3022
    %v3535 = vadd.f32 %v3534, %v3023
    %v3536 = vadd.f32 %v3535, %v3024
    %v3537 = vadd.f32 %v3536, %v3025
    %v3538 = vadd.f32 %v3537, %v3026
    %v3539 = vadd.f32 %v3538, %v3027
    %v3540 = vadd.f32 %v3539, %v3028
    %v3541 = vadd.f32 %v3540, %v3029
    %v3542 = vadd.f32 %v3541, %v3030
    %v3543 = vadd.f32 %v3542, %v3031
    %v3544 = vadd.f32 %v3543, %v3032
    %v3545 = vadd.f32 %v3544, %v3033
    %v3546 = vadd.f32 %v3545, %v3034
    %v3547 = vadd.f32 %v3546, %v3035
    %v3548 = vadd.f32 %v3547, %v3036
    %v3549 = vadd.f32 %v3548, %v3037
    %v3550 = vadd.f32 %v3549, %v3038
    %v3551 = vadd.f32 %v3550, %v3039
    %v3552 = vadd.f32 %v3551, %v3040
    %v3553 = vadd.f32 %v3552, %v3041
    %v3554 = vadd.f32 %v3553, %v3042
    %v3555 = vadd.f32 %v3554, %v3043
    %v3556 = vadd.f32 %v3555, %v3044
    %v3557 = vadd.f32 %v3556, %v3045
    %v3558 = vadd.f32 %v3557, %v3046
    %v3559 = vadd.f32 %v3558, %v3047
    %v3560 = vadd.f32 %v3559, %v3048
    %v3561 = vadd.f32 %v3560, %v3049
    %v3562 = vadd.f32 %v3561, %v3050
    %v3563 = vadd.f32 %v3562, %v3051
    %v3564 = vadd.f32 %v3563, %v3052
    %v3565 = vadd.f32 %v3564, %v3053
    %v3566 = vadd.f32 %v3565, %v3054
    %v3567 = vadd.f32 %v3566, %v3055
    %v3568 = vadd.f32 %v3567, %v3056
    %v3569 = vadd.f32 %v3568, %v3057
    %v3570 = vadd.f32 %v3569, %v3058
    %v3571 = vadd.f32 %v3570, %v3059
    %v3572 = vadd.f32 %v3571, %v3060
    %v3573 = vadd.f32 %v3572, %v3061
    %v3574 = vadd.f32 %v3573, %v3062
    %v3575 = vadd.f32 %v3574, %v3063
    %v3576 = vadd.f32 %v3575, %v3064
    %v3577 = vadd.f32 %v3576, %v3065
    %v3578 = vadd.f32 %v3577, %v3066
    %v3579 = vadd.f32 %v3578, %v3067
    %v3580 = vadd.f32 %v3579, %v3068
    %v3581 = vadd.f32 %v3580, %v3069
    %v3582 = vadd.f32 %v3581, %v3070
    %v3583 = vadd.f32 %v3582, %v3071
    %v3584 = vadd.f32 %v3583, %v3072
    %v3585 = vadd.f32 %v3584, %v3073
    %v3586 = vadd.f32 %v3585, %v3074
    %v3587 = vadd.f32 %v3586, %v3075
    %v3588 = vadd.f32 %v3587, %v3076
    %v3589 = vadd.f32 %v3588, %v3077
    %v3590 = vadd.f32 %v3589, %v3078
    %v3591 = vadd.f32 %v3590, %v3079
    %v3592 = vadd.f32 %v3591, %v3080
    %v3593 = vadd.f32 %v3592, %v3081
    %v3594 = vadd.f32 %v3593, %v3082
    %v3595 = vadd.f32 %v3594, %v3083
    %v3596 = vadd.f32 %v3595, %v3084
    %v3597 = vadd.f32 %v3596, %v3085
    %v3598 = vadd.f32 %v3597, %v3086
    %v3599 = vadd.f32 %v3598, %v3087
    %v3600 = vadd.f32 %v3599, %v3088
    %v3601 = vadd.f32 %v3600, %v3089
    %v3602 = vadd.f32 %v3601, %v3090
    %v3603 = vadd.f32 %v3602, %v3091
    %v3604 = vadd.f32 %v3603, %v3092
    %v3605 = vadd.f32 %v3604, %v3093
    %v3606 = vadd.f32 %v3605, %v3094
    %v3607 = vadd.f32 %v3606, %v3095
    %v3608 = vadd.f32 %v3607, %v3096
    %v3609 = vadd.f32 %v3608, %v3097
    %v3610 = vadd.f32 %v3609, %v3098
    %v3611 = vadd.f32 %v3610, %v3099
    %v3612 = vadd.f32 %v3611, %v3100
    %v3613 = vadd.f32 %v3612, %v3101
    %v3614 = vadd.f32 %v3613, %v3102
    %v3615 = vadd.f32 %v3614, %v3103
    %v3616 = vadd.f32 %v3615, %v3104
    %v3617 = vadd.f32 %v3616, %v3105
    %v3618 = vadd.f32 %v3617, %v3106
    %v3619 = vadd.f32 %v3618, %v3107
    %v3620 = vadd.f32 %v3619, %v3108
    %v3621 = vadd.f32 %v3620, %v3109
    %v3622 = vadd.f32 %v3621, %v3110
    %v3623 = vadd.f32 %v3622, %v3111
    %v3624 = vadd.f32 %v3623, %v3112
    %v3625 = vadd.f32 %v3624, %v3113
    %v3626 = vadd.f32 %v3625, %v3114
    %v3627 = vadd.f32 %v3626, %v3115
    %v3628 = vadd.f32 %v3627, %v3116
    %v3629 = vadd.f32 %v3628, %v3117
    %v3630 = vadd.f32 %v3629, %v3118
    %v3631 = vadd.f32 %v3630, %v3119
    %v3632 = vadd.f32 %v3631, %v3120
    %v3633 = vadd.f32 %v3632, %v3121
    %v3634 = vadd.f32 %v3633, %v3122
    %v3635 = vadd.f32 %v3634, %v3123
    %v3636 = vadd.f32 %v3635, %v3124
    %v3637 = vadd.f32 %v3636, %v3125
    %v3638 = vadd.f32 %v3637, %v3126
    %v3639 = vadd.f32 %v3638, %v3127
    %v3640 = vadd.f32 %v3639, %v3128
    %v3641 = vadd.f32 %v3640, %v3129
    %v3642 = vadd.f32 %v3641, %v3130
    %v3643 = vadd.f32 %v3642, %v3131
    %v3644 = vadd.f32 %v3643, %v3132
    %v3645 = vadd.f32 %v3644, %v3133
    %v3646 = vadd.f32 %v3645, %v3134
    %v3647 = vadd.f32 %v3646, %v3135
    %v3648 = vadd.f32 %v3647, %v3136
    %v3649 = vadd.f32 %v3648, %v3137
    %v3650 = vadd.f32 %v3649, %v3138
    %v3651 = vadd.f32 %v3650, %v3139
    %v3652 = vadd.f32 %v3651, %v3140
    %v3653 = vadd.f32 %v3652, %v3141
    %v3654 = vadd.f32 %v3653, %v3142
    %v3655 = vadd.f32 %v3654, %v3143
    %v3656 = vadd.f32 %v3655, %v3144
    %v3657 = vadd.f32 %v3656, %v3145
    %v3658 = vadd.f32 %v3657, %v3146
    %v3659 = vadd.f32 %v3658, %v3147
    %v3660 = vadd.f32 %v3659, %v3148
    %v3661 = vadd.f32 %v3660, %v3149
    %v3662 = vadd.f32 %v3661, %v3150
    %v3663 = vadd.f32 %v3662, %v3151
    %v3664 = vadd.f32 %v3663, %v3152
    %v3665 = vadd.f32 %v3664, %v3153
    %v3666 = vadd.f32 %v3665, %v3154
    %v3667 = vadd.f32 %v3666, %v3155
    %v3668 = vadd.f32 %v3667, %v3156
    %v3669 = vadd.f32 %v3157, %v3668
    %3670 = vst [vmem:[#allocation8] sm:$0xff] %v3669
    // Predicated region
    $region30: #{tpu_custom_call.1} parent=1 // pred_check
      _
    $region31: #{tpu_custom_call.1} parent=1 // pred_check_branch
      %3672 = sbr.rel (0) target = $region33
    $region32: #{tpu_custom_call.1} parent=1 // pred_region
      %3674 = vsyncadd [#allocation4], 0
      %s3676 = sshll.u32 [#allocation8], 4
      %s3677 = int_to_ptr.vmem [resolvable:$true] %s3676
      %s3678 = sshll.u32 %s3, 4
      %s3679 = int_to_ptr.hbm [resolvable:$true] %s3678
      %3681 = dma.vmem_to_hbm [thread:$0]  %s3677, 128, %s3679, [#allocation4]
    $region33: #{tpu_custom_call.1} parent=1 // pred_fallthru
      _
    // Predicated region
    $region34: #{tpu_custom_call.1} parent=1 // pred_check
      _
    $region35: #{tpu_custom_call.1} parent=1 // pred_check_branch
      %3683 = sbr.rel (0) target = $region37
    $region36: #{tpu_custom_call.1} parent=1 // pred_region
      %3685 = dma.done [#allocation4], 128
    $region37: #{tpu_custom_call.1} parent=1 // pred_fallthru
      _
    %3686 = vsyncpa [#allocation3], 1
    %3687 = vsyncpa [#allocation6], 1
    %3688 = vsyncpa [#allocation4], 1

</llo_original>
